<compile_context>
chip_gen: v5e
topology: v5e:2x2
jax: 0.10.0
libtpu: 0.0.40
codegen_flags: <defaults>
</compile_context>

<pallas_src>
import math

import jax
import jax.numpy as jnp
import numpy as np
from jax.experimental import pallas as pl
from jax.experimental.pallas import tpu as pltpu


# ---------------------------------------------------------------------------
# Fused forward kernel
# ---------------------------------------------------------------------------
def rainbow_fused_kernel(
    p1_ref, w1_ref, b1_ref,        # conv1: im2col patches, (Cin*8*8, 32) weights, (1, 32) bias
    s2_ref, w2k_ref, b2_ref,       # conv2: (16, P2, P1) row selectors, (16, 32, 64) weights, bias
    w3k_ref, b3_ref,               # conv3: (9, 64, 64) per-tap weights, (1, 64) bias
    wh1_ref, bh1_ref,              # fused head layer 1: [adv | val] (64, 1024), (1, 1024)
    aw2_ref, ab2_ref,              # advantage head layer 2 per action: (A, 512, N), (A, N)
    vw2_ref, vb2_ref,              # value head layer 2 per action:     (A, 512, N), (A, N)
    atoms_ref,                     # (1, N)
    qlog_ref, q_ref,               # outputs: q_logits (A, A, N), q_values (A, A)
    h2_s, adv_s, val_s,            # VMEM scratch: conv2 out (P2, 64), adv (A, N), val (A, N)
):
    f32 = jnp.float32

    # ---- conv1: single fused matmul + bias + ReLU (the /255 scale is folded
    # into w1 on the host, so no per-call VALU multiply is needed).
    h1 = jnp.dot(p1_ref[...], w1_ref[...], preferred_element_type=f32)
    h1 = jnp.maximum(h1 + b1_ref[...], 0.0)                        # (OH1*OW1, 32) NHWC-flat

    # ---- conv2: for each kernel tap, a 0/1 selector matmul gathers the right
    # rows of h1 (stays on the MXU, no relayouts), then the tap's (Cin, Cout)
    # weight slice accumulates into the output.
    taps2 = s2_ref.shape[0]
    p2 = s2_ref.shape[1]
    oc2 = w2k_ref.shape[2]
    y2 = jnp.zeros((p2, oc2), f32)
    for k in range(taps2):
        rows = jnp.dot(s2_ref[k], h1, preferred_element_type=f32)          # (P2, 32)
        y2 = y2 + jnp.dot(rows, w2k_ref[k], preferred_element_type=f32)    # (P2, 64)
    h2_s[...] = jnp.maximum(y2 + b2_ref[...], 0.0)

    # ---- conv3 (1x1 spatial output) + flatten: one (1, 64) x (64, 64) matmul
    # per tap; input row k of h2 is exactly kernel tap k because the output is 1x1.
    taps3 = w3k_ref.shape[0]
    oc3 = w3k_ref.shape[2]
    y3 = jnp.zeros((1, oc3), f32)
    for k in range(taps3):
        y3 = y3 + jnp.dot(h2_s[pl.ds(k, 1), :], w3k_ref[k],
                          preferred_element_type=f32)
    feat = jnp.maximum(y3 + b3_ref[...], 0.0)                      # (1, 64)

    # ---- head layer 1: advantage and value hidden layers fused into one
    # lane-dense (N = 1024 = 8*128) matmul + bias + ReLU.
    hh = jnp.dot(feat, wh1_ref[...], preferred_element_type=f32) + bh1_ref[...]
    hh = jnp.maximum(hh, 0.0)                                      # (1, 1024)
    nh = wh1_ref.shape[1] // 2
    h_adv = hh[:, :nh]                                             # lane-aligned slices
    h_val = hh[:, nh:]

    # ---- head layer 2: per-action weight slices produce the (A, num_atoms)
    # layout directly (atoms in lanes, actions in sublanes), avoiding an
    # in-kernel (1, A*N) -> (A, N) relayout.
    A = aw2_ref.shape[0]
    for a in range(A):
        adv_s[pl.ds(a, 1), :] = (
            jnp.dot(h_adv, aw2_ref[a], preferred_element_type=f32)
            + ab2_ref[pl.ds(a, 1), :])
        val_s[pl.ds(a, 1), :] = (
            jnp.dot(h_val, vw2_ref[a], preferred_element_type=f32)
            + vb2_ref[pl.ds(a, 1), :])

    adv = adv_s[...]                                               # (A, N)
    val = val_s[...]                                               # (A, N)
    adv_c = adv - jnp.mean(adv, axis=0, keepdims=True)             # (A, N)

    # q_logits[i, j, :] = val[i, :] + adv_c[j, :]  (the reference .view broadcast,
    # valid for batch == 1).  The per-row work here is only a broadcast-add and
    # one tile store per output block; the softmax/expectation below is fully
    # vectorized (no per-row exp / reductions).
    for i in range(A):
        qlog_ref[i] = val_s[pl.ds(i, 1), :] + adv_c                # (A, N)

    # ---- C51 expectation without materializing the (A, A, N) distribution:
    #   q[i, j] = sum_n ev[i,n] * ea[j,n] * atoms[n] / sum_n ev[i,n] * ea[j,n]
    # with ev/ea row-max-shifted for stability (the shifts cancel exactly
    # between numerator and denominator).
    ev = jnp.exp(val - jnp.max(val, axis=-1, keepdims=True))       # (A, N)
    ea = jnp.exp(adv_c - jnp.max(adv_c, axis=-1, keepdims=True))   # (A, N)
    dn = (((1,), (1,)), ((), ()))                                  # contract the atoms dim of both
    den = jax.lax.dot_general(ev, ea, dn, preferred_element_type=f32)      # (A, A)
    num = jax.lax.dot_general(ev * atoms_ref[...], ea, dn,
                              preferred_element_type=f32)                  # (A, A)
    q_ref[...] = num * pl.reciprocal(den, approx=True)             # EUP reciprocal, lane-dense-ish store


# ---------------------------------------------------------------------------
# Wrapper-side glue: geometry, im2col of the raw input, parameter packing
# ---------------------------------------------------------------------------
def conv_out(n, k, s):
    return (n - k) // s + 1


def im2col_nchw(x, k, stride):
    """(B, C, H, W) -> (B*OH*OW, C*k*k) patch matrix, channel-major column order
    matching torch conv weight.reshape(OC, C*k*k)."""
    B, C, H, W = x.shape
    oh = (H - k) // stride + 1
    ow = (W - k) // stride + 1
    cols = []
    for i in range(k):
        for j in range(k):
            cols.append(x[:, :, i:i + stride * oh:stride, j:j + stride * ow:stride])
    patches = jnp.stack(cols, axis=2)                 # (B, C, k*k, oh, ow)
    patches = patches.reshape(B, C * k * k, oh, ow)   # column order (C, KH, KW)
    patches = patches.transpose(0, 2, 3, 1).reshape(B * oh * ow, C * k * k)
    return patches, oh, ow


def build_row_selectors(ih, iw, k, s):
    """0/1 matrices S[tap, p_out, r_in]: input row (NHWC-flat) feeding output
    position p_out for kernel tap (ki, kj) = (tap // k, tap % k)."""
    oh, ow = conv_out(ih, k, s), conv_out(iw, k, s)
    S = np.zeros((k * k, oh * ow, ih * iw), np.float32)
    for ki in range(k):
        for kj in range(k):
            for p in range(oh * ow):
                o_i, o_j = p // ow, p % ow
                S[ki * k + kj, p, (s * o_i + ki) * iw + (s * o_j + kj)] = 1.0
    return jnp.asarray(S)


def pack_operands(params, atoms, action_dim, state_dim):
    """One-time host-side re-layout of the PyTorch-style parameters into the
    shapes the fused kernel consumes."""
    C, H, W = state_dim
    N = atoms.shape[0]
    A = action_dim

    oh1, ow1 = conv_out(H, 8, 4), conv_out(W, 8, 4)
    oh2, ow2 = conv_out(oh1, 4, 2), conv_out(ow1, 4, 2)
    oh3, ow3 = conv_out(oh2, 3, 1), conv_out(ow2, 3, 1)
    assert oh3 == 1 and ow3 == 1, (
        "fused kernel assumes the final conv output is 1x1 spatial "
        "(e.g. a 36x36 input); larger inputs need a general flatten step")

    w1, b1 = params["conv1"]
    w2, b2 = params["conv2"]
    w3, b3 = params["conv3"]
    aw1, ab1 = params["adv1"]
    aw2, ab2 = params["adv2"]
    vw1, vb1 = params["val1"]
    vw2, vb2 = params["val2"]

    ops = dict(
        # conv1 (the x/255 input scale is folded into the weight)
        w1t=(w1.reshape(w1.shape[0], -1).T / 255.0).astype(jnp.float32),
        b1=b1.reshape(1, -1),
        # conv2: per-tap row selectors + per-tap (Cin, Cout) weights
        s2=build_row_selectors(oh1, ow1, 4, 2),                       # (16, 9, 64)
        w2k=jnp.transpose(w2, (2, 3, 1, 0)).reshape(
            w2.shape[2] * w2.shape[3], w2.shape[1], w2.shape[0]),     # (16, 32, 64)
        b2=b2.reshape(1, -1),
        # conv3: per-tap (Cin, Cout) weights (tap index == input row index)
        w3k=jnp.transpose(w3, (2, 3, 1, 0)).reshape(
            w3.shape[2] * w3.shape[3], w3.shape[1], w3.shape[0]),     # (9, 64, 64)
        b3=b3.reshape(1, -1),
        # fused head layer 1 (advantage | value), lane-dense N = 1024
        wh1=jnp.concatenate([aw1.T, vw1.T], axis=1),                  # (64, 1024)
        bh1=jnp.concatenate([ab1, vb1]).reshape(1, -1),               # (1, 1024)
        # head layer 2, pre-sliced per action so the kernel writes (A, N) directly
        aw2r=aw2.reshape(A, N, -1).transpose(0, 2, 1),                # (A, 512, N)
        ab2r=ab2.reshape(A, N),
        vw2r=vw2.reshape(A, N, -1).transpose(0, 2, 1),                # (A, 512, N)
        vb2r=vb2.reshape(A, N),
        atoms=atoms.reshape(1, N).astype(jnp.float32),
    )
    return ops


def rainbow_forward(ops, x):
    """x: (1, C, H, W) raw pixels in [0, 255).  Returns (q_logits, q_values)."""
    assert x.shape[0] == 1, (
        "the reference module's value/advantage broadcast (.view(-1, 1, N)) "
        "is only valid for batch == 1")
    # im2col of the tiny raw input (20 KiB) on the wrapper side; everything
    # downstream runs inside the single fused Pallas kernel.
    patches1, _, _ = im2col_nchw(x.astype(jnp.float32), 8, 4)

    A, N = ops["ab2r"].shape
    p2 = ops["s2"].shape[1]
    oc2 = ops["w2k"].shape[2]

    operands = (
        patches1, ops["w1t"], ops["b1"],
        ops["s2"], ops["w2k"], ops["b2"],
        ops["w3k"], ops["b3"],
        ops["wh1"], ops["bh1"],
        ops["aw2r"], ops["ab2r"],
        ops["vw2r"], ops["vb2r"],
        ops["atoms"],
    )

    def _full_spec(a):
        zeros = (0,) * a.ndim
        return pl.BlockSpec(a.shape, lambda i, _z=zeros: _z)

    q_logits, q_values = pl.pallas_call(
        rainbow_fused_kernel,
        out_shape=(jax.ShapeDtypeStruct((A, A, N), jnp.float32),
                   jax.ShapeDtypeStruct((A, A), jnp.float32)),
        grid=(1,),
        in_specs=[_full_spec(a) for a in operands],
        out_specs=(pl.BlockSpec((A, A, N), lambda i: (0, 0, 0)),
                   pl.BlockSpec((A, A), lambda i: (0, 0))),
        scratch_shapes=[
            pltpu.VMEM((p2, oc2), jnp.float32),   # conv2 output (ReLU'd)
            pltpu.VMEM((A, N), jnp.float32),      # advantages in (action, atom) layout
            pltpu.VMEM((A, N), jnp.float32),      # values in (action, atom) layout
        ],
        compiler_params=pltpu.CompilerParams(
            dimension_semantics=("arbitrary",)),  # single step; no megacore split
    )(*operands)
    return q_logits, q_values


# ---------------------------------------------------------------------------
# Parameter init (matches the PyTorch module's init) + pure-JAX reference
# ---------------------------------------------------------------------------
def kaiming_uniform(key, shape, fan_in):
    bound = math.sqrt(6.0 / fan_in)  # gain sqrt(2) * sqrt(3 / fan_in)
    return jax.random.uniform(key, shape, jnp.float32, -bound, bound)


def make_noisy_params(key, in_f, out_f, std_init=0.5):
    """NoisyLinear effective (training-mode) weight/bias: mu + sigma * eps."""
    k1, k2, k3, k4 = jax.random.split(key, 4)
    mu_range = 1.0 / math.sqrt(in_f)
    w_mu = jax.random.uniform(k1, (out_f, in_f), jnp.float32, -mu_range, mu_range)
    b_mu = jax.random.uniform(k2, (out_f,), jnp.float32, -mu_range, mu_range)
    w_sigma = jnp.full((out_f, in_f), std_init / math.sqrt(in_f), jnp.float32)
    b_sigma = jnp.full((out_f,), std_init / math.sqrt(out_f), jnp.float32)

    def f(v):
        return jnp.sign(v) * jnp.sqrt(jnp.abs(v))

    eps_in = f(jax.random.normal(k3, (in_f,), jnp.float32))
    eps_out = f(jax.random.normal(k4, (out_f,), jnp.float32))
    return w_mu + w_sigma * jnp.outer(eps_out, eps_in), b_mu + b_sigma * eps_out


def reference_forward(params, x, atoms, action_dim):
    """Plain-JAX re-implementation of RainbowDqnNet.forward (for checking)."""
    P = jax.lax.Precision.HIGHEST
    num_atoms = atoms.shape[0]
    h = x.astype(jnp.float32) / 255.0

    def conv(h, w, b, stride):
        y = jax.lax.conv_general_dilated(
            h, w, (stride, stride), "VALID",
            dimension_numbers=("NCHW", "OIHW", "NCHW"), precision=P)
        return jax.nn.relu(y + b.reshape(1, -1, 1, 1))

    h = conv(h, *params["conv1"], 4)
    h = conv(h, *params["conv2"], 2)
    h = conv(h, *params["conv3"], 1)
    feat = h.reshape(h.shape[0], -1)

    def linear(z, w, b, relu):
        y = jnp.dot(z, w.T, precision=P) + b
        return jax.nn.relu(y) if relu else y

    adv = linear(linear(feat, *params["adv1"], True), *params["adv2"], False)
    val = linear(linear(feat, *params["val1"], True), *params["val2"], False)

    adv = adv.reshape(-1, action_dim, num_atoms)
    val = val.reshape(-1, 1, num_atoms)
    ql = val + (adv - jnp.mean(adv, axis=1, keepdims=True))
    ql = ql.reshape(-1, action_dim, num_atoms)
    qd = jax.nn.softmax(ql, axis=-1)
    qv = jnp.sum(qd * atoms[None, None, :], axis=-1)
    return ql, qv


if __name__ == "__main__":
    key = jax.random.PRNGKey(0)
    C, H, W = 4, 36, 36   # smallest spatial size valid for the 8/4, 4/2, 3/1 conv stack
    B = 1                 # reference value/advantage broadcast only works for batch == 1
    action_dim = 6
    num_atoms = 51
    atoms = jnp.linspace(-10.0, 10.0, num_atoms)

    oh1, ow1 = conv_out(H, 8, 4), conv_out(W, 8, 4)
    oh2, ow2 = conv_out(oh1, 4, 2), conv_out(ow1, 4, 2)
    oh3, ow3 = conv_out(oh2, 3, 1), conv_out(ow2, 3, 1)
    out_features = 64 * oh3 * ow3

    keys = jax.random.split(key, 8)
    params = {
        "conv1": (kaiming_uniform(keys[0], (32, C, 8, 8), C * 8 * 8),
                  jnp.zeros((32,), jnp.float32)),
        "conv2": (kaiming_uniform(keys[1], (64, 32, 4, 4), 32 * 4 * 4),
                  jnp.zeros((64,), jnp.float32)),
        "conv3": (kaiming_uniform(keys[2], (64, 64, 3, 3), 64 * 3 * 3),
                  jnp.zeros((64,), jnp.float32)),
        "adv1": make_noisy_params(keys[3], out_features, 512),
        "adv2": make_noisy_params(keys[4], 512, action_dim * num_atoms),
        "val1": (kaiming_uniform(keys[5], (512, out_features), out_features),
                 jnp.zeros((512,), jnp.float32)),
        "val2": (kaiming_uniform(keys[6], (action_dim * num_atoms, 512), 512),
                 jnp.zeros((action_dim * num_atoms,), jnp.float32)),
    }

    # raw pixel-like input in [0, 255) (the /255 is folded into the conv1 weights)
    x = jax.random.uniform(keys[7], (B, C, H, W), jnp.float32, 0.0, 255.0)

    ops = pack_operands(params, atoms, action_dim, (C, H, W))
    fwd = jax.jit(rainbow_forward)
    q_logits, q_values = fwd(ops, x)
    jax.block_until_ready((q_logits, q_values))

    assert q_logits.shape == (action_dim, action_dim, num_atoms)
    assert q_values.shape == (action_dim, action_dim)

    # Correctness check against a plain-JAX reference of the PyTorch module.
    ql_ref, qv_ref = reference_forward(params, x, atoms, action_dim)
    ql_ref = ql_ref.reshape(action_dim, action_dim, num_atoms)
    qv_ref = qv_ref.reshape(action_dim, action_dim)
    np.testing.assert_allclose(np.asarray(q_logits), np.asarray(ql_ref),
                               rtol=2e-2, atol=2e-2)
    np.testing.assert_allclose(np.asarray(q_values), np.asarray(qv_ref),
                               rtol=2e-2, atol=2e-2)

    print("KERNEL_OK")
</pallas_src>

<mosaic_0001>
module attributes {stable_mosaic.version = 11 : i64} {
  func.func @rainbow_fused_kernel(%arg0: i32, %arg1: memref<64x256xf32, #tpu.memory_space<vmem>>, %arg2: memref<256x32xf32, #tpu.memory_space<vmem>>, %arg3: memref<1x32xf32, #tpu.memory_space<vmem>>, %arg4: memref<16x9x64xf32, #tpu.memory_space<vmem>>, %arg5: memref<16x32x64xf32, #tpu.memory_space<vmem>>, %arg6: memref<1x64xf32, #tpu.memory_space<vmem>>, %arg7: memref<9x64x64xf32, #tpu.memory_space<vmem>>, %arg8: memref<1x64xf32, #tpu.memory_space<vmem>>, %arg9: memref<64x1024xf32, #tpu.memory_space<vmem>>, %arg10: memref<1x1024xf32, #tpu.memory_space<vmem>>, %arg11: memref<6x512x51xf32, #tpu.memory_space<vmem>>, %arg12: memref<6x51xf32, #tpu.memory_space<vmem>>, %arg13: memref<6x512x51xf32, #tpu.memory_space<vmem>>, %arg14: memref<6x51xf32, #tpu.memory_space<vmem>>, %arg15: memref<1x51xf32, #tpu.memory_space<vmem>>, %arg16: memref<6x6x51xf32, #tpu.memory_space<vmem>>, %arg17: memref<6x6xf32, #tpu.memory_space<vmem>>, %arg18: memref<9x64xf32, #tpu.memory_space<vmem>>, %arg19: memref<6x51xf32, #tpu.memory_space<vmem>>, %arg20: memref<6x51xf32, #tpu.memory_space<vmem>>) attributes {dimension_semantics = [#tpu.dimension_semantics<arbitrary>], iteration_bounds = array<i64: 1>, scalar_prefetch = 0 : i64, scratch_operands = 3 : i64, tpu.core_type = #tpu.core_type<tc>, window_params = [{pipeline_mode = #tpu.pipeline_mode<synchronous>, transform_indices = @transform_0, window_bounds = array<i64: 64, 256>}, {pipeline_mode = #tpu.pipeline_mode<synchronous>, transform_indices = @transform_1, window_bounds = array<i64: 256, 32>}, {pipeline_mode = #tpu.pipeline_mode<synchronous>, transform_indices = @transform_2, window_bounds = array<i64: 1, 32>}, {pipeline_mode = #tpu.pipeline_mode<synchronous>, transform_indices = @transform_3, window_bounds = array<i64: 16, 9, 64>}, {pipeline_mode = #tpu.pipeline_mode<synchronous>, transform_indices = @transform_4, window_bounds = array<i64: 16, 32, 64>}, {pipeline_mode = #tpu.pipeline_mode<synchronous>, transform_indices = @transform_5, window_bounds = array<i64: 1, 64>}, {pipeline_mode = #tpu.pipeline_mode<synchronous>, transform_indices = @transform_6, window_bounds = array<i64: 9, 64, 64>}, {pipeline_mode = #tpu.pipeline_mode<synchronous>, transform_indices = @transform_7, window_bounds = array<i64: 1, 64>}, {pipeline_mode = #tpu.pipeline_mode<synchronous>, transform_indices = @transform_8, window_bounds = array<i64: 64, 1024>}, {pipeline_mode = #tpu.pipeline_mode<synchronous>, transform_indices = @transform_9, window_bounds = array<i64: 1, 1024>}, {pipeline_mode = #tpu.pipeline_mode<synchronous>, transform_indices = @transform_10, window_bounds = array<i64: 6, 512, 51>}, {pipeline_mode = #tpu.pipeline_mode<synchronous>, transform_indices = @transform_11, window_bounds = array<i64: 6, 51>}, {pipeline_mode = #tpu.pipeline_mode<synchronous>, transform_indices = @transform_12, window_bounds = array<i64: 6, 512, 51>}, {pipeline_mode = #tpu.pipeline_mode<synchronous>, transform_indices = @transform_13, window_bounds = array<i64: 6, 51>}, {pipeline_mode = #tpu.pipeline_mode<synchronous>, transform_indices = @transform_14, window_bounds = array<i64: 1, 51>}, {pipeline_mode = #tpu.pipeline_mode<synchronous>, transform_indices = @transform_15, window_bounds = array<i64: 6, 6, 51>}, {pipeline_mode = #tpu.pipeline_mode<synchronous>, transform_indices = @transform_16, window_bounds = array<i64: 6, 6>}]} {
    %c0 = arith.constant 0 : index
    %c0_0 = arith.constant 0 : index
    %0 = vector.load %arg1[%c0, %c0_0] : memref<64x256xf32, #tpu.memory_space<vmem>>, vector<64x256xf32>
    %c0_1 = arith.constant 0 : index
    %c0_2 = arith.constant 0 : index
    %1 = vector.load %arg2[%c0_1, %c0_2] : memref<256x32xf32, #tpu.memory_space<vmem>>, vector<256x32xf32>
    %cst = arith.constant dense<0.000000e+00> : vector<64x32xf32>
    %2 = tpu.matmul %0, %1, %cst {dimension_numbers = #tpu.dot_dimension_numbers<[1], [0], [0], [1], [0, 0, 1, 1], [], []>} : vector<64x256xf32>, vector<256x32xf32>, vector<64x32xf32> -> vector<64x32xf32>
    %c0_3 = arith.constant 0 : index
    %c0_4 = arith.constant 0 : index
    %3 = vector.load %arg3[%c0_3, %c0_4] : memref<1x32xf32, #tpu.memory_space<vmem>>, vector<1x32xf32>
    %4 = vector.broadcast %3 : vector<1x32xf32> to vector<64x32xf32>
    %5 = arith.addf %2, %4 : vector<64x32xf32>
    %cst_5 = arith.constant 0.000000e+00 : f32
    %6 = vector.broadcast %cst_5 : f32 to vector<64x32xf32>
    %7 = arith.maximumf %5, %6 : vector<64x32xf32>
    %cst_6 = arith.constant 0.000000e+00 : f32
    %8 = vector.broadcast %cst_6 : f32 to vector<9x64xf32>
    %c0_7 = arith.constant 0 : index
    %c0_8 = arith.constant 0 : index
    %c0_9 = arith.constant 0 : index
    %9 = vector.load %arg4[%c0_7, %c0_8, %c0_9] : memref<16x9x64xf32, #tpu.memory_space<vmem>>, vector<1x9x64xf32>
    %10 = vector.shape_cast %9 : vector<1x9x64xf32> to vector<9x64xf32>
    %cst_10 = arith.constant dense<0.000000e+00> : vector<9x32xf32>
    %11 = tpu.matmul %10, %7, %cst_10 {dimension_numbers = #tpu.dot_dimension_numbers<[1], [0], [0], [1], [0, 0, 1, 1], [], []>} : vector<9x64xf32>, vector<64x32xf32>, vector<9x32xf32> -> vector<9x32xf32>
    %c0_11 = arith.constant 0 : index
    %c0_12 = arith.constant 0 : index
    %c0_13 = arith.constant 0 : index
    %12 = vector.load %arg5[%c0_11, %c0_12, %c0_13] : memref<16x32x64xf32, #tpu.memory_space<vmem>>, vector<1x32x64xf32>
    %13 = vector.shape_cast %12 : vector<1x32x64xf32> to vector<32x64xf32>
    %cst_14 = arith.constant dense<0.000000e+00> : vector<9x64xf32>
    %14 = tpu.matmul %11, %13, %cst_14 {dimension_numbers = #tpu.dot_dimension_numbers<[1], [0], [0], [1], [0, 0, 1, 1], [], []>} : vector<9x32xf32>, vector<32x64xf32>, vector<9x64xf32> -> vector<9x64xf32>
    %15 = arith.addf %8, %14 : vector<9x64xf32>
    %c1 = arith.constant 1 : index
    %c0_15 = arith.constant 0 : index
    %c0_16 = arith.constant 0 : index
    %16 = vector.load %arg4[%c1, %c0_15, %c0_16] : memref<16x9x64xf32, #tpu.memory_space<vmem>>, vector<1x9x64xf32>
    %17 = vector.shape_cast %16 : vector<1x9x64xf32> to vector<9x64xf32>
    %cst_17 = arith.constant dense<0.000000e+00> : vector<9x32xf32>
    %18 = tpu.matmul %17, %7, %cst_17 {dimension_numbers = #tpu.dot_dimension_numbers<[1], [0], [0], [1], [0, 0, 1, 1], [], []>} : vector<9x64xf32>, vector<64x32xf32>, vector<9x32xf32> -> vector<9x32xf32>
    %c1_18 = arith.constant 1 : index
    %c0_19 = arith.constant 0 : index
    %c0_20 = arith.constant 0 : index
    %19 = vector.load %arg5[%c1_18, %c0_19, %c0_20] : memref<16x32x64xf32, #tpu.memory_space<vmem>>, vector<1x32x64xf32>
    %20 = vector.shape_cast %19 : vector<1x32x64xf32> to vector<32x64xf32>
    %cst_21 = arith.constant dense<0.000000e+00> : vector<9x64xf32>
    %21 = tpu.matmul %18, %20, %cst_21 {dimension_numbers = #tpu.dot_dimension_numbers<[1], [0], [0], [1], [0, 0, 1, 1], [], []>} : vector<9x32xf32>, vector<32x64xf32>, vector<9x64xf32> -> vector<9x64xf32>
    %22 = arith.addf %15, %21 : vector<9x64xf32>
    %c2 = arith.constant 2 : index
    %c0_22 = arith.constant 0 : index
    %c0_23 = arith.constant 0 : index
    %23 = vector.load %arg4[%c2, %c0_22, %c0_23] : memref<16x9x64xf32, #tpu.memory_space<vmem>>, vector<1x9x64xf32>
    %24 = vector.shape_cast %23 : vector<1x9x64xf32> to vector<9x64xf32>
    %cst_24 = arith.constant dense<0.000000e+00> : vector<9x32xf32>
    %25 = tpu.matmul %24, %7, %cst_24 {dimension_numbers = #tpu.dot_dimension_numbers<[1], [0], [0], [1], [0, 0, 1, 1], [], []>} : vector<9x64xf32>, vector<64x32xf32>, vector<9x32xf32> -> vector<9x32xf32>
    %c2_25 = arith.constant 2 : index
    %c0_26 = arith.constant 0 : index
    %c0_27 = arith.constant 0 : index
    %26 = vector.load %arg5[%c2_25, %c0_26, %c0_27] : memref<16x32x64xf32, #tpu.memory_space<vmem>>, vector<1x32x64xf32>
    %27 = vector.shape_cast %26 : vector<1x32x64xf32> to vector<32x64xf32>
    %cst_28 = arith.constant dense<0.000000e+00> : vector<9x64xf32>
    %28 = tpu.matmul %25, %27, %cst_28 {dimension_numbers = #tpu.dot_dimension_numbers<[1], [0], [0], [1], [0, 0, 1, 1], [], []>} : vector<9x32xf32>, vector<32x64xf32>, vector<9x64xf32> -> vector<9x64xf32>
    %29 = arith.addf %22, %28 : vector<9x64xf32>
    %c3 = arith.constant 3 : index
    %c0_29 = arith.constant 0 : index
    %c0_30 = arith.constant 0 : index
    %30 = vector.load %arg4[%c3, %c0_29, %c0_30] : memref<16x9x64xf32, #tpu.memory_space<vmem>>, vector<1x9x64xf32>
    %31 = vector.shape_cast %30 : vector<1x9x64xf32> to vector<9x64xf32>
    %cst_31 = arith.constant dense<0.000000e+00> : vector<9x32xf32>
    %32 = tpu.matmul %31, %7, %cst_31 {dimension_numbers = #tpu.dot_dimension_numbers<[1], [0], [0], [1], [0, 0, 1, 1], [], []>} : vector<9x64xf32>, vector<64x32xf32>, vector<9x32xf32> -> vector<9x32xf32>
    %c3_32 = arith.constant 3 : index
    %c0_33 = arith.constant 0 : index
    %c0_34 = arith.constant 0 : index
    %33 = vector.load %arg5[%c3_32, %c0_33, %c0_34] : memref<16x32x64xf32, #tpu.memory_space<vmem>>, vector<1x32x64xf32>
    %34 = vector.shape_cast %33 : vector<1x32x64xf32> to vector<32x64xf32>
    %cst_35 = arith.constant dense<0.000000e+00> : vector<9x64xf32>
    %35 = tpu.matmul %32, %34, %cst_35 {dimension_numbers = #tpu.dot_dimension_numbers<[1], [0], [0], [1], [0, 0, 1, 1], [], []>} : vector<9x32xf32>, vector<32x64xf32>, vector<9x64xf32> -> vector<9x64xf32>
    %36 = arith.addf %29, %35 : vector<9x64xf32>
    %c4 = arith.constant 4 : index
    %c0_36 = arith.constant 0 : index
    %c0_37 = arith.constant 0 : index
    %37 = vector.load %arg4[%c4, %c0_36, %c0_37] : memref<16x9x64xf32, #tpu.memory_space<vmem>>, vector<1x9x64xf32>
    %38 = vector.shape_cast %37 : vector<1x9x64xf32> to vector<9x64xf32>
    %cst_38 = arith.constant dense<0.000000e+00> : vector<9x32xf32>
    %39 = tpu.matmul %38, %7, %cst_38 {dimension_numbers = #tpu.dot_dimension_numbers<[1], [0], [0], [1], [0, 0, 1, 1], [], []>} : vector<9x64xf32>, vector<64x32xf32>, vector<9x32xf32> -> vector<9x32xf32>
    %c4_39 = arith.constant 4 : index
    %c0_40 = arith.constant 0 : index
    %c0_41 = arith.constant 0 : index
    %40 = vector.load %arg5[%c4_39, %c0_40, %c0_41] : memref<16x32x64xf32, #tpu.memory_space<vmem>>, vector<1x32x64xf32>
    %41 = vector.shape_cast %40 : vector<1x32x64xf32> to vector<32x64xf32>
    %cst_42 = arith.constant dense<0.000000e+00> : vector<9x64xf32>
    %42 = tpu.matmul %39, %41, %cst_42 {dimension_numbers = #tpu.dot_dimension_numbers<[1], [0], [0], [1], [0, 0, 1, 1], [], []>} : vector<9x32xf32>, vector<32x64xf32>, vector<9x64xf32> -> vector<9x64xf32>
    %43 = arith.addf %36, %42 : vector<9x64xf32>
    %c5 = arith.constant 5 : index
    %c0_43 = arith.constant 0 : index
    %c0_44 = arith.constant 0 : index
    %44 = vector.load %arg4[%c5, %c0_43, %c0_44] : memref<16x9x64xf32, #tpu.memory_space<vmem>>, vector<1x9x64xf32>
    %45 = vector.shape_cast %44 : vector<1x9x64xf32> to vector<9x64xf32>
    %cst_45 = arith.constant dense<0.000000e+00> : vector<9x32xf32>
    %46 = tpu.matmul %45, %7, %cst_45 {dimension_numbers = #tpu.dot_dimension_numbers<[1], [0], [0], [1], [0, 0, 1, 1], [], []>} : vector<9x64xf32>, vector<64x32xf32>, vector<9x32xf32> -> vector<9x32xf32>
    %c5_46 = arith.constant 5 : index
    %c0_47 = arith.constant 0 : index
    %c0_48 = arith.constant 0 : index
    %47 = vector.load %arg5[%c5_46, %c0_47, %c0_48] : memref<16x32x64xf32, #tpu.memory_space<vmem>>, vector<1x32x64xf32>
    %48 = vector.shape_cast %47 : vector<1x32x64xf32> to vector<32x64xf32>
    %cst_49 = arith.constant dense<0.000000e+00> : vector<9x64xf32>
    %49 = tpu.matmul %46, %48, %cst_49 {dimension_numbers = #tpu.dot_dimension_numbers<[1], [0], [0], [1], [0, 0, 1, 1], [], []>} : vector<9x32xf32>, vector<32x64xf32>, vector<9x64xf32> -> vector<9x64xf32>
    %50 = arith.addf %43, %49 : vector<9x64xf32>
    %c6 = arith.constant 6 : index
    %c0_50 = arith.constant 0 : index
    %c0_51 = arith.constant 0 : index
    %51 = vector.load %arg4[%c6, %c0_50, %c0_51] : memref<16x9x64xf32, #tpu.memory_space<vmem>>, vector<1x9x64xf32>
    %52 = vector.shape_cast %51 : vector<1x9x64xf32> to vector<9x64xf32>
    %cst_52 = arith.constant dense<0.000000e+00> : vector<9x32xf32>
    %53 = tpu.matmul %52, %7, %cst_52 {dimension_numbers = #tpu.dot_dimension_numbers<[1], [0], [0], [1], [0, 0, 1, 1], [], []>} : vector<9x64xf32>, vector<64x32xf32>, vector<9x32xf32> -> vector<9x32xf32>
    %c6_53 = arith.constant 6 : index
    %c0_54 = arith.constant 0 : index
    %c0_55 = arith.constant 0 : index
    %54 = vector.load %arg5[%c6_53, %c0_54, %c0_55] : memref<16x32x64xf32, #tpu.memory_space<vmem>>, vector<1x32x64xf32>
    %55 = vector.shape_cast %54 : vector<1x32x64xf32> to vector<32x64xf32>
    %cst_56 = arith.constant dense<0.000000e+00> : vector<9x64xf32>
    %56 = tpu.matmul %53, %55, %cst_56 {dimension_numbers = #tpu.dot_dimension_numbers<[1], [0], [0], [1], [0, 0, 1, 1], [], []>} : vector<9x32xf32>, vector<32x64xf32>, vector<9x64xf32> -> vector<9x64xf32>
    %57 = arith.addf %50, %56 : vector<9x64xf32>
    %c7 = arith.constant 7 : index
    %c0_57 = arith.constant 0 : index
    %c0_58 = arith.constant 0 : index
    %58 = vector.load %arg4[%c7, %c0_57, %c0_58] : memref<16x9x64xf32, #tpu.memory_space<vmem>>, vector<1x9x64xf32>
    %59 = vector.shape_cast %58 : vector<1x9x64xf32> to vector<9x64xf32>
    %cst_59 = arith.constant dense<0.000000e+00> : vector<9x32xf32>
    %60 = tpu.matmul %59, %7, %cst_59 {dimension_numbers = #tpu.dot_dimension_numbers<[1], [0], [0], [1], [0, 0, 1, 1], [], []>} : vector<9x64xf32>, vector<64x32xf32>, vector<9x32xf32> -> vector<9x32xf32>
    %c7_60 = arith.constant 7 : index
    %c0_61 = arith.constant 0 : index
    %c0_62 = arith.constant 0 : index
    %61 = vector.load %arg5[%c7_60, %c0_61, %c0_62] : memref<16x32x64xf32, #tpu.memory_space<vmem>>, vector<1x32x64xf32>
    %62 = vector.shape_cast %61 : vector<1x32x64xf32> to vector<32x64xf32>
    %cst_63 = arith.constant dense<0.000000e+00> : vector<9x64xf32>
    %63 = tpu.matmul %60, %62, %cst_63 {dimension_numbers = #tpu.dot_dimension_numbers<[1], [0], [0], [1], [0, 0, 1, 1], [], []>} : vector<9x32xf32>, vector<32x64xf32>, vector<9x64xf32> -> vector<9x64xf32>
    %64 = arith.addf %57, %63 : vector<9x64xf32>
    %c8 = arith.constant 8 : index
    %c0_64 = arith.constant 0 : index
    %c0_65 = arith.constant 0 : index
    %65 = vector.load %arg4[%c8, %c0_64, %c0_65] : memref<16x9x64xf32, #tpu.memory_space<vmem>>, vector<1x9x64xf32>
    %66 = vector.shape_cast %65 : vector<1x9x64xf32> to vector<9x64xf32>
    %cst_66 = arith.constant dense<0.000000e+00> : vector<9x32xf32>
    %67 = tpu.matmul %66, %7, %cst_66 {dimension_numbers = #tpu.dot_dimension_numbers<[1], [0], [0], [1], [0, 0, 1, 1], [], []>} : vector<9x64xf32>, vector<64x32xf32>, vector<9x32xf32> -> vector<9x32xf32>
    %c8_67 = arith.constant 8 : index
    %c0_68 = arith.constant 0 : index
    %c0_69 = arith.constant 0 : index
    %68 = vector.load %arg5[%c8_67, %c0_68, %c0_69] : memref<16x32x64xf32, #tpu.memory_space<vmem>>, vector<1x32x64xf32>
    %69 = vector.shape_cast %68 : vector<1x32x64xf32> to vector<32x64xf32>
    %cst_70 = arith.constant dense<0.000000e+00> : vector<9x64xf32>
    %70 = tpu.matmul %67, %69, %cst_70 {dimension_numbers = #tpu.dot_dimension_numbers<[1], [0], [0], [1], [0, 0, 1, 1], [], []>} : vector<9x32xf32>, vector<32x64xf32>, vector<9x64xf32> -> vector<9x64xf32>
    %71 = arith.addf %64, %70 : vector<9x64xf32>
    %c9 = arith.constant 9 : index
    %c0_71 = arith.constant 0 : index
    %c0_72 = arith.constant 0 : index
    %72 = vector.load %arg4[%c9, %c0_71, %c0_72] : memref<16x9x64xf32, #tpu.memory_space<vmem>>, vector<1x9x64xf32>
    %73 = vector.shape_cast %72 : vector<1x9x64xf32> to vector<9x64xf32>
    %cst_73 = arith.constant dense<0.000000e+00> : vector<9x32xf32>
    %74 = tpu.matmul %73, %7, %cst_73 {dimension_numbers = #tpu.dot_dimension_numbers<[1], [0], [0], [1], [0, 0, 1, 1], [], []>} : vector<9x64xf32>, vector<64x32xf32>, vector<9x32xf32> -> vector<9x32xf32>
    %c9_74 = arith.constant 9 : index
    %c0_75 = arith.constant 0 : index
    %c0_76 = arith.constant 0 : index
    %75 = vector.load %arg5[%c9_74, %c0_75, %c0_76] : memref<16x32x64xf32, #tpu.memory_space<vmem>>, vector<1x32x64xf32>
    %76 = vector.shape_cast %75 : vector<1x32x64xf32> to vector<32x64xf32>
    %cst_77 = arith.constant dense<0.000000e+00> : vector<9x64xf32>
    %77 = tpu.matmul %74, %76, %cst_77 {dimension_numbers = #tpu.dot_dimension_numbers<[1], [0], [0], [1], [0, 0, 1, 1], [], []>} : vector<9x32xf32>, vector<32x64xf32>, vector<9x64xf32> -> vector<9x64xf32>
    %78 = arith.addf %71, %77 : vector<9x64xf32>
    %c10 = arith.constant 10 : index
    %c0_78 = arith.constant 0 : index
    %c0_79 = arith.constant 0 : index
    %79 = vector.load %arg4[%c10, %c0_78, %c0_79] : memref<16x9x64xf32, #tpu.memory_space<vmem>>, vector<1x9x64xf32>
    %80 = vector.shape_cast %79 : vector<1x9x64xf32> to vector<9x64xf32>
    %cst_80 = arith.constant dense<0.000000e+00> : vector<9x32xf32>
    %81 = tpu.matmul %80, %7, %cst_80 {dimension_numbers = #tpu.dot_dimension_numbers<[1], [0], [0], [1], [0, 0, 1, 1], [], []>} : vector<9x64xf32>, vector<64x32xf32>, vector<9x32xf32> -> vector<9x32xf32>
    %c10_81 = arith.constant 10 : index
    %c0_82 = arith.constant 0 : index
    %c0_83 = arith.constant 0 : index
    %82 = vector.load %arg5[%c10_81, %c0_82, %c0_83] : memref<16x32x64xf32, #tpu.memory_space<vmem>>, vector<1x32x64xf32>
    %83 = vector.shape_cast %82 : vector<1x32x64xf32> to vector<32x64xf32>
    %cst_84 = arith.constant dense<0.000000e+00> : vector<9x64xf32>
    %84 = tpu.matmul %81, %83, %cst_84 {dimension_numbers = #tpu.dot_dimension_numbers<[1], [0], [0], [1], [0, 0, 1, 1], [], []>} : vector<9x32xf32>, vector<32x64xf32>, vector<9x64xf32> -> vector<9x64xf32>
    %85 = arith.addf %78, %84 : vector<9x64xf32>
    %c11 = arith.constant 11 : index
    %c0_85 = arith.constant 0 : index
    %c0_86 = arith.constant 0 : index
    %86 = vector.load %arg4[%c11, %c0_85, %c0_86] : memref<16x9x64xf32, #tpu.memory_space<vmem>>, vector<1x9x64xf32>
    %87 = vector.shape_cast %86 : vector<1x9x64xf32> to vector<9x64xf32>
    %cst_87 = arith.constant dense<0.000000e+00> : vector<9x32xf32>
    %88 = tpu.matmul %87, %7, %cst_87 {dimension_numbers = #tpu.dot_dimension_numbers<[1], [0], [0], [1], [0, 0, 1, 1], [], []>} : vector<9x64xf32>, vector<64x32xf32>, vector<9x32xf32> -> vector<9x32xf32>
    %c11_88 = arith.constant 11 : index
    %c0_89 = arith.constant 0 : index
    %c0_90 = arith.constant 0 : index
    %89 = vector.load %arg5[%c11_88, %c0_89, %c0_90] : memref<16x32x64xf32, #tpu.memory_space<vmem>>, vector<1x32x64xf32>
    %90 = vector.shape_cast %89 : vector<1x32x64xf32> to vector<32x64xf32>
    %cst_91 = arith.constant dense<0.000000e+00> : vector<9x64xf32>
    %91 = tpu.matmul %88, %90, %cst_91 {dimension_numbers = #tpu.dot_dimension_numbers<[1], [0], [0], [1], [0, 0, 1, 1], [], []>} : vector<9x32xf32>, vector<32x64xf32>, vector<9x64xf32> -> vector<9x64xf32>
    %92 = arith.addf %85, %91 : vector<9x64xf32>
    %c12 = arith.constant 12 : index
    %c0_92 = arith.constant 0 : index
    %c0_93 = arith.constant 0 : index
    %93 = vector.load %arg4[%c12, %c0_92, %c0_93] : memref<16x9x64xf32, #tpu.memory_space<vmem>>, vector<1x9x64xf32>
    %94 = vector.shape_cast %93 : vector<1x9x64xf32> to vector<9x64xf32>
    %cst_94 = arith.constant dense<0.000000e+00> : vector<9x32xf32>
    %95 = tpu.matmul %94, %7, %cst_94 {dimension_numbers = #tpu.dot_dimension_numbers<[1], [0], [0], [1], [0, 0, 1, 1], [], []>} : vector<9x64xf32>, vector<64x32xf32>, vector<9x32xf32> -> vector<9x32xf32>
    %c12_95 = arith.constant 12 : index
    %c0_96 = arith.constant 0 : index
    %c0_97 = arith.constant 0 : index
    %96 = vector.load %arg5[%c12_95, %c0_96, %c0_97] : memref<16x32x64xf32, #tpu.memory_space<vmem>>, vector<1x32x64xf32>
    %97 = vector.shape_cast %96 : vector<1x32x64xf32> to vector<32x64xf32>
    %cst_98 = arith.constant dense<0.000000e+00> : vector<9x64xf32>
    %98 = tpu.matmul %95, %97, %cst_98 {dimension_numbers = #tpu.dot_dimension_numbers<[1], [0], [0], [1], [0, 0, 1, 1], [], []>} : vector<9x32xf32>, vector<32x64xf32>, vector<9x64xf32> -> vector<9x64xf32>
    %99 = arith.addf %92, %98 : vector<9x64xf32>
    %c13 = arith.constant 13 : index
    %c0_99 = arith.constant 0 : index
    %c0_100 = arith.constant 0 : index
    %100 = vector.load %arg4[%c13, %c0_99, %c0_100] : memref<16x9x64xf32, #tpu.memory_space<vmem>>, vector<1x9x64xf32>
    %101 = vector.shape_cast %100 : vector<1x9x64xf32> to vector<9x64xf32>
    %cst_101 = arith.constant dense<0.000000e+00> : vector<9x32xf32>
    %102 = tpu.matmul %101, %7, %cst_101 {dimension_numbers = #tpu.dot_dimension_numbers<[1], [0], [0], [1], [0, 0, 1, 1], [], []>} : vector<9x64xf32>, vector<64x32xf32>, vector<9x32xf32> -> vector<9x32xf32>
    %c13_102 = arith.constant 13 : index
    %c0_103 = arith.constant 0 : index
    %c0_104 = arith.constant 0 : index
    %103 = vector.load %arg5[%c13_102, %c0_103, %c0_104] : memref<16x32x64xf32, #tpu.memory_space<vmem>>, vector<1x32x64xf32>
    %104 = vector.shape_cast %103 : vector<1x32x64xf32> to vector<32x64xf32>
    %cst_105 = arith.constant dense<0.000000e+00> : vector<9x64xf32>
    %105 = tpu.matmul %102, %104, %cst_105 {dimension_numbers = #tpu.dot_dimension_numbers<[1], [0], [0], [1], [0, 0, 1, 1], [], []>} : vector<9x32xf32>, vector<32x64xf32>, vector<9x64xf32> -> vector<9x64xf32>
    %106 = arith.addf %99, %105 : vector<9x64xf32>
    %c14 = arith.constant 14 : index
    %c0_106 = arith.constant 0 : index
    %c0_107 = arith.constant 0 : index
    %107 = vector.load %arg4[%c14, %c0_106, %c0_107] : memref<16x9x64xf32, #tpu.memory_space<vmem>>, vector<1x9x64xf32>
    %108 = vector.shape_cast %107 : vector<1x9x64xf32> to vector<9x64xf32>
    %cst_108 = arith.constant dense<0.000000e+00> : vector<9x32xf32>
    %109 = tpu.matmul %108, %7, %cst_108 {dimension_numbers = #tpu.dot_dimension_numbers<[1], [0], [0], [1], [0, 0, 1, 1], [], []>} : vector<9x64xf32>, vector<64x32xf32>, vector<9x32xf32> -> vector<9x32xf32>
    %c14_109 = arith.constant 14 : index
    %c0_110 = arith.constant 0 : index
    %c0_111 = arith.constant 0 : index
    %110 = vector.load %arg5[%c14_109, %c0_110, %c0_111] : memref<16x32x64xf32, #tpu.memory_space<vmem>>, vector<1x32x64xf32>
    %111 = vector.shape_cast %110 : vector<1x32x64xf32> to vector<32x64xf32>
    %cst_112 = arith.constant dense<0.000000e+00> : vector<9x64xf32>
    %112 = tpu.matmul %109, %111, %cst_112 {dimension_numbers = #tpu.dot_dimension_numbers<[1], [0], [0], [1], [0, 0, 1, 1], [], []>} : vector<9x32xf32>, vector<32x64xf32>, vector<9x64xf32> -> vector<9x64xf32>
    %113 = arith.addf %106, %112 : vector<9x64xf32>
    %c15 = arith.constant 15 : index
    %c0_113 = arith.constant 0 : index
    %c0_114 = arith.constant 0 : index
    %114 = vector.load %arg4[%c15, %c0_113, %c0_114] : memref<16x9x64xf32, #tpu.memory_space<vmem>>, vector<1x9x64xf32>
    %115 = vector.shape_cast %114 : vector<1x9x64xf32> to vector<9x64xf32>
    %cst_115 = arith.constant dense<0.000000e+00> : vector<9x32xf32>
    %116 = tpu.matmul %115, %7, %cst_115 {dimension_numbers = #tpu.dot_dimension_numbers<[1], [0], [0], [1], [0, 0, 1, 1], [], []>} : vector<9x64xf32>, vector<64x32xf32>, vector<9x32xf32> -> vector<9x32xf32>
    %c15_116 = arith.constant 15 : index
    %c0_117 = arith.constant 0 : index
    %c0_118 = arith.constant 0 : index
    %117 = vector.load %arg5[%c15_116, %c0_117, %c0_118] : memref<16x32x64xf32, #tpu.memory_space<vmem>>, vector<1x32x64xf32>
    %118 = vector.shape_cast %117 : vector<1x32x64xf32> to vector<32x64xf32>
    %cst_119 = arith.constant dense<0.000000e+00> : vector<9x64xf32>
    %119 = tpu.matmul %116, %118, %cst_119 {dimension_numbers = #tpu.dot_dimension_numbers<[1], [0], [0], [1], [0, 0, 1, 1], [], []>} : vector<9x32xf32>, vector<32x64xf32>, vector<9x64xf32> -> vector<9x64xf32>
    %120 = arith.addf %113, %119 : vector<9x64xf32>
    %c0_120 = arith.constant 0 : index
    %c0_121 = arith.constant 0 : index
    %121 = vector.load %arg6[%c0_120, %c0_121] : memref<1x64xf32, #tpu.memory_space<vmem>>, vector<1x64xf32>
    %122 = vector.broadcast %121 : vector<1x64xf32> to vector<9x64xf32>
    %123 = arith.addf %120, %122 : vector<9x64xf32>
    %cst_122 = arith.constant 0.000000e+00 : f32
    %124 = vector.broadcast %cst_122 : f32 to vector<9x64xf32>
    %125 = arith.maximumf %123, %124 : vector<9x64xf32>
    %c0_123 = arith.constant 0 : index
    %c0_124 = arith.constant 0 : index
    %126 = vector.load %arg18[%c0_123, %c0_124] : memref<9x64xf32, #tpu.memory_space<vmem>>, vector<9x64xf32>
    tpu.vector_store %arg18[%c0_123, %c0_124], %125 {strides = array<i32>} : memref<9x64xf32, #tpu.memory_space<vmem>>, vector<9x64xf32>,
    %cst_125 = arith.constant 0.000000e+00 : f32
    %127 = vector.broadcast %cst_125 : f32 to vector<1x64xf32>
    %c0_126 = arith.constant 0 : index
    %c0_127 = arith.constant 0 : index
    %128 = vector.load %arg18[%c0_126, %c0_127] : memref<9x64xf32, #tpu.memory_space<vmem>>, vector<1x64xf32>
    %c0_128 = arith.constant 0 : index
    %c0_129 = arith.constant 0 : index
    %c0_130 = arith.constant 0 : index
    %129 = vector.load %arg7[%c0_128, %c0_129, %c0_130] : memref<9x64x64xf32, #tpu.memory_space<vmem>>, vector<1x64x64xf32>
    %130 = vector.shape_cast %129 : vector<1x64x64xf32> to vector<64x64xf32>
    %cst_131 = arith.constant dense<0.000000e+00> : vector<1x64xf32>
    %131 = tpu.matmul %128, %130, %cst_131 {dimension_numbers = #tpu.dot_dimension_numbers<[1], [0], [0], [1], [0, 0, 1, 1], [], []>} : vector<1x64xf32>, vector<64x64xf32>, vector<1x64xf32> -> vector<1x64xf32>
    %132 = arith.addf %127, %131 : vector<1x64xf32>
    %c1_132 = arith.constant 1 : index
    %c0_133 = arith.constant 0 : index
    %133 = vector.load %arg18[%c1_132, %c0_133] : memref<9x64xf32, #tpu.memory_space<vmem>>, vector<1x64xf32>
    %c1_134 = arith.constant 1 : index
    %c0_135 = arith.constant 0 : index
    %c0_136 = arith.constant 0 : index
    %134 = vector.load %arg7[%c1_134, %c0_135, %c0_136] : memref<9x64x64xf32, #tpu.memory_space<vmem>>, vector<1x64x64xf32>
    %135 = vector.shape_cast %134 : vector<1x64x64xf32> to vector<64x64xf32>
    %cst_137 = arith.constant dense<0.000000e+00> : vector<1x64xf32>
    %136 = tpu.matmul %133, %135, %cst_137 {dimension_numbers = #tpu.dot_dimension_numbers<[1], [0], [0], [1], [0, 0, 1, 1], [], []>} : vector<1x64xf32>, vector<64x64xf32>, vector<1x64xf32> -> vector<1x64xf32>
    %137 = arith.addf %132, %136 : vector<1x64xf32>
    %c2_138 = arith.constant 2 : index
    %c0_139 = arith.constant 0 : index
    %138 = vector.load %arg18[%c2_138, %c0_139] : memref<9x64xf32, #tpu.memory_space<vmem>>, vector<1x64xf32>
    %c2_140 = arith.constant 2 : index
    %c0_141 = arith.constant 0 : index
    %c0_142 = arith.constant 0 : index
    %139 = vector.load %arg7[%c2_140, %c0_141, %c0_142] : memref<9x64x64xf32, #tpu.memory_space<vmem>>, vector<1x64x64xf32>
    %140 = vector.shape_cast %139 : vector<1x64x64xf32> to vector<64x64xf32>
    %cst_143 = arith.constant dense<0.000000e+00> : vector<1x64xf32>
    %141 = tpu.matmul %138, %140, %cst_143 {dimension_numbers = #tpu.dot_dimension_numbers<[1], [0], [0], [1], [0, 0, 1, 1], [], []>} : vector<1x64xf32>, vector<64x64xf32>, vector<1x64xf32> -> vector<1x64xf32>
    %142 = arith.addf %137, %141 : vector<1x64xf32>
    %c3_144 = arith.constant 3 : index
    %c0_145 = arith.constant 0 : index
    %143 = vector.load %arg18[%c3_144, %c0_145] : memref<9x64xf32, #tpu.memory_space<vmem>>, vector<1x64xf32>
    %c3_146 = arith.constant 3 : index
    %c0_147 = arith.constant 0 : index
    %c0_148 = arith.constant 0 : index
    %144 = vector.load %arg7[%c3_146, %c0_147, %c0_148] : memref<9x64x64xf32, #tpu.memory_space<vmem>>, vector<1x64x64xf32>
    %145 = vector.shape_cast %144 : vector<1x64x64xf32> to vector<64x64xf32>
    %cst_149 = arith.constant dense<0.000000e+00> : vector<1x64xf32>
    %146 = tpu.matmul %143, %145, %cst_149 {dimension_numbers = #tpu.dot_dimension_numbers<[1], [0], [0], [1], [0, 0, 1, 1], [], []>} : vector<1x64xf32>, vector<64x64xf32>, vector<1x64xf32> -> vector<1x64xf32>
    %147 = arith.addf %142, %146 : vector<1x64xf32>
    %c4_150 = arith.constant 4 : index
    %c0_151 = arith.constant 0 : index
    %148 = vector.load %arg18[%c4_150, %c0_151] : memref<9x64xf32, #tpu.memory_space<vmem>>, vector<1x64xf32>
    %c4_152 = arith.constant 4 : index
    %c0_153 = arith.constant 0 : index
    %c0_154 = arith.constant 0 : index
    %149 = vector.load %arg7[%c4_152, %c0_153, %c0_154] : memref<9x64x64xf32, #tpu.memory_space<vmem>>, vector<1x64x64xf32>
    %150 = vector.shape_cast %149 : vector<1x64x64xf32> to vector<64x64xf32>
    %cst_155 = arith.constant dense<0.000000e+00> : vector<1x64xf32>
    %151 = tpu.matmul %148, %150, %cst_155 {dimension_numbers = #tpu.dot_dimension_numbers<[1], [0], [0], [1], [0, 0, 1, 1], [], []>} : vector<1x64xf32>, vector<64x64xf32>, vector<1x64xf32> -> vector<1x64xf32>
    %152 = arith.addf %147, %151 : vector<1x64xf32>
    %c5_156 = arith.constant 5 : index
    %c0_157 = arith.constant 0 : index
    %153 = vector.load %arg18[%c5_156, %c0_157] : memref<9x64xf32, #tpu.memory_space<vmem>>, vector<1x64xf32>
    %c5_158 = arith.constant 5 : index
    %c0_159 = arith.constant 0 : index
    %c0_160 = arith.constant 0 : index
    %154 = vector.load %arg7[%c5_158, %c0_159, %c0_160] : memref<9x64x64xf32, #tpu.memory_space<vmem>>, vector<1x64x64xf32>
    %155 = vector.shape_cast %154 : vector<1x64x64xf32> to vector<64x64xf32>
    %cst_161 = arith.constant dense<0.000000e+00> : vector<1x64xf32>
    %156 = tpu.matmul %153, %155, %cst_161 {dimension_numbers = #tpu.dot_dimension_numbers<[1], [0], [0], [1], [0, 0, 1, 1], [], []>} : vector<1x64xf32>, vector<64x64xf32>, vector<1x64xf32> -> vector<1x64xf32>
    %157 = arith.addf %152, %156 : vector<1x64xf32>
    %c6_162 = arith.constant 6 : index
    %c0_163 = arith.constant 0 : index
    %158 = vector.load %arg18[%c6_162, %c0_163] : memref<9x64xf32, #tpu.memory_space<vmem>>, vector<1x64xf32>
    %c6_164 = arith.constant 6 : index
    %c0_165 = arith.constant 0 : index
    %c0_166 = arith.constant 0 : index
    %159 = vector.load %arg7[%c6_164, %c0_165, %c0_166] : memref<9x64x64xf32, #tpu.memory_space<vmem>>, vector<1x64x64xf32>
    %160 = vector.shape_cast %159 : vector<1x64x64xf32> to vector<64x64xf32>
    %cst_167 = arith.constant dense<0.000000e+00> : vector<1x64xf32>
    %161 = tpu.matmul %158, %160, %cst_167 {dimension_numbers = #tpu.dot_dimension_numbers<[1], [0], [0], [1], [0, 0, 1, 1], [], []>} : vector<1x64xf32>, vector<64x64xf32>, vector<1x64xf32> -> vector<1x64xf32>
    %162 = arith.addf %157, %161 : vector<1x64xf32>
    %c7_168 = arith.constant 7 : index
    %c0_169 = arith.constant 0 : index
    %163 = vector.load %arg18[%c7_168, %c0_169] : memref<9x64xf32, #tpu.memory_space<vmem>>, vector<1x64xf32>
    %c7_170 = arith.constant 7 : index
    %c0_171 = arith.constant 0 : index
    %c0_172 = arith.constant 0 : index
    %164 = vector.load %arg7[%c7_170, %c0_171, %c0_172] : memref<9x64x64xf32, #tpu.memory_space<vmem>>, vector<1x64x64xf32>
    %165 = vector.shape_cast %164 : vector<1x64x64xf32> to vector<64x64xf32>
    %cst_173 = arith.constant dense<0.000000e+00> : vector<1x64xf32>
    %166 = tpu.matmul %163, %165, %cst_173 {dimension_numbers = #tpu.dot_dimension_numbers<[1], [0], [0], [1], [0, 0, 1, 1], [], []>} : vector<1x64xf32>, vector<64x64xf32>, vector<1x64xf32> -> vector<1x64xf32>
    %167 = arith.addf %162, %166 : vector<1x64xf32>
    %c8_174 = arith.constant 8 : index
    %c0_175 = arith.constant 0 : index
    %168 = vector.load %arg18[%c8_174, %c0_175] : memref<9x64xf32, #tpu.memory_space<vmem>>, vector<1x64xf32>
    %c8_176 = arith.constant 8 : index
    %c0_177 = arith.constant 0 : index
    %c0_178 = arith.constant 0 : index
    %169 = vector.load %arg7[%c8_176, %c0_177, %c0_178] : memref<9x64x64xf32, #tpu.memory_space<vmem>>, vector<1x64x64xf32>
    %170 = vector.shape_cast %169 : vector<1x64x64xf32> to vector<64x64xf32>
    %cst_179 = arith.constant dense<0.000000e+00> : vector<1x64xf32>
    %171 = tpu.matmul %168, %170, %cst_179 {dimension_numbers = #tpu.dot_dimension_numbers<[1], [0], [0], [1], [0, 0, 1, 1], [], []>} : vector<1x64xf32>, vector<64x64xf32>, vector<1x64xf32> -> vector<1x64xf32>
    %172 = arith.addf %167, %171 : vector<1x64xf32>
    %c0_180 = arith.constant 0 : index
    %c0_181 = arith.constant 0 : index
    %173 = vector.load %arg8[%c0_180, %c0_181] : memref<1x64xf32, #tpu.memory_space<vmem>>, vector<1x64xf32>
    %174 = arith.addf %172, %173 : vector<1x64xf32>
    %cst_182 = arith.constant 0.000000e+00 : f32
    %175 = vector.broadcast %cst_182 : f32 to vector<1x64xf32>
    %176 = arith.maximumf %174, %175 : vector<1x64xf32>
    %c0_183 = arith.constant 0 : index
    %c0_184 = arith.constant 0 : index
    %177 = vector.load %arg9[%c0_183, %c0_184] : memref<64x1024xf32, #tpu.memory_space<vmem>>, vector<64x1024xf32>
    %cst_185 = arith.constant dense<0.000000e+00> : vector<1x1024xf32>
    %178 = tpu.matmul %176, %177, %cst_185 {dimension_numbers = #tpu.dot_dimension_numbers<[1], [0], [0], [1], [0, 0, 1, 1], [], []>} : vector<1x64xf32>, vector<64x1024xf32>, vector<1x1024xf32> -> vector<1x1024xf32>
    %c0_186 = arith.constant 0 : index
    %c0_187 = arith.constant 0 : index
    %179 = vector.load %arg10[%c0_186, %c0_187] : memref<1x1024xf32, #tpu.memory_space<vmem>>, vector<1x1024xf32>
    %180 = arith.addf %178, %179 : vector<1x1024xf32>
    %cst_188 = arith.constant 0.000000e+00 : f32
    %181 = vector.broadcast %cst_188 : f32 to vector<1x1024xf32>
    %182 = arith.maximumf %180, %181 : vector<1x1024xf32>
    %183 = vector.extract_strided_slice %182 {offsets = [0, 0], sizes = [1, 512], strides = [1, 1]} : vector<1x1024xf32> to vector<1x512xf32>
    %184 = vector.extract_strided_slice %182 {offsets = [0, 512], sizes = [1, 512], strides = [1, 1]} : vector<1x1024xf32> to vector<1x512xf32>
    %c0_189 = arith.constant 0 : index
    %c0_190 = arith.constant 0 : index
    %c0_191 = arith.constant 0 : index
    %185 = vector.load %arg11[%c0_189, %c0_190, %c0_191] : memref<6x512x51xf32, #tpu.memory_space<vmem>>, vector<1x512x51xf32>
    %186 = vector.shape_cast %185 : vector<1x512x51xf32> to vector<512x51xf32>
    %cst_192 = arith.constant dense<0.000000e+00> : vector<1x51xf32>
    %187 = tpu.matmul %183, %186, %cst_192 {dimension_numbers = #tpu.dot_dimension_numbers<[1], [0], [0], [1], [0, 0, 1, 1], [], []>} : vector<1x512xf32>, vector<512x51xf32>, vector<1x51xf32> -> vector<1x51xf32>
    %c0_193 = arith.constant 0 : index
    %c0_194 = arith.constant 0 : index
    %188 = vector.load %arg12[%c0_193, %c0_194] : memref<6x51xf32, #tpu.memory_space<vmem>>, vector<1x51xf32>
    %189 = arith.addf %187, %188 : vector<1x51xf32>
    %c0_195 = arith.constant 0 : index
    %c0_196 = arith.constant 0 : index
    %190 = vector.load %arg19[%c0_195, %c0_196] : memref<6x51xf32, #tpu.memory_space<vmem>>, vector<1x51xf32>
    tpu.vector_store %arg19[%c0_195, %c0_196], %189 {strides = array<i32>} : memref<6x51xf32, #tpu.memory_space<vmem>>, vector<1x51xf32>,
    %c0_197 = arith.constant 0 : index
    %c0_198 = arith.constant 0 : index
    %c0_199 = arith.constant 0 : index
    %191 = vector.load %arg13[%c0_197, %c0_198, %c0_199] : memref<6x512x51xf32, #tpu.memory_space<vmem>>, vector<1x512x51xf32>
    %192 = vector.shape_cast %191 : vector<1x512x51xf32> to vector<512x51xf32>
    %cst_200 = arith.constant dense<0.000000e+00> : vector<1x51xf32>
    %193 = tpu.matmul %184, %192, %cst_200 {dimension_numbers = #tpu.dot_dimension_numbers<[1], [0], [0], [1], [0, 0, 1, 1], [], []>} : vector<1x512xf32>, vector<512x51xf32>, vector<1x51xf32> -> vector<1x51xf32>
    %c0_201 = arith.constant 0 : index
    %c0_202 = arith.constant 0 : index
    %194 = vector.load %arg14[%c0_201, %c0_202] : memref<6x51xf32, #tpu.memory_space<vmem>>, vector<1x51xf32>
    %195 = arith.addf %193, %194 : vector<1x51xf32>
    %c0_203 = arith.constant 0 : index
    %c0_204 = arith.constant 0 : index
    %196 = vector.load %arg20[%c0_203, %c0_204] : memref<6x51xf32, #tpu.memory_space<vmem>>, vector<1x51xf32>
    tpu.vector_store %arg20[%c0_203, %c0_204], %195 {strides = array<i32>} : memref<6x51xf32, #tpu.memory_space<vmem>>, vector<1x51xf32>,
    %c1_205 = arith.constant 1 : index
    %c0_206 = arith.constant 0 : index
    %c0_207 = arith.constant 0 : index
    %197 = vector.load %arg11[%c1_205, %c0_206, %c0_207] : memref<6x512x51xf32, #tpu.memory_space<vmem>>, vector<1x512x51xf32>
    %198 = vector.shape_cast %197 : vector<1x512x51xf32> to vector<512x51xf32>
    %cst_208 = arith.constant dense<0.000000e+00> : vector<1x51xf32>
    %199 = tpu.matmul %183, %198, %cst_208 {dimension_numbers = #tpu.dot_dimension_numbers<[1], [0], [0], [1], [0, 0, 1, 1], [], []>} : vector<1x512xf32>, vector<512x51xf32>, vector<1x51xf32> -> vector<1x51xf32>
    %c1_209 = arith.constant 1 : index
    %c0_210 = arith.constant 0 : index
    %200 = vector.load %arg12[%c1_209, %c0_210] : memref<6x51xf32, #tpu.memory_space<vmem>>, vector<1x51xf32>
    %201 = arith.addf %199, %200 : vector<1x51xf32>
    %c1_211 = arith.constant 1 : index
    %c0_212 = arith.constant 0 : index
    %202 = vector.load %arg19[%c1_211, %c0_212] : memref<6x51xf32, #tpu.memory_space<vmem>>, vector<1x51xf32>
    tpu.vector_store %arg19[%c1_211, %c0_212], %201 {strides = array<i32>} : memref<6x51xf32, #tpu.memory_space<vmem>>, vector<1x51xf32>,
    %c1_213 = arith.constant 1 : index
    %c0_214 = arith.constant 0 : index
    %c0_215 = arith.constant 0 : index
    %203 = vector.load %arg13[%c1_213, %c0_214, %c0_215] : memref<6x512x51xf32, #tpu.memory_space<vmem>>, vector<1x512x51xf32>
    %204 = vector.shape_cast %203 : vector<1x512x51xf32> to vector<512x51xf32>
    %cst_216 = arith.constant dense<0.000000e+00> : vector<1x51xf32>
    %205 = tpu.matmul %184, %204, %cst_216 {dimension_numbers = #tpu.dot_dimension_numbers<[1], [0], [0], [1], [0, 0, 1, 1], [], []>} : vector<1x512xf32>, vector<512x51xf32>, vector<1x51xf32> -> vector<1x51xf32>
    %c1_217 = arith.constant 1 : index
    %c0_218 = arith.constant 0 : index
    %206 = vector.load %arg14[%c1_217, %c0_218] : memref<6x51xf32, #tpu.memory_space<vmem>>, vector<1x51xf32>
    %207 = arith.addf %205, %206 : vector<1x51xf32>
    %c1_219 = arith.constant 1 : index
    %c0_220 = arith.constant 0 : index
    %208 = vector.load %arg20[%c1_219, %c0_220] : memref<6x51xf32, #tpu.memory_space<vmem>>, vector<1x51xf32>
    tpu.vector_store %arg20[%c1_219, %c0_220], %207 {strides = array<i32>} : memref<6x51xf32, #tpu.memory_space<vmem>>, vector<1x51xf32>,
    %c2_221 = arith.constant 2 : index
    %c0_222 = arith.constant 0 : index
    %c0_223 = arith.constant 0 : index
    %209 = vector.load %arg11[%c2_221, %c0_222, %c0_223] : memref<6x512x51xf32, #tpu.memory_space<vmem>>, vector<1x512x51xf32>
    %210 = vector.shape_cast %209 : vector<1x512x51xf32> to vector<512x51xf32>
    %cst_224 = arith.constant dense<0.000000e+00> : vector<1x51xf32>
    %211 = tpu.matmul %183, %210, %cst_224 {dimension_numbers = #tpu.dot_dimension_numbers<[1], [0], [0], [1], [0, 0, 1, 1], [], []>} : vector<1x512xf32>, vector<512x51xf32>, vector<1x51xf32> -> vector<1x51xf32>
    %c2_225 = arith.constant 2 : index
    %c0_226 = arith.constant 0 : index
    %212 = vector.load %arg12[%c2_225, %c0_226] : memref<6x51xf32, #tpu.memory_space<vmem>>, vector<1x51xf32>
    %213 = arith.addf %211, %212 : vector<1x51xf32>
    %c2_227 = arith.constant 2 : index
    %c0_228 = arith.constant 0 : index
    %214 = vector.load %arg19[%c2_227, %c0_228] : memref<6x51xf32, #tpu.memory_space<vmem>>, vector<1x51xf32>
    tpu.vector_store %arg19[%c2_227, %c0_228], %213 {strides = array<i32>} : memref<6x51xf32, #tpu.memory_space<vmem>>, vector<1x51xf32>,
    %c2_229 = arith.constant 2 : index
    %c0_230 = arith.constant 0 : index
    %c0_231 = arith.constant 0 : index
    %215 = vector.load %arg13[%c2_229, %c0_230, %c0_231] : memref<6x512x51xf32, #tpu.memory_space<vmem>>, vector<1x512x51xf32>
    %216 = vector.shape_cast %215 : vector<1x512x51xf32> to vector<512x51xf32>
    %cst_232 = arith.constant dense<0.000000e+00> : vector<1x51xf32>
    %217 = tpu.matmul %184, %216, %cst_232 {dimension_numbers = #tpu.dot_dimension_numbers<[1], [0], [0], [1], [0, 0, 1, 1], [], []>} : vector<1x512xf32>, vector<512x51xf32>, vector<1x51xf32> -> vector<1x51xf32>
    %c2_233 = arith.constant 2 : index
    %c0_234 = arith.constant 0 : index
    %218 = vector.load %arg14[%c2_233, %c0_234] : memref<6x51xf32, #tpu.memory_space<vmem>>, vector<1x51xf32>
    %219 = arith.addf %217, %218 : vector<1x51xf32>
    %c2_235 = arith.constant 2 : index
    %c0_236 = arith.constant 0 : index
    %220 = vector.load %arg20[%c2_235, %c0_236] : memref<6x51xf32, #tpu.memory_space<vmem>>, vector<1x51xf32>
    tpu.vector_store %arg20[%c2_235, %c0_236], %219 {strides = array<i32>} : memref<6x51xf32, #tpu.memory_space<vmem>>, vector<1x51xf32>,
    %c3_237 = arith.constant 3 : index
    %c0_238 = arith.constant 0 : index
    %c0_239 = arith.constant 0 : index
    %221 = vector.load %arg11[%c3_237, %c0_238, %c0_239] : memref<6x512x51xf32, #tpu.memory_space<vmem>>, vector<1x512x51xf32>
    %222 = vector.shape_cast %221 : vector<1x512x51xf32> to vector<512x51xf32>
    %cst_240 = arith.constant dense<0.000000e+00> : vector<1x51xf32>
    %223 = tpu.matmul %183, %222, %cst_240 {dimension_numbers = #tpu.dot_dimension_numbers<[1], [0], [0], [1], [0, 0, 1, 1], [], []>} : vector<1x512xf32>, vector<512x51xf32>, vector<1x51xf32> -> vector<1x51xf32>
    %c3_241 = arith.constant 3 : index
    %c0_242 = arith.constant 0 : index
    %224 = vector.load %arg12[%c3_241, %c0_242] : memref<6x51xf32, #tpu.memory_space<vmem>>, vector<1x51xf32>
    %225 = arith.addf %223, %224 : vector<1x51xf32>
    %c3_243 = arith.constant 3 : index
    %c0_244 = arith.constant 0 : index
    %226 = vector.load %arg19[%c3_243, %c0_244] : memref<6x51xf32, #tpu.memory_space<vmem>>, vector<1x51xf32>
    tpu.vector_store %arg19[%c3_243, %c0_244], %225 {strides = array<i32>} : memref<6x51xf32, #tpu.memory_space<vmem>>, vector<1x51xf32>,
    %c3_245 = arith.constant 3 : index
    %c0_246 = arith.constant 0 : index
    %c0_247 = arith.constant 0 : index
    %227 = vector.load %arg13[%c3_245, %c0_246, %c0_247] : memref<6x512x51xf32, #tpu.memory_space<vmem>>, vector<1x512x51xf32>
    %228 = vector.shape_cast %227 : vector<1x512x51xf32> to vector<512x51xf32>
    %cst_248 = arith.constant dense<0.000000e+00> : vector<1x51xf32>
    %229 = tpu.matmul %184, %228, %cst_248 {dimension_numbers = #tpu.dot_dimension_numbers<[1], [0], [0], [1], [0, 0, 1, 1], [], []>} : vector<1x512xf32>, vector<512x51xf32>, vector<1x51xf32> -> vector<1x51xf32>
    %c3_249 = arith.constant 3 : index
    %c0_250 = arith.constant 0 : index
    %230 = vector.load %arg14[%c3_249, %c0_250] : memref<6x51xf32, #tpu.memory_space<vmem>>, vector<1x51xf32>
    %231 = arith.addf %229, %230 : vector<1x51xf32>
    %c3_251 = arith.constant 3 : index
    %c0_252 = arith.constant 0 : index
    %232 = vector.load %arg20[%c3_251, %c0_252] : memref<6x51xf32, #tpu.memory_space<vmem>>, vector<1x51xf32>
    tpu.vector_store %arg20[%c3_251, %c0_252], %231 {strides = array<i32>} : memref<6x51xf32, #tpu.memory_space<vmem>>, vector<1x51xf32>,
    %c4_253 = arith.constant 4 : index
    %c0_254 = arith.constant 0 : index
    %c0_255 = arith.constant 0 : index
    %233 = vector.load %arg11[%c4_253, %c0_254, %c0_255] : memref<6x512x51xf32, #tpu.memory_space<vmem>>, vector<1x512x51xf32>
    %234 = vector.shape_cast %233 : vector<1x512x51xf32> to vector<512x51xf32>
    %cst_256 = arith.constant dense<0.000000e+00> : vector<1x51xf32>
    %235 = tpu.matmul %183, %234, %cst_256 {dimension_numbers = #tpu.dot_dimension_numbers<[1], [0], [0], [1], [0, 0, 1, 1], [], []>} : vector<1x512xf32>, vector<512x51xf32>, vector<1x51xf32> -> vector<1x51xf32>
    %c4_257 = arith.constant 4 : index
    %c0_258 = arith.constant 0 : index
    %236 = vector.load %arg12[%c4_257, %c0_258] : memref<6x51xf32, #tpu.memory_space<vmem>>, vector<1x51xf32>
    %237 = arith.addf %235, %236 : vector<1x51xf32>
    %c4_259 = arith.constant 4 : index
    %c0_260 = arith.constant 0 : index
    %238 = vector.load %arg19[%c4_259, %c0_260] : memref<6x51xf32, #tpu.memory_space<vmem>>, vector<1x51xf32>
    tpu.vector_store %arg19[%c4_259, %c0_260], %237 {strides = array<i32>} : memref<6x51xf32, #tpu.memory_space<vmem>>, vector<1x51xf32>,
    %c4_261 = arith.constant 4 : index
    %c0_262 = arith.constant 0 : index
    %c0_263 = arith.constant 0 : index
    %239 = vector.load %arg13[%c4_261, %c0_262, %c0_263] : memref<6x512x51xf32, #tpu.memory_space<vmem>>, vector<1x512x51xf32>
    %240 = vector.shape_cast %239 : vector<1x512x51xf32> to vector<512x51xf32>
    %cst_264 = arith.constant dense<0.000000e+00> : vector<1x51xf32>
    %241 = tpu.matmul %184, %240, %cst_264 {dimension_numbers = #tpu.dot_dimension_numbers<[1], [0], [0], [1], [0, 0, 1, 1], [], []>} : vector<1x512xf32>, vector<512x51xf32>, vector<1x51xf32> -> vector<1x51xf32>
    %c4_265 = arith.constant 4 : index
    %c0_266 = arith.constant 0 : index
    %242 = vector.load %arg14[%c4_265, %c0_266] : memref<6x51xf32, #tpu.memory_space<vmem>>, vector<1x51xf32>
    %243 = arith.addf %241, %242 : vector<1x51xf32>
    %c4_267 = arith.constant 4 : index
    %c0_268 = arith.constant 0 : index
    %244 = vector.load %arg20[%c4_267, %c0_268] : memref<6x51xf32, #tpu.memory_space<vmem>>, vector<1x51xf32>
    tpu.vector_store %arg20[%c4_267, %c0_268], %243 {strides = array<i32>} : memref<6x51xf32, #tpu.memory_space<vmem>>, vector<1x51xf32>,
    %c5_269 = arith.constant 5 : index
    %c0_270 = arith.constant 0 : index
    %c0_271 = arith.constant 0 : index
    %245 = vector.load %arg11[%c5_269, %c0_270, %c0_271] : memref<6x512x51xf32, #tpu.memory_space<vmem>>, vector<1x512x51xf32>
    %246 = vector.shape_cast %245 : vector<1x512x51xf32> to vector<512x51xf32>
    %cst_272 = arith.constant dense<0.000000e+00> : vector<1x51xf32>
    %247 = tpu.matmul %183, %246, %cst_272 {dimension_numbers = #tpu.dot_dimension_numbers<[1], [0], [0], [1], [0, 0, 1, 1], [], []>} : vector<1x512xf32>, vector<512x51xf32>, vector<1x51xf32> -> vector<1x51xf32>
    %c5_273 = arith.constant 5 : index
    %c0_274 = arith.constant 0 : index
    %248 = vector.load %arg12[%c5_273, %c0_274] : memref<6x51xf32, #tpu.memory_space<vmem>>, vector<1x51xf32>
    %249 = arith.addf %247, %248 : vector<1x51xf32>
    %c5_275 = arith.constant 5 : index
    %c0_276 = arith.constant 0 : index
    %250 = vector.load %arg19[%c5_275, %c0_276] : memref<6x51xf32, #tpu.memory_space<vmem>>, vector<1x51xf32>
    tpu.vector_store %arg19[%c5_275, %c0_276], %249 {strides = array<i32>} : memref<6x51xf32, #tpu.memory_space<vmem>>, vector<1x51xf32>,
    %c5_277 = arith.constant 5 : index
    %c0_278 = arith.constant 0 : index
    %c0_279 = arith.constant 0 : index
    %251 = vector.load %arg13[%c5_277, %c0_278, %c0_279] : memref<6x512x51xf32, #tpu.memory_space<vmem>>, vector<1x512x51xf32>
    %252 = vector.shape_cast %251 : vector<1x512x51xf32> to vector<512x51xf32>
    %cst_280 = arith.constant dense<0.000000e+00> : vector<1x51xf32>
    %253 = tpu.matmul %184, %252, %cst_280 {dimension_numbers = #tpu.dot_dimension_numbers<[1], [0], [0], [1], [0, 0, 1, 1], [], []>} : vector<1x512xf32>, vector<512x51xf32>, vector<1x51xf32> -> vector<1x51xf32>
    %c5_281 = arith.constant 5 : index
    %c0_282 = arith.constant 0 : index
    %254 = vector.load %arg14[%c5_281, %c0_282] : memref<6x51xf32, #tpu.memory_space<vmem>>, vector<1x51xf32>
    %255 = arith.addf %253, %254 : vector<1x51xf32>
    %c5_283 = arith.constant 5 : index
    %c0_284 = arith.constant 0 : index
    %256 = vector.load %arg20[%c5_283, %c0_284] : memref<6x51xf32, #tpu.memory_space<vmem>>, vector<1x51xf32>
    tpu.vector_store %arg20[%c5_283, %c0_284], %255 {strides = array<i32>} : memref<6x51xf32, #tpu.memory_space<vmem>>, vector<1x51xf32>,
    %c0_285 = arith.constant 0 : index
    %c0_286 = arith.constant 0 : index
    %257 = vector.load %arg19[%c0_285, %c0_286] : memref<6x51xf32, #tpu.memory_space<vmem>>, vector<6x51xf32>
    %c0_287 = arith.constant 0 : index
    %c0_288 = arith.constant 0 : index
    %258 = vector.load %arg20[%c0_287, %c0_288] : memref<6x51xf32, #tpu.memory_space<vmem>>, vector<6x51xf32>
    %cst_289 = arith.constant dense<0.000000e+00> : vector<51xf32>
    %259 = vector.multi_reduction <add>, %257, %cst_289 [0] : vector<6x51xf32> to vector<51xf32>
    %260 = vector.shape_cast %259 : vector<51xf32> to vector<1x51xf32>
    %cst_290 = arith.constant 6.000000e+00 : f32
    %261 = vector.broadcast %cst_290 : f32 to vector<1x51xf32>
    %262 = arith.divf %260, %261 : vector<1x51xf32>
    %263 = vector.broadcast %262 : vector<1x51xf32> to vector<6x51xf32>
    %264 = arith.subf %257, %263 : vector<6x51xf32>
    %c0_291 = arith.constant 0 : index
    %c0_292 = arith.constant 0 : index
    %265 = vector.load %arg20[%c0_291, %c0_292] : memref<6x51xf32, #tpu.memory_space<vmem>>, vector<1x51xf32>
    %266 = vector.broadcast %265 : vector<1x51xf32> to vector<6x51xf32>
    %267 = arith.addf %266, %264 : vector<6x51xf32>
    %c0_293 = arith.constant 0 : index
    %c0_294 = arith.constant 0 : index
    %c0_295 = arith.constant 0 : index
    %268 = vector.load %arg16[%c0_293, %c0_294, %c0_295] : memref<6x6x51xf32, #tpu.memory_space<vmem>>, vector<1x6x51xf32>
    %269 = vector.shape_cast %268 : vector<1x6x51xf32> to vector<6x51xf32>
    %270 = vector.shape_cast %267 : vector<6x51xf32> to vector<1x6x51xf32>
    tpu.vector_store %arg16[%c0_293, %c0_294, %c0_295], %270 {strides = array<i32>} : memref<6x6x51xf32, #tpu.memory_space<vmem>>, vector<1x6x51xf32>,
    %c1_296 = arith.constant 1 : index
    %c0_297 = arith.constant 0 : index
    %271 = vector.load %arg20[%c1_296, %c0_297] : memref<6x51xf32, #tpu.memory_space<vmem>>, vector<1x51xf32>
    %272 = vector.broadcast %271 : vector<1x51xf32> to vector<6x51xf32>
    %273 = arith.addf %272, %264 : vector<6x51xf32>
    %c1_298 = arith.constant 1 : index
    %c0_299 = arith.constant 0 : index
    %c0_300 = arith.constant 0 : index
    %274 = vector.load %arg16[%c1_298, %c0_299, %c0_300] : memref<6x6x51xf32, #tpu.memory_space<vmem>>, vector<1x6x51xf32>
    %275 = vector.shape_cast %274 : vector<1x6x51xf32> to vector<6x51xf32>
    %276 = vector.shape_cast %273 : vector<6x51xf32> to vector<1x6x51xf32>
    tpu.vector_store %arg16[%c1_298, %c0_299, %c0_300], %276 {strides = array<i32>} : memref<6x6x51xf32, #tpu.memory_space<vmem>>, vector<1x6x51xf32>,
    %c2_301 = arith.constant 2 : index
    %c0_302 = arith.constant 0 : index
    %277 = vector.load %arg20[%c2_301, %c0_302] : memref<6x51xf32, #tpu.memory_space<vmem>>, vector<1x51xf32>
    %278 = vector.broadcast %277 : vector<1x51xf32> to vector<6x51xf32>
    %279 = arith.addf %278, %264 : vector<6x51xf32>
    %c2_303 = arith.constant 2 : index
    %c0_304 = arith.constant 0 : index
    %c0_305 = arith.constant 0 : index
    %280 = vector.load %arg16[%c2_303, %c0_304, %c0_305] : memref<6x6x51xf32, #tpu.memory_space<vmem>>, vector<1x6x51xf32>
    %281 = vector.shape_cast %280 : vector<1x6x51xf32> to vector<6x51xf32>
    %282 = vector.shape_cast %279 : vector<6x51xf32> to vector<1x6x51xf32>
    tpu.vector_store %arg16[%c2_303, %c0_304, %c0_305], %282 {strides = array<i32>} : memref<6x6x51xf32, #tpu.memory_space<vmem>>, vector<1x6x51xf32>,
    %c3_306 = arith.constant 3 : index
    %c0_307 = arith.constant 0 : index
    %283 = vector.load %arg20[%c3_306, %c0_307] : memref<6x51xf32, #tpu.memory_space<vmem>>, vector<1x51xf32>
    %284 = vector.broadcast %283 : vector<1x51xf32> to vector<6x51xf32>
    %285 = arith.addf %284, %264 : vector<6x51xf32>
    %c3_308 = arith.constant 3 : index
    %c0_309 = arith.constant 0 : index
    %c0_310 = arith.constant 0 : index
    %286 = vector.load %arg16[%c3_308, %c0_309, %c0_310] : memref<6x6x51xf32, #tpu.memory_space<vmem>>, vector<1x6x51xf32>
    %287 = vector.shape_cast %286 : vector<1x6x51xf32> to vector<6x51xf32>
    %288 = vector.shape_cast %285 : vector<6x51xf32> to vector<1x6x51xf32>
    tpu.vector_store %arg16[%c3_308, %c0_309, %c0_310], %288 {strides = array<i32>} : memref<6x6x51xf32, #tpu.memory_space<vmem>>, vector<1x6x51xf32>,
    %c4_311 = arith.constant 4 : index
    %c0_312 = arith.constant 0 : index
    %289 = vector.load %arg20[%c4_311, %c0_312] : memref<6x51xf32, #tpu.memory_space<vmem>>, vector<1x51xf32>
    %290 = vector.broadcast %289 : vector<1x51xf32> to vector<6x51xf32>
    %291 = arith.addf %290, %264 : vector<6x51xf32>
    %c4_313 = arith.constant 4 : index
    %c0_314 = arith.constant 0 : index
    %c0_315 = arith.constant 0 : index
    %292 = vector.load %arg16[%c4_313, %c0_314, %c0_315] : memref<6x6x51xf32, #tpu.memory_space<vmem>>, vector<1x6x51xf32>
    %293 = vector.shape_cast %292 : vector<1x6x51xf32> to vector<6x51xf32>
    %294 = vector.shape_cast %291 : vector<6x51xf32> to vector<1x6x51xf32>
    tpu.vector_store %arg16[%c4_313, %c0_314, %c0_315], %294 {strides = array<i32>} : memref<6x6x51xf32, #tpu.memory_space<vmem>>, vector<1x6x51xf32>,
    %c5_316 = arith.constant 5 : index
    %c0_317 = arith.constant 0 : index
    %295 = vector.load %arg20[%c5_316, %c0_317] : memref<6x51xf32, #tpu.memory_space<vmem>>, vector<1x51xf32>
    %296 = vector.broadcast %295 : vector<1x51xf32> to vector<6x51xf32>
    %297 = arith.addf %296, %264 : vector<6x51xf32>
    %c5_318 = arith.constant 5 : index
    %c0_319 = arith.constant 0 : index
    %c0_320 = arith.constant 0 : index
    %298 = vector.load %arg16[%c5_318, %c0_319, %c0_320] : memref<6x6x51xf32, #tpu.memory_space<vmem>>, vector<1x6x51xf32>
    %299 = vector.shape_cast %298 : vector<1x6x51xf32> to vector<6x51xf32>
    %300 = vector.shape_cast %297 : vector<6x51xf32> to vector<1x6x51xf32>
    tpu.vector_store %arg16[%c5_318, %c0_319, %c0_320], %300 {strides = array<i32>} : memref<6x6x51xf32, #tpu.memory_space<vmem>>, vector<1x6x51xf32>,
    %cst_321 = arith.constant dense<0xFF800000> : vector<6xf32>
    %301 = vector.multi_reduction <maximumf>, %258, %cst_321 [1] : vector<6x51xf32> to vector<6xf32>
    %302 = vector.shape_cast %301 : vector<6xf32> to vector<6x1xf32>
    %303 = vector.broadcast %302 : vector<6x1xf32> to vector<6x51xf32>
    %304 = arith.subf %258, %303 : vector<6x51xf32>
    %305 = math.exp %304 : vector<6x51xf32>
    %cst_322 = arith.constant dense<0xFF800000> : vector<6xf32>
    %306 = vector.multi_reduction <maximumf>, %264, %cst_322 [1] : vector<6x51xf32> to vector<6xf32>
    %307 = vector.shape_cast %306 : vector<6xf32> to vector<6x1xf32>
    %308 = vector.broadcast %307 : vector<6x1xf32> to vector<6x51xf32>
    %309 = arith.subf %264, %308 : vector<6x51xf32>
    %310 = math.exp %309 : vector<6x51xf32>
    %cst_323 = arith.constant dense<0.000000e+00> : vector<6x6xf32>
    %311 = tpu.matmul %305, %310, %cst_323 {dimension_numbers = #tpu.dot_dimension_numbers<[1], [1], [0], [0], [0, 0, 1, 0], [], []>} : vector<6x51xf32>, vector<6x51xf32>, vector<6x6xf32> -> vector<6x6xf32>
    %c0_324 = arith.constant 0 : index
    %c0_325 = arith.constant 0 : index
    %312 = vector.load %arg15[%c0_324, %c0_325] : memref<1x51xf32, #tpu.memory_space<vmem>>, vector<1x51xf32>
    %313 = vector.broadcast %312 : vector<1x51xf32> to vector<6x51xf32>
    %314 = arith.mulf %305, %313 : vector<6x51xf32>
    %cst_326 = arith.constant dense<0.000000e+00> : vector<6x6xf32>
    %315 = tpu.matmul %314, %310, %cst_326 {dimension_numbers = #tpu.dot_dimension_numbers<[1], [1], [0], [0], [0, 0, 1, 0], [], []>} : vector<6x51xf32>, vector<6x51xf32>, vector<6x6xf32> -> vector<6x6xf32>
    %316 = tpu.reciprocal %311 {approx = true} : vector<6x6xf32> -> vector<6x6xf32>
    %317 = arith.mulf %315, %316 : vector<6x6xf32>
    %c0_327 = arith.constant 0 : index
    %c0_328 = arith.constant 0 : index
    %318 = vector.load %arg17[%c0_327, %c0_328] : memref<6x6xf32, #tpu.memory_space<vmem>>, vector<6x6xf32>
    tpu.vector_store %arg17[%c0_327, %c0_328], %317 {strides = array<i32>} : memref<6x6xf32, #tpu.memory_space<vmem>>, vector<6x6xf32>,
    return
  }
  func.func @transform_0(%arg0: i32) -> (i32, i32) {
    %c0_i32 = arith.constant 0 : i32
    %c0_i32_0 = arith.constant 0 : i32
    %c0_i32_1 = arith.constant 0 : i32
    return %c0_i32, %c0_i32_0 : i32, i32
  }
  func.func @transform_1(%arg0: i32) -> (i32, i32) {
    %c0_i32 = arith.constant 0 : i32
    %c0_i32_0 = arith.constant 0 : i32
    %c0_i32_1 = arith.constant 0 : i32
    return %c0_i32, %c0_i32_0 : i32, i32
  }
  func.func @transform_2(%arg0: i32) -> (i32, i32) {
    %c0_i32 = arith.constant 0 : i32
    %c0_i32_0 = arith.constant 0 : i32
    %c0_i32_1 = arith.constant 0 : i32
    return %c0_i32, %c0_i32_0 : i32, i32
  }
  func.func @transform_3(%arg0: i32) -> (i32, i32, i32) {
    %c0_i32 = arith.constant 0 : i32
    %c0_i32_0 = arith.constant 0 : i32
    %c0_i32_1 = arith.constant 0 : i32
    %c0_i32_2 = arith.constant 0 : i32
    return %c0_i32, %c0_i32_0, %c0_i32_1 : i32, i32, i32
  }
  func.func @transform_4(%arg0: i32) -> (i32, i32, i32) {
    %c0_i32 = arith.constant 0 : i32
    %c0_i32_0 = arith.constant 0 : i32
    %c0_i32_1 = arith.constant 0 : i32
    %c0_i32_2 = arith.constant 0 : i32
    return %c0_i32, %c0_i32_0, %c0_i32_1 : i32, i32, i32
  }
  func.func @transform_5(%arg0: i32) -> (i32, i32) {
    %c0_i32 = arith.constant 0 : i32
    %c0_i32_0 = arith.constant 0 : i32
    %c0_i32_1 = arith.constant 0 : i32
    return %c0_i32, %c0_i32_0 : i32, i32
  }
  func.func @transform_6(%arg0: i32) -> (i32, i32, i32) {
    %c0_i32 = arith.constant 0 : i32
    %c0_i32_0 = arith.constant 0 : i32
    %c0_i32_1 = arith.constant 0 : i32
    %c0_i32_2 = arith.constant 0 : i32
    return %c0_i32, %c0_i32_0, %c0_i32_1 : i32, i32, i32
  }
  func.func @transform_7(%arg0: i32) -> (i32, i32) {
    %c0_i32 = arith.constant 0 : i32
    %c0_i32_0 = arith.constant 0 : i32
    %c0_i32_1 = arith.constant 0 : i32
    return %c0_i32, %c0_i32_0 : i32, i32
  }
  func.func @transform_8(%arg0: i32) -> (i32, i32) {
    %c0_i32 = arith.constant 0 : i32
    %c0_i32_0 = arith.constant 0 : i32
    %c0_i32_1 = arith.constant 0 : i32
    return %c0_i32, %c0_i32_0 : i32, i32
  }
  func.func @transform_9(%arg0: i32) -> (i32, i32) {
    %c0_i32 = arith.constant 0 : i32
    %c0_i32_0 = arith.constant 0 : i32
    %c0_i32_1 = arith.constant 0 : i32
    return %c0_i32, %c0_i32_0 : i32, i32
  }
  func.func @transform_10(%arg0: i32) -> (i32, i32, i32) {
    %c0_i32 = arith.constant 0 : i32
    %c0_i32_0 = arith.constant 0 : i32
    %c0_i32_1 = arith.constant 0 : i32
    %c0_i32_2 = arith.constant 0 : i32
    return %c0_i32, %c0_i32_0, %c0_i32_1 : i32, i32, i32
  }
  func.func @transform_11(%arg0: i32) -> (i32, i32) {
    %c0_i32 = arith.constant 0 : i32
    %c0_i32_0 = arith.constant 0 : i32
    %c0_i32_1 = arith.constant 0 : i32
    return %c0_i32, %c0_i32_0 : i32, i32
  }
  func.func @transform_12(%arg0: i32) -> (i32, i32, i32) {
    %c0_i32 = arith.constant 0 : i32
    %c0_i32_0 = arith.constant 0 : i32
    %c0_i32_1 = arith.constant 0 : i32
    %c0_i32_2 = arith.constant 0 : i32
    return %c0_i32, %c0_i32_0, %c0_i32_1 : i32, i32, i32
  }
  func.func @transform_13(%arg0: i32) -> (i32, i32) {
    %c0_i32 = arith.constant 0 : i32
    %c0_i32_0 = arith.constant 0 : i32
    %c0_i32_1 = arith.constant 0 : i32
    return %c0_i32, %c0_i32_0 : i32, i32
  }
  func.func @transform_14(%arg0: i32) -> (i32, i32) {
    %c0_i32 = arith.constant 0 : i32
    %c0_i32_0 = arith.constant 0 : i32
    %c0_i32_1 = arith.constant 0 : i32
    return %c0_i32, %c0_i32_0 : i32, i32
  }
  func.func @transform_15(%arg0: i32) -> (i32, i32, i32) {
    %c0_i32 = arith.constant 0 : i32
    %c0_i32_0 = arith.constant 0 : i32
    %c0_i32_1 = arith.constant 0 : i32
    %c0_i32_2 = arith.constant 0 : i32
    return %c0_i32, %c0_i32_0, %c0_i32_1 : i32, i32, i32
  }
  func.func @transform_16(%arg0: i32) -> (i32, i32) {
    %c0_i32 = arith.constant 0 : i32
    %c0_i32_0 = arith.constant 0 : i32
    %c0_i32_1 = arith.constant 0 : i32
    return %c0_i32, %c0_i32_0 : i32, i32
  }
}

</mosaic_0001>

<llo_original>
// kernel: rainbow_forward.1
$region0: #{rainbow_forward.1}
  #allocation0 [shape = 'u32[]', space=smem, size = 0x4, offset = 0x4, fixed_abs, tag = 'smem constant byte address 0x4 - core index']
  #allocation1 [shape = 'u32[72,128]{1,0:T(1,128)}', space=vmem, size = 0x9000, scoped, tag = 'internal scratch']
  #allocation2 [shape = 'f32[9,64]{1,0:T(8,128)}', space=vmem, size = 0x2000, scoped, tag = 'scratch operand']
  #allocation3 [shape = 'f32[6,51]{1,0:T(8,128)}', space=vmem, size = 0x1000, scoped, tag = 'scratch operand']
  #allocation4 [shape = 'f32[6,51]{1,0:T(8,128)}', space=vmem, size = 0x1000, scoped, tag = 'scratch operand']
  %s0 = inlined_call_operand.vmem [shape: f32[64,256], index: 0, kind: input, shape index: {}]
  %s1 = inlined_call_operand.vmem [shape: f32[256,32], index: 1, kind: input, shape index: {}]
  %s2 = inlined_call_operand.vmem [shape: f32[1,32], index: 2, kind: input, shape index: {}]
  %s3 = inlined_call_operand.vmem [shape: f32[16,9,64], index: 3, kind: input, shape index: {}]
  %s4 = inlined_call_operand.vmem [shape: f32[16,32,64], index: 4, kind: input, shape index: {}]
  %s5 = inlined_call_operand.vmem [shape: f32[1,64], index: 5, kind: input, shape index: {}]
  %s6 = inlined_call_operand.vmem [shape: f32[9,64,64], index: 6, kind: input, shape index: {}]
  %s7 = inlined_call_operand.vmem [shape: f32[1,64], index: 7, kind: input, shape index: {}]
  %s8 = inlined_call_operand.vmem [shape: f32[64,1024], index: 8, kind: input, shape index: {}]
  %s9 = inlined_call_operand.vmem [shape: f32[1,1024], index: 9, kind: input, shape index: {}]
  %s10 = inlined_call_operand.vmem [shape: f32[6,512,51], index: 10, kind: input, shape index: {}]
  %s11 = inlined_call_operand.vmem [shape: f32[6,51], index: 11, kind: input, shape index: {}]
  %s12 = inlined_call_operand.vmem [shape: f32[6,512,51], index: 12, kind: input, shape index: {}]
  %s13 = inlined_call_operand.vmem [shape: f32[6,51], index: 13, kind: input, shape index: {}]
  %s14 = inlined_call_operand.vmem [shape: f32[1,51], index: 14, kind: input, shape index: {}]
  %s15 = inlined_call_operand.hbm [shape: f32[6,6,51], index: 15, kind: output, shape index: {0}]
  %s16 = inlined_call_operand.hbm [shape: f32[6,6], index: 16, kind: output, shape index: {1}]
  %17 = xla_tuple %s15, %s16
  %s18 = sld [smem:[#allocation0]]
  $region78: #{rainbow_forward.1} parent=0
    _
  %s20 = ssub.s32 1, %s18
  %s21 = scalar_select 0, %s20, %s18
  $region1: #{rainbow_forward.1} parent=0
    #allocation5 [shape = 'u8[24576]{0}', space=vmem, size = 0x6000, scoped, tag = 'output window, operand 0, single buffered']
    #allocation6 [shape = 's32[1]{0}', space=sflag, size = 0x4, scoped, tag = 'scoped memory for rainbow_forward.1']
    #allocation7 [shape = 'u8[4096]{0}', space=vmem, size = 0x1000, scoped, tag = 'output window, operand 1, single buffered']
    #allocation8 [shape = 's32[1]{0}', space=sflag, size = 0x4, scoped, tag = 'scoped memory for rainbow_forward.1']
    %22 = vsyncpa [#allocation6], 0
    %23 = vsyncpa [#allocation8], 0
    // Predicated region
    $region2: #{rainbow_forward.1} parent=1 // pred_check
      _
    $region3: #{rainbow_forward.1} parent=1 // pred_check_branch
      %25 = sbr.rel (0) target = $region5
    $region4: #{rainbow_forward.1} parent=1 // pred_region
      _
    $region5: #{rainbow_forward.1} parent=1 // pred_fallthru
      _
    // Predicated region
    $region6: #{rainbow_forward.1} parent=1 // pred_check
      _
    $region7: #{rainbow_forward.1} parent=1 // pred_check_branch
      %27 = sbr.rel (0) target = $region9
    $region8: #{rainbow_forward.1} parent=1 // pred_region
      _
    $region9: #{rainbow_forward.1} parent=1 // pred_fallthru
      _
    // Predicated region
    $region10: #{rainbow_forward.1} parent=1 // pred_check
      _
    $region11: #{rainbow_forward.1} parent=1 // pred_check_branch
      %29 = sbr.rel (0) target = $region13
    $region12: #{rainbow_forward.1} parent=1 // pred_region
      _
    $region13: #{rainbow_forward.1} parent=1 // pred_fallthru
      _
    // Predicated region
    $region14: #{rainbow_forward.1} parent=1 // pred_check
      _
    $region15: #{rainbow_forward.1} parent=1 // pred_check_branch
      %31 = sbr.rel (0) target = $region17
    $region16: #{rainbow_forward.1} parent=1 // pred_region
      _
    $region17: #{rainbow_forward.1} parent=1 // pred_fallthru
      _
    // Predicated region
    $region18: #{rainbow_forward.1} parent=1 // pred_check
      _
    $region19: #{rainbow_forward.1} parent=1 // pred_check_branch
      %33 = sbr.rel (0) target = $region21
    $region20: #{rainbow_forward.1} parent=1 // pred_region
      _
    $region21: #{rainbow_forward.1} parent=1 // pred_fallthru
      _
    // Predicated region
    $region22: #{rainbow_forward.1} parent=1 // pred_check
      _
    $region23: #{rainbow_forward.1} parent=1 // pred_check_branch
      %35 = sbr.rel (0) target = $region25
    $region24: #{rainbow_forward.1} parent=1 // pred_region
      _
    $region25: #{rainbow_forward.1} parent=1 // pred_fallthru
      _
    // Predicated region
    $region26: #{rainbow_forward.1} parent=1 // pred_check
      _
    $region27: #{rainbow_forward.1} parent=1 // pred_check_branch
      %37 = sbr.rel (0) target = $region29
    $region28: #{rainbow_forward.1} parent=1 // pred_region
      _
    $region29: #{rainbow_forward.1} parent=1 // pred_fallthru
      _
    // Predicated region
    $region30: #{rainbow_forward.1} parent=1 // pred_check
      _
    $region31: #{rainbow_forward.1} parent=1 // pred_check_branch
      %39 = sbr.rel (0) target = $region33
    $region32: #{rainbow_forward.1} parent=1 // pred_region
      _
    $region33: #{rainbow_forward.1} parent=1 // pred_fallthru
      _
    // Predicated region
    $region34: #{rainbow_forward.1} parent=1 // pred_check
      _
    $region35: #{rainbow_forward.1} parent=1 // pred_check_branch
      %41 = sbr.rel (0) target = $region37
    $region36: #{rainbow_forward.1} parent=1 // pred_region
      _
    $region37: #{rainbow_forward.1} parent=1 // pred_fallthru
      _
    // Predicated region
    $region38: #{rainbow_forward.1} parent=1 // pred_check
      _
    $region39: #{rainbow_forward.1} parent=1 // pred_check_branch
      %43 = sbr.rel (0) target = $region41
    $region40: #{rainbow_forward.1} parent=1 // pred_region
      _
    $region41: #{rainbow_forward.1} parent=1 // pred_fallthru
      _
    // Predicated region
    $region42: #{rainbow_forward.1} parent=1 // pred_check
      _
    $region43: #{rainbow_forward.1} parent=1 // pred_check_branch
      %45 = sbr.rel (0) target = $region45
    $region44: #{rainbow_forward.1} parent=1 // pred_region
      _
    $region45: #{rainbow_forward.1} parent=1 // pred_fallthru
      _
    // Predicated region
    $region46: #{rainbow_forward.1} parent=1 // pred_check
      _
    $region47: #{rainbow_forward.1} parent=1 // pred_check_branch
      %47 = sbr.rel (0) target = $region49
    $region48: #{rainbow_forward.1} parent=1 // pred_region
      _
    $region49: #{rainbow_forward.1} parent=1 // pred_fallthru
      _
    // Predicated region
    $region50: #{rainbow_forward.1} parent=1 // pred_check
      _
    $region51: #{rainbow_forward.1} parent=1 // pred_check_branch
      %49 = sbr.rel (0) target = $region53
    $region52: #{rainbow_forward.1} parent=1 // pred_region
      _
    $region53: #{rainbow_forward.1} parent=1 // pred_fallthru
      _
    // Predicated region
    $region54: #{rainbow_forward.1} parent=1 // pred_check
      _
    $region55: #{rainbow_forward.1} parent=1 // pred_check_branch
      %51 = sbr.rel (0) target = $region57
    $region56: #{rainbow_forward.1} parent=1 // pred_region
      _
    $region57: #{rainbow_forward.1} parent=1 // pred_fallthru
      _
    // Predicated region
    $region58: #{rainbow_forward.1} parent=1 // pred_check
      _
    $region59: #{rainbow_forward.1} parent=1 // pred_check_branch
      %53 = sbr.rel (0) target = $region61
    $region60: #{rainbow_forward.1} parent=1 // pred_region
      _
    $region61: #{rainbow_forward.1} parent=1 // pred_fallthru
      _
    %v54 = vld [vmem:[%s0] sm:$0xff]
    %v55 = vld [vmem:[%s0 + $0x8] sm:$0xff]
    %v56 = vld [vmem:[%s0 + $0x10] sm:$0xff]
    %v57 = vld [vmem:[%s0 + $0x18] sm:$0xff]
    %v58 = vld [vmem:[%s0 + $0x20] sm:$0xff]
    %v59 = vld [vmem:[%s0 + $0x28] sm:$0xff]
    %v60 = vld [vmem:[%s0 + $0x30] sm:$0xff]
    %v61 = vld [vmem:[%s0 + $0x38] sm:$0xff]
    %v62 = vld [vmem:[%s0 + $0x40] sm:$0xff]
    %v63 = vld [vmem:[%s0 + $0x48] sm:$0xff]
    %v64 = vld [vmem:[%s0 + $0x50] sm:$0xff]
    %v65 = vld [vmem:[%s0 + $0x58] sm:$0xff]
    %v66 = vld [vmem:[%s0 + $0x60] sm:$0xff]
    %v67 = vld [vmem:[%s0 + $0x68] sm:$0xff]
    %v68 = vld [vmem:[%s0 + $0x70] sm:$0xff]
    %v69 = vld [vmem:[%s0 + $0x78] sm:$0xff]
    %v70 = vld [vmem:[%s1] sm:$0xff]
    %v71 = vld [vmem:[%s1 + $0x8] sm:$0xff]
    %v72 = vld [vmem:[%s1 + $0x10] sm:$0xff]
    %v73 = vld [vmem:[%s1 + $0x18] sm:$0xff]
    %v74 = vld [vmem:[%s1 + $0x20] sm:$0xff]
    %v75 = vld [vmem:[%s1 + $0x28] sm:$0xff]
    %v76 = vld [vmem:[%s1 + $0x30] sm:$0xff]
    %v77 = vld [vmem:[%s1 + $0x38] sm:$0xff]
    %v78 = vld [vmem:[%s1 + $0x40] sm:$0xff]
    %v79 = vld [vmem:[%s1 + $0x48] sm:$0xff]
    %v80 = vld [vmem:[%s1 + $0x50] sm:$0xff]
    %v81 = vld [vmem:[%s1 + $0x58] sm:$0xff]
    %v82 = vld [vmem:[%s1 + $0x60] sm:$0xff]
    %v83 = vld [vmem:[%s1 + $0x68] sm:$0xff]
    %v84 = vld [vmem:[%s1 + $0x70] sm:$0xff]
    %v85 = vld [vmem:[%s1 + $0x78] sm:$0xff]
    %v86 = vld [vmem:[%s1 + $0x80] sm:$0xff]
    %v87 = vld [vmem:[%s1 + $0x88] sm:$0xff]
    %v88 = vld [vmem:[%s1 + $0x90] sm:$0xff]
    %v89 = vld [vmem:[%s1 + $0x98] sm:$0xff]
    %v90 = vld [vmem:[%s1 + $0xa0] sm:$0xff]
    %v91 = vld [vmem:[%s1 + $0xa8] sm:$0xff]
    %v92 = vld [vmem:[%s1 + $0xb0] sm:$0xff]
    %v93 = vld [vmem:[%s1 + $0xb8] sm:$0xff]
    %v94 = vld [vmem:[%s1 + $0xc0] sm:$0xff]
    %v95 = vld [vmem:[%s1 + $0xc8] sm:$0xff]
    %v96 = vld [vmem:[%s1 + $0xd0] sm:$0xff]
    %v97 = vld [vmem:[%s1 + $0xd8] sm:$0xff]
    %v98 = vld [vmem:[%s1 + $0xe0] sm:$0xff]
    %v99 = vld [vmem:[%s1 + $0xe8] sm:$0xff]
    %v100 = vld [vmem:[%s1 + $0xf0] sm:$0xff]
    %v101 = vld [vmem:[%s1 + $0xf8] sm:$0xff]
    %v102 = vld [vmem:[%s2] sm:$0x1]
    %v104 = vperm.slane %v102, 0
    %106 = vmatpush.msra.mxu0 %v85
    %107 = vmatpush.msra.mxu0 %v84
    %108 = vmatpush.msra.mxu0 %v83
    %109 = vmatpush.msra.mxu0 %v82
    %110 = vmatpush.msra.mxu0 %v81
    %111 = vmatpush.msra.mxu0 %v80
    %112 = vmatpush.msra.mxu0 %v79
    %113 = vmatpush.msra.mxu0 %v78
    %114 = vmatpush.msra.mxu0 %v77
    %115 = vmatpush.msra.mxu0 %v76
    %116 = vmatpush.msra.mxu0 %v75
    %117 = vmatpush.msra.mxu0 %v74
    %118 = vmatpush.msra.mxu0 %v73
    %119 = vmatpush.msra.mxu0 %v72
    %120 = vmatpush.msra.mxu0 %v71
    %121 = vmatpush.msra.mxu0 %v70
    %122 = vmatmul.f32.gmra.mxu0 %v54
    %v123 = vpop.f32.mrf.mxu0
    %v124 = vadd.f32 %v104, %v123
    %125 = vmatmul.f32.gmra.mxu0 %v56
    %v126 = vpop.f32.mrf.mxu0
    %v127 = vadd.f32 %v104, %v126
    %128 = vmatmul.f32.gmra.mxu0 %v58
    %v129 = vpop.f32.mrf.mxu0
    %v130 = vadd.f32 %v104, %v129
    %131 = vmatmul.f32.gmra.mxu0 %v60
    %v132 = vpop.f32.mrf.mxu0
    %v133 = vadd.f32 %v104, %v132
    %134 = vmatmul.f32.gmra.mxu0 %v62
    %v135 = vpop.f32.mrf.mxu0
    %v136 = vadd.f32 %v104, %v135
    %137 = vmatmul.f32.gmra.mxu0 %v64
    %v138 = vpop.f32.mrf.mxu0
    %v139 = vadd.f32 %v104, %v138
    %140 = vmatmul.f32.gmra.mxu0 %v66
    %v141 = vpop.f32.mrf.mxu0
    %v142 = vadd.f32 %v104, %v141
    %143 = vmatmul.f32.gmra.mxu0 %v68
    %v144 = vpop.f32.mrf.mxu0
    %v145 = vadd.f32 %v104, %v144
    %146 = vdwg.mxu0
    %147 = vmatpush.msra.mxu0 %v101
    %148 = vmatpush.msra.mxu0 %v100
    %149 = vmatpush.msra.mxu0 %v99
    %150 = vmatpush.msra.mxu0 %v98
    %151 = vmatpush.msra.mxu0 %v97
    %152 = vmatpush.msra.mxu0 %v96
    %153 = vmatpush.msra.mxu0 %v95
    %154 = vmatpush.msra.mxu0 %v94
    %155 = vmatpush.msra.mxu0 %v93
    %156 = vmatpush.msra.mxu0 %v92
    %157 = vmatpush.msra.mxu0 %v91
    %158 = vmatpush.msra.mxu0 %v90
    %159 = vmatpush.msra.mxu0 %v89
    %160 = vmatpush.msra.mxu0 %v88
    %161 = vmatpush.msra.mxu0 %v87
    %162 = vmatpush.msra.mxu0 %v86
    %163 = vmatmul.f32.gmra.mxu0 %v55
    %v164 = vpop.f32.mrf.mxu0
    %v165 = vadd.f32 %v124, %v164
    %166 = vmatmul.f32.gmra.mxu0 %v57
    %v167 = vpop.f32.mrf.mxu0
    %v168 = vadd.f32 %v127, %v167
    %169 = vmatmul.f32.gmra.mxu0 %v59
    %v170 = vpop.f32.mrf.mxu0
    %v171 = vadd.f32 %v130, %v170
    %172 = vmatmul.f32.gmra.mxu0 %v61
    %v173 = vpop.f32.mrf.mxu0
    %v174 = vadd.f32 %v133, %v173
    %175 = vmatmul.f32.gmra.mxu0 %v63
    %v176 = vpop.f32.mrf.mxu0
    %v177 = vadd.f32 %v136, %v176
    %178 = vmatmul.f32.gmra.mxu0 %v65
    %v179 = vpop.f32.mrf.mxu0
    %v180 = vadd.f32 %v139, %v179
    %181 = vmatmul.f32.gmra.mxu0 %v67
    %v182 = vpop.f32.mrf.mxu0
    %v183 = vadd.f32 %v142, %v182
    %184 = vmatmul.f32.gmra.mxu0 %v69
    %v185 = vpop.f32.mrf.mxu0
    %v186 = vadd.f32 %v145, %v185
    %187 = vdwg.mxu0
    %v188 = vmax.f32 %v165, 0.0
    %v189 = vmax.f32 %v168, 0.0
    %v190 = vmax.f32 %v171, 0.0
    %v191 = vmax.f32 %v174, 0.0
    %v192 = vmax.f32 %v177, 0.0
    %v193 = vmax.f32 %v180, 0.0
    %v194 = vmax.f32 %v183, 0.0
    %v195 = vmax.f32 %v186, 0.0
    %v196 = vld [vmem:[%s3] sm:$0xff]
    %v197 = vld [vmem:[%s3 + $0x8] sm:$0x1]
    %vm198 = vcmask 523264
    %v200 = vsel %vm198, %v196, 0
    %v203 = vsel %vm198, %v197, 0
    %205 = vmatpush.msra.mxu0 0.0
    %206 = vmatpush.msra.mxu0 0.0
    %207 = vmatpush.msra.mxu0 0.0
    %208 = vmatpush.msra.mxu0 0.0
    %209 = vmatpush.msra.mxu0 0.0
    %210 = vmatpush.msra.mxu0 0.0
    %211 = vmatpush.msra.mxu0 0.0
    %212 = vmatpush.msra.mxu0 0.0
    %213 = vmatpush.msra.mxu0 %v195
    %214 = vmatpush.msra.mxu0 %v194
    %215 = vmatpush.msra.mxu0 %v193
    %216 = vmatpush.msra.mxu0 %v192
    %217 = vmatpush.msra.mxu0 %v191
    %218 = vmatpush.msra.mxu0 %v190
    %219 = vmatpush.msra.mxu0 %v189
    %220 = vmatpush.msra.mxu0 %v188
    %221 = vmatmul.f32.gmra.mxu0 %v200
    %v222 = vpop.f32.mrf.mxu0
    %v223 = vadd.f32 0.0, %v222
    %224 = vmatmul.f32.gmra.mxu0 %v203
    %v225 = vpop.f32.mrf.mxu0
    %v226 = vadd.f32 0.0, %v225
    %227 = vdwg.mxu0
    %v228 = vld [vmem:[%s4] sm:$0xff]
    %v229 = vld [vmem:[%s4 + $0x8] sm:$0xff]
    %v230 = vld [vmem:[%s4 + $0x10] sm:$0xff]
    %v231 = vld [vmem:[%s4 + $0x18] sm:$0xff]
    %s232 = scalar_lea.vmem %s3, 16
    %v233 = vld [vmem:[%s232] sm:$0xff]
    %v234 = vld [vmem:[%s232 + $0x8] sm:$0x1]
    %v236 = vsel %vm198, %v233, 0
    %v239 = vsel %vm198, %v234, 0
    %241 = vmatpush.msra.mxu0 0.0
    %242 = vmatpush.msra.mxu0 0.0
    %243 = vmatpush.msra.mxu0 0.0
    %244 = vmatpush.msra.mxu0 0.0
    %245 = vmatpush.msra.mxu0 0.0
    %246 = vmatpush.msra.mxu0 0.0
    %247 = vmatpush.msra.mxu0 0.0
    %248 = vmatpush.msra.mxu0 0.0
    %249 = vmatpush.msra.mxu0 %v195
    %250 = vmatpush.msra.mxu0 %v194
    %251 = vmatpush.msra.mxu0 %v193
    %252 = vmatpush.msra.mxu0 %v192
    %253 = vmatpush.msra.mxu0 %v191
    %254 = vmatpush.msra.mxu0 %v190
    %255 = vmatpush.msra.mxu0 %v189
    %256 = vmatpush.msra.mxu0 %v188
    %257 = vmatmul.f32.gmra.mxu0 %v236
    %v258 = vpop.f32.mrf.mxu0
    %v259 = vadd.f32 0.0, %v258
    %260 = vmatmul.f32.gmra.mxu0 %v239
    %v261 = vpop.f32.mrf.mxu0
    %v262 = vadd.f32 0.0, %v261
    %263 = vdwg.mxu0
    %s264 = scalar_lea.vmem %s4, 32
    %v265 = vld [vmem:[%s264] sm:$0xff]
    %v266 = vld [vmem:[%s264 + $0x8] sm:$0xff]
    %v267 = vld [vmem:[%s264 + $0x10] sm:$0xff]
    %v268 = vld [vmem:[%s264 + $0x18] sm:$0xff]
    %vm269 = vcmask 261120
    %v271 = vsel %vm269, %v259, 0
    %v274 = vsel %vm269, %v262, 0
    %276 = vmatpush.msra.mxu0 0.0
    %277 = vmatpush.msra.mxu0 0.0
    %278 = vmatpush.msra.mxu0 0.0
    %279 = vmatpush.msra.mxu0 0.0
    %280 = vmatpush.msra.mxu0 0.0
    %281 = vmatpush.msra.mxu0 0.0
    %282 = vmatpush.msra.mxu0 0.0
    %283 = vmatpush.msra.mxu0 0.0
    %284 = vmatpush.msra.mxu0 0.0
    %285 = vmatpush.msra.mxu0 0.0
    %286 = vmatpush.msra.mxu0 0.0
    %287 = vmatpush.msra.mxu0 0.0
    %288 = vmatpush.msra.mxu0 %v268
    %289 = vmatpush.msra.mxu0 %v267
    %290 = vmatpush.msra.mxu0 %v266
    %291 = vmatpush.msra.mxu0 %v265
    %292 = vmatmul.f32.gmra.mxu0 %v271
    %v293 = vpop.f32.mrf.mxu0
    %v294 = vadd.f32 0.0, %v293
    %295 = vmatmul.f32.gmra.mxu0 %v274
    %v296 = vpop.f32.mrf.mxu0
    %v297 = vadd.f32 0.0, %v296
    %298 = vdwg.mxu0
    %v300 = vsel %vm269, %v223, 0
    %v303 = vsel %vm269, %v226, 0
    %305 = vmatpush.msra.mxu0 0.0
    %306 = vmatpush.msra.mxu0 0.0
    %307 = vmatpush.msra.mxu0 0.0
    %308 = vmatpush.msra.mxu0 0.0
    %309 = vmatpush.msra.mxu0 0.0
    %310 = vmatpush.msra.mxu0 0.0
    %311 = vmatpush.msra.mxu0 0.0
    %312 = vmatpush.msra.mxu0 0.0
    %313 = vmatpush.msra.mxu0 0.0
    %314 = vmatpush.msra.mxu0 0.0
    %315 = vmatpush.msra.mxu0 0.0
    %316 = vmatpush.msra.mxu0 0.0
    %317 = vmatpush.msra.mxu0 %v231
    %318 = vmatpush.msra.mxu0 %v230
    %319 = vmatpush.msra.mxu0 %v229
    %320 = vmatpush.msra.mxu0 %v228
    %321 = vmatmul.f32.gmra.mxu0 %v300
    %v322 = vpop.f32.mrf.mxu0
    %v323 = vadd.f32 %v294, %v322
    %324 = vmatmul.f32.gmra.mxu0 %v303
    %v325 = vpop.f32.mrf.mxu0
    %v326 = vadd.f32 %v297, %v325
    %327 = vdwg.mxu0
    %s328 = scalar_lea.vmem %s3, 32
    %v329 = vld [vmem:[%s328] sm:$0xff]
    %v330 = vld [vmem:[%s328 + $0x8] sm:$0x1]
    %v332 = vsel %vm198, %v329, 0
    %v335 = vsel %vm198, %v330, 0
    %337 = vmatpush.msra.mxu0 0.0
    %338 = vmatpush.msra.mxu0 0.0
    %339 = vmatpush.msra.mxu0 0.0
    %340 = vmatpush.msra.mxu0 0.0
    %341 = vmatpush.msra.mxu0 0.0
    %342 = vmatpush.msra.mxu0 0.0
    %343 = vmatpush.msra.mxu0 0.0
    %344 = vmatpush.msra.mxu0 0.0
    %345 = vmatpush.msra.mxu0 %v195
    %346 = vmatpush.msra.mxu0 %v194
    %347 = vmatpush.msra.mxu0 %v193
    %348 = vmatpush.msra.mxu0 %v192
    %349 = vmatpush.msra.mxu0 %v191
    %350 = vmatpush.msra.mxu0 %v190
    %351 = vmatpush.msra.mxu0 %v189
    %352 = vmatpush.msra.mxu0 %v188
    %353 = vmatmul.f32.gmra.mxu0 %v332
    %v354 = vpop.f32.mrf.mxu0
    %v355 = vadd.f32 0.0, %v354
    %356 = vmatmul.f32.gmra.mxu0 %v335
    %v357 = vpop.f32.mrf.mxu0
    %v358 = vadd.f32 0.0, %v357
    %359 = vdwg.mxu0
    %s360 = scalar_lea.vmem %s4, 64
    %v361 = vld [vmem:[%s360] sm:$0xff]
    %v362 = vld [vmem:[%s360 + $0x8] sm:$0xff]
    %v363 = vld [vmem:[%s360 + $0x10] sm:$0xff]
    %v364 = vld [vmem:[%s360 + $0x18] sm:$0xff]
    %v366 = vsel %vm269, %v355, 0
    %v369 = vsel %vm269, %v358, 0
    %371 = vmatpush.msra.mxu0 0.0
    %372 = vmatpush.msra.mxu0 0.0
    %373 = vmatpush.msra.mxu0 0.0
    %374 = vmatpush.msra.mxu0 0.0
    %375 = vmatpush.msra.mxu0 0.0
    %376 = vmatpush.msra.mxu0 0.0
    %377 = vmatpush.msra.mxu0 0.0
    %378 = vmatpush.msra.mxu0 0.0
    %379 = vmatpush.msra.mxu0 0.0
    %380 = vmatpush.msra.mxu0 0.0
    %381 = vmatpush.msra.mxu0 0.0
    %382 = vmatpush.msra.mxu0 0.0
    %383 = vmatpush.msra.mxu0 %v364
    %384 = vmatpush.msra.mxu0 %v363
    %385 = vmatpush.msra.mxu0 %v362
    %386 = vmatpush.msra.mxu0 %v361
    %387 = vmatmul.f32.gmra.mxu0 %v366
    %v388 = vpop.f32.mrf.mxu0
    %v389 = vadd.f32 0.0, %v388
    %390 = vmatmul.f32.gmra.mxu0 %v369
    %v391 = vpop.f32.mrf.mxu0
    %v392 = vadd.f32 0.0, %v391
    %393 = vdwg.mxu0
    %v394 = vadd.f32 %v323, %v389
    %v395 = vadd.f32 %v326, %v392
    %s396 = scalar_lea.vmem %s3, 48
    %v397 = vld [vmem:[%s396] sm:$0xff]
    %v398 = vld [vmem:[%s396 + $0x8] sm:$0x1]
    %v400 = vsel %vm198, %v397, 0
    %v403 = vsel %vm198, %v398, 0
    %405 = vmatpush.msra.mxu0 0.0
    %406 = vmatpush.msra.mxu0 0.0
    %407 = vmatpush.msra.mxu0 0.0
    %408 = vmatpush.msra.mxu0 0.0
    %409 = vmatpush.msra.mxu0 0.0
    %410 = vmatpush.msra.mxu0 0.0
    %411 = vmatpush.msra.mxu0 0.0
    %412 = vmatpush.msra.mxu0 0.0
    %413 = vmatpush.msra.mxu0 %v195
    %414 = vmatpush.msra.mxu0 %v194
    %415 = vmatpush.msra.mxu0 %v193
    %416 = vmatpush.msra.mxu0 %v192
    %417 = vmatpush.msra.mxu0 %v191
    %418 = vmatpush.msra.mxu0 %v190
    %419 = vmatpush.msra.mxu0 %v189
    %420 = vmatpush.msra.mxu0 %v188
    %421 = vmatmul.f32.gmra.mxu0 %v400
    %v422 = vpop.f32.mrf.mxu0
    %v423 = vadd.f32 0.0, %v422
    %424 = vmatmul.f32.gmra.mxu0 %v403
    %v425 = vpop.f32.mrf.mxu0
    %v426 = vadd.f32 0.0, %v425
    %427 = vdwg.mxu0
    %s428 = scalar_lea.vmem %s4, 96
    %v429 = vld [vmem:[%s428] sm:$0xff]
    %v430 = vld [vmem:[%s428 + $0x8] sm:$0xff]
    %v431 = vld [vmem:[%s428 + $0x10] sm:$0xff]
    %v432 = vld [vmem:[%s428 + $0x18] sm:$0xff]
    %v434 = vsel %vm269, %v423, 0
    %v437 = vsel %vm269, %v426, 0
    %439 = vmatpush.msra.mxu0 0.0
    %440 = vmatpush.msra.mxu0 0.0
    %441 = vmatpush.msra.mxu0 0.0
    %442 = vmatpush.msra.mxu0 0.0
    %443 = vmatpush.msra.mxu0 0.0
    %444 = vmatpush.msra.mxu0 0.0
    %445 = vmatpush.msra.mxu0 0.0
    %446 = vmatpush.msra.mxu0 0.0
    %447 = vmatpush.msra.mxu0 0.0
    %448 = vmatpush.msra.mxu0 0.0
    %449 = vmatpush.msra.mxu0 0.0
    %450 = vmatpush.msra.mxu0 0.0
    %451 = vmatpush.msra.mxu0 %v432
    %452 = vmatpush.msra.mxu0 %v431
    %453 = vmatpush.msra.mxu0 %v430
    %454 = vmatpush.msra.mxu0 %v429
    %455 = vmatmul.f32.gmra.mxu0 %v434
    %v456 = vpop.f32.mrf.mxu0
    %v457 = vadd.f32 0.0, %v456
    %458 = vmatmul.f32.gmra.mxu0 %v437
    %v459 = vpop.f32.mrf.mxu0
    %v460 = vadd.f32 0.0, %v459
    %461 = vdwg.mxu0
    %v462 = vadd.f32 %v394, %v457
    %v463 = vadd.f32 %v395, %v460
    %s464 = scalar_lea.vmem %s3, 64
    %v465 = vld [vmem:[%s464] sm:$0xff]
    %v466 = vld [vmem:[%s464 + $0x8] sm:$0x1]
    %v468 = vsel %vm198, %v465, 0
    %v471 = vsel %vm198, %v466, 0
    %473 = vmatpush.msra.mxu0 0.0
    %474 = vmatpush.msra.mxu0 0.0
    %475 = vmatpush.msra.mxu0 0.0
    %476 = vmatpush.msra.mxu0 0.0
    %477 = vmatpush.msra.mxu0 0.0
    %478 = vmatpush.msra.mxu0 0.0
    %479 = vmatpush.msra.mxu0 0.0
    %480 = vmatpush.msra.mxu0 0.0
    %481 = vmatpush.msra.mxu0 %v195
    %482 = vmatpush.msra.mxu0 %v194
    %483 = vmatpush.msra.mxu0 %v193
    %484 = vmatpush.msra.mxu0 %v192
    %485 = vmatpush.msra.mxu0 %v191
    %486 = vmatpush.msra.mxu0 %v190
    %487 = vmatpush.msra.mxu0 %v189
    %488 = vmatpush.msra.mxu0 %v188
    %489 = vmatmul.f32.gmra.mxu0 %v468
    %v490 = vpop.f32.mrf.mxu0
    %v491 = vadd.f32 0.0, %v490
    %492 = vmatmul.f32.gmra.mxu0 %v471
    %v493 = vpop.f32.mrf.mxu0
    %v494 = vadd.f32 0.0, %v493
    %495 = vdwg.mxu0
    %s496 = scalar_lea.vmem %s4, 128
    %v497 = vld [vmem:[%s496] sm:$0xff]
    %v498 = vld [vmem:[%s496 + $0x8] sm:$0xff]
    %v499 = vld [vmem:[%s496 + $0x10] sm:$0xff]
    %v500 = vld [vmem:[%s496 + $0x18] sm:$0xff]
    %v502 = vsel %vm269, %v491, 0
    %v505 = vsel %vm269, %v494, 0
    %507 = vmatpush.msra.mxu0 0.0
    %508 = vmatpush.msra.mxu0 0.0
    %509 = vmatpush.msra.mxu0 0.0
    %510 = vmatpush.msra.mxu0 0.0
    %511 = vmatpush.msra.mxu0 0.0
    %512 = vmatpush.msra.mxu0 0.0
    %513 = vmatpush.msra.mxu0 0.0
    %514 = vmatpush.msra.mxu0 0.0
    %515 = vmatpush.msra.mxu0 0.0
    %516 = vmatpush.msra.mxu0 0.0
    %517 = vmatpush.msra.mxu0 0.0
    %518 = vmatpush.msra.mxu0 0.0
    %519 = vmatpush.msra.mxu0 %v500
    %520 = vmatpush.msra.mxu0 %v499
    %521 = vmatpush.msra.mxu0 %v498
    %522 = vmatpush.msra.mxu0 %v497
    %523 = vmatmul.f32.gmra.mxu0 %v502
    %v524 = vpop.f32.mrf.mxu0
    %v525 = vadd.f32 0.0, %v524
    %526 = vmatmul.f32.gmra.mxu0 %v505
    %v527 = vpop.f32.mrf.mxu0
    %v528 = vadd.f32 0.0, %v527
    %529 = vdwg.mxu0
    %v530 = vadd.f32 %v462, %v525
    %v531 = vadd.f32 %v463, %v528
    %s532 = scalar_lea.vmem %s3, 80
    %v533 = vld [vmem:[%s532] sm:$0xff]
    %v534 = vld [vmem:[%s532 + $0x8] sm:$0x1]
    %v536 = vsel %vm198, %v533, 0
    %v539 = vsel %vm198, %v534, 0
    %541 = vmatpush.msra.mxu0 0.0
    %542 = vmatpush.msra.mxu0 0.0
    %543 = vmatpush.msra.mxu0 0.0
    %544 = vmatpush.msra.mxu0 0.0
    %545 = vmatpush.msra.mxu0 0.0
    %546 = vmatpush.msra.mxu0 0.0
    %547 = vmatpush.msra.mxu0 0.0
    %548 = vmatpush.msra.mxu0 0.0
    %549 = vmatpush.msra.mxu0 %v195
    %550 = vmatpush.msra.mxu0 %v194
    %551 = vmatpush.msra.mxu0 %v193
    %552 = vmatpush.msra.mxu0 %v192
    %553 = vmatpush.msra.mxu0 %v191
    %554 = vmatpush.msra.mxu0 %v190
    %555 = vmatpush.msra.mxu0 %v189
    %556 = vmatpush.msra.mxu0 %v188
    %557 = vmatmul.f32.gmra.mxu0 %v536
    %v558 = vpop.f32.mrf.mxu0
    %v559 = vadd.f32 0.0, %v558
    %560 = vmatmul.f32.gmra.mxu0 %v539
    %v561 = vpop.f32.mrf.mxu0
    %v562 = vadd.f32 0.0, %v561
    %563 = vdwg.mxu0
    %s564 = scalar_lea.vmem %s4, 160
    %v565 = vld [vmem:[%s564] sm:$0xff]
    %v566 = vld [vmem:[%s564 + $0x8] sm:$0xff]
    %v567 = vld [vmem:[%s564 + $0x10] sm:$0xff]
    %v568 = vld [vmem:[%s564 + $0x18] sm:$0xff]
    %v570 = vsel %vm269, %v559, 0
    %v573 = vsel %vm269, %v562, 0
    %575 = vmatpush.msra.mxu0 0.0
    %576 = vmatpush.msra.mxu0 0.0
    %577 = vmatpush.msra.mxu0 0.0
    %578 = vmatpush.msra.mxu0 0.0
    %579 = vmatpush.msra.mxu0 0.0
    %580 = vmatpush.msra.mxu0 0.0
    %581 = vmatpush.msra.mxu0 0.0
    %582 = vmatpush.msra.mxu0 0.0
    %583 = vmatpush.msra.mxu0 0.0
    %584 = vmatpush.msra.mxu0 0.0
    %585 = vmatpush.msra.mxu0 0.0
    %586 = vmatpush.msra.mxu0 0.0
    %587 = vmatpush.msra.mxu0 %v568
    %588 = vmatpush.msra.mxu0 %v567
    %589 = vmatpush.msra.mxu0 %v566
    %590 = vmatpush.msra.mxu0 %v565
    %591 = vmatmul.f32.gmra.mxu0 %v570
    %v592 = vpop.f32.mrf.mxu0
    %v593 = vadd.f32 0.0, %v592
    %594 = vmatmul.f32.gmra.mxu0 %v573
    %v595 = vpop.f32.mrf.mxu0
    %v596 = vadd.f32 0.0, %v595
    %597 = vdwg.mxu0
    %v598 = vadd.f32 %v530, %v593
    %v599 = vadd.f32 %v531, %v596
    %s600 = scalar_lea.vmem %s3, 96
    %v601 = vld [vmem:[%s600] sm:$0xff]
    %v602 = vld [vmem:[%s600 + $0x8] sm:$0x1]
    %v604 = vsel %vm198, %v601, 0
    %v607 = vsel %vm198, %v602, 0
    %609 = vmatpush.msra.mxu0 0.0
    %610 = vmatpush.msra.mxu0 0.0
    %611 = vmatpush.msra.mxu0 0.0
    %612 = vmatpush.msra.mxu0 0.0
    %613 = vmatpush.msra.mxu0 0.0
    %614 = vmatpush.msra.mxu0 0.0
    %615 = vmatpush.msra.mxu0 0.0
    %616 = vmatpush.msra.mxu0 0.0
    %617 = vmatpush.msra.mxu0 %v195
    %618 = vmatpush.msra.mxu0 %v194
    %619 = vmatpush.msra.mxu0 %v193
    %620 = vmatpush.msra.mxu0 %v192
    %621 = vmatpush.msra.mxu0 %v191
    %622 = vmatpush.msra.mxu0 %v190
    %623 = vmatpush.msra.mxu0 %v189
    %624 = vmatpush.msra.mxu0 %v188
    %625 = vmatmul.f32.gmra.mxu0 %v604
    %v626 = vpop.f32.mrf.mxu0
    %v627 = vadd.f32 0.0, %v626
    %628 = vmatmul.f32.gmra.mxu0 %v607
    %v629 = vpop.f32.mrf.mxu0
    %v630 = vadd.f32 0.0, %v629
    %631 = vdwg.mxu0
    %s632 = scalar_lea.vmem %s4, 192
    %v633 = vld [vmem:[%s632] sm:$0xff]
    %v634 = vld [vmem:[%s632 + $0x8] sm:$0xff]
    %v635 = vld [vmem:[%s632 + $0x10] sm:$0xff]
    %v636 = vld [vmem:[%s632 + $0x18] sm:$0xff]
    %v638 = vsel %vm269, %v627, 0
    %v641 = vsel %vm269, %v630, 0
    %643 = vmatpush.msra.mxu0 0.0
    %644 = vmatpush.msra.mxu0 0.0
    %645 = vmatpush.msra.mxu0 0.0
    %646 = vmatpush.msra.mxu0 0.0
    %647 = vmatpush.msra.mxu0 0.0
    %648 = vmatpush.msra.mxu0 0.0
    %649 = vmatpush.msra.mxu0 0.0
    %650 = vmatpush.msra.mxu0 0.0
    %651 = vmatpush.msra.mxu0 0.0
    %652 = vmatpush.msra.mxu0 0.0
    %653 = vmatpush.msra.mxu0 0.0
    %654 = vmatpush.msra.mxu0 0.0
    %655 = vmatpush.msra.mxu0 %v636
    %656 = vmatpush.msra.mxu0 %v635
    %657 = vmatpush.msra.mxu0 %v634
    %658 = vmatpush.msra.mxu0 %v633
    %659 = vmatmul.f32.gmra.mxu0 %v638
    %v660 = vpop.f32.mrf.mxu0
    %v661 = vadd.f32 0.0, %v660
    %662 = vmatmul.f32.gmra.mxu0 %v641
    %v663 = vpop.f32.mrf.mxu0
    %v664 = vadd.f32 0.0, %v663
    %665 = vdwg.mxu0
    %v666 = vadd.f32 %v598, %v661
    %v667 = vadd.f32 %v599, %v664
    %s668 = scalar_lea.vmem %s3, 112
    %v669 = vld [vmem:[%s668] sm:$0xff]
    %v670 = vld [vmem:[%s668 + $0x8] sm:$0x1]
    %v672 = vsel %vm198, %v669, 0
    %v675 = vsel %vm198, %v670, 0
    %677 = vmatpush.msra.mxu0 0.0
    %678 = vmatpush.msra.mxu0 0.0
    %679 = vmatpush.msra.mxu0 0.0
    %680 = vmatpush.msra.mxu0 0.0
    %681 = vmatpush.msra.mxu0 0.0
    %682 = vmatpush.msra.mxu0 0.0
    %683 = vmatpush.msra.mxu0 0.0
    %684 = vmatpush.msra.mxu0 0.0
    %685 = vmatpush.msra.mxu0 %v195
    %686 = vmatpush.msra.mxu0 %v194
    %687 = vmatpush.msra.mxu0 %v193
    %688 = vmatpush.msra.mxu0 %v192
    %689 = vmatpush.msra.mxu0 %v191
    %690 = vmatpush.msra.mxu0 %v190
    %691 = vmatpush.msra.mxu0 %v189
    %692 = vmatpush.msra.mxu0 %v188
    %693 = vmatmul.f32.gmra.mxu0 %v672
    %v694 = vpop.f32.mrf.mxu0
    %v695 = vadd.f32 0.0, %v694
    %696 = vmatmul.f32.gmra.mxu0 %v675
    %v697 = vpop.f32.mrf.mxu0
    %v698 = vadd.f32 0.0, %v697
    %699 = vdwg.mxu0
    %s700 = scalar_lea.vmem %s4, 224
    %v701 = vld [vmem:[%s700] sm:$0xff]
    %v702 = vld [vmem:[%s700 + $0x8] sm:$0xff]
    %v703 = vld [vmem:[%s700 + $0x10] sm:$0xff]
    %v704 = vld [vmem:[%s700 + $0x18] sm:$0xff]
    %v706 = vsel %vm269, %v695, 0
    %v709 = vsel %vm269, %v698, 0
    %711 = vmatpush.msra.mxu0 0.0
    %712 = vmatpush.msra.mxu0 0.0
    %713 = vmatpush.msra.mxu0 0.0
    %714 = vmatpush.msra.mxu0 0.0
    %715 = vmatpush.msra.mxu0 0.0
    %716 = vmatpush.msra.mxu0 0.0
    %717 = vmatpush.msra.mxu0 0.0
    %718 = vmatpush.msra.mxu0 0.0
    %719 = vmatpush.msra.mxu0 0.0
    %720 = vmatpush.msra.mxu0 0.0
    %721 = vmatpush.msra.mxu0 0.0
    %722 = vmatpush.msra.mxu0 0.0
    %723 = vmatpush.msra.mxu0 %v704
    %724 = vmatpush.msra.mxu0 %v703
    %725 = vmatpush.msra.mxu0 %v702
    %726 = vmatpush.msra.mxu0 %v701
    %727 = vmatmul.f32.gmra.mxu0 %v706
    %v728 = vpop.f32.mrf.mxu0
    %v729 = vadd.f32 0.0, %v728
    %730 = vmatmul.f32.gmra.mxu0 %v709
    %v731 = vpop.f32.mrf.mxu0
    %v732 = vadd.f32 0.0, %v731
    %733 = vdwg.mxu0
    %v734 = vadd.f32 %v666, %v729
    %v735 = vadd.f32 %v667, %v732
    %s736 = scalar_lea.vmem %s3, 128
    %v737 = vld [vmem:[%s736] sm:$0xff]
    %v738 = vld [vmem:[%s736 + $0x8] sm:$0x1]
    %v740 = vsel %vm198, %v737, 0
    %v743 = vsel %vm198, %v738, 0
    %745 = vmatpush.msra.mxu0 0.0
    %746 = vmatpush.msra.mxu0 0.0
    %747 = vmatpush.msra.mxu0 0.0
    %748 = vmatpush.msra.mxu0 0.0
    %749 = vmatpush.msra.mxu0 0.0
    %750 = vmatpush.msra.mxu0 0.0
    %751 = vmatpush.msra.mxu0 0.0
    %752 = vmatpush.msra.mxu0 0.0
    %753 = vmatpush.msra.mxu0 %v195
    %754 = vmatpush.msra.mxu0 %v194
    %755 = vmatpush.msra.mxu0 %v193
    %756 = vmatpush.msra.mxu0 %v192
    %757 = vmatpush.msra.mxu0 %v191
    %758 = vmatpush.msra.mxu0 %v190
    %759 = vmatpush.msra.mxu0 %v189
    %760 = vmatpush.msra.mxu0 %v188
    %761 = vmatmul.f32.gmra.mxu0 %v740
    %v762 = vpop.f32.mrf.mxu0
    %v763 = vadd.f32 0.0, %v762
    %764 = vmatmul.f32.gmra.mxu0 %v743
    %v765 = vpop.f32.mrf.mxu0
    %v766 = vadd.f32 0.0, %v765
    %767 = vdwg.mxu0
    %s768 = scalar_lea.vmem %s4, 256
    %v769 = vld [vmem:[%s768] sm:$0xff]
    %v770 = vld [vmem:[%s768 + $0x8] sm:$0xff]
    %v771 = vld [vmem:[%s768 + $0x10] sm:$0xff]
    %v772 = vld [vmem:[%s768 + $0x18] sm:$0xff]
    %v774 = vsel %vm269, %v763, 0
    %v777 = vsel %vm269, %v766, 0
    %779 = vmatpush.msra.mxu0 0.0
    %780 = vmatpush.msra.mxu0 0.0
    %781 = vmatpush.msra.mxu0 0.0
    %782 = vmatpush.msra.mxu0 0.0
    %783 = vmatpush.msra.mxu0 0.0
    %784 = vmatpush.msra.mxu0 0.0
    %785 = vmatpush.msra.mxu0 0.0
    %786 = vmatpush.msra.mxu0 0.0
    %787 = vmatpush.msra.mxu0 0.0
    %788 = vmatpush.msra.mxu0 0.0
    %789 = vmatpush.msra.mxu0 0.0
    %790 = vmatpush.msra.mxu0 0.0
    %791 = vmatpush.msra.mxu0 %v772
    %792 = vmatpush.msra.mxu0 %v771
    %793 = vmatpush.msra.mxu0 %v770
    %794 = vmatpush.msra.mxu0 %v769
    %795 = vmatmul.f32.gmra.mxu0 %v774
    %v796 = vpop.f32.mrf.mxu0
    %v797 = vadd.f32 0.0, %v796
    %798 = vmatmul.f32.gmra.mxu0 %v777
    %v799 = vpop.f32.mrf.mxu0
    %v800 = vadd.f32 0.0, %v799
    %801 = vdwg.mxu0
    %v802 = vadd.f32 %v734, %v797
    %v803 = vadd.f32 %v735, %v800
    %s804 = scalar_lea.vmem %s3, 144
    %v805 = vld [vmem:[%s804] sm:$0xff]
    %v806 = vld [vmem:[%s804 + $0x8] sm:$0x1]
    %v808 = vsel %vm198, %v805, 0
    %v811 = vsel %vm198, %v806, 0
    %813 = vmatpush.msra.mxu0 0.0
    %814 = vmatpush.msra.mxu0 0.0
    %815 = vmatpush.msra.mxu0 0.0
    %816 = vmatpush.msra.mxu0 0.0
    %817 = vmatpush.msra.mxu0 0.0
    %818 = vmatpush.msra.mxu0 0.0
    %819 = vmatpush.msra.mxu0 0.0
    %820 = vmatpush.msra.mxu0 0.0
    %821 = vmatpush.msra.mxu0 %v195
    %822 = vmatpush.msra.mxu0 %v194
    %823 = vmatpush.msra.mxu0 %v193
    %824 = vmatpush.msra.mxu0 %v192
    %825 = vmatpush.msra.mxu0 %v191
    %826 = vmatpush.msra.mxu0 %v190
    %827 = vmatpush.msra.mxu0 %v189
    %828 = vmatpush.msra.mxu0 %v188
    %829 = vmatmul.f32.gmra.mxu0 %v808
    %v830 = vpop.f32.mrf.mxu0
    %v831 = vadd.f32 0.0, %v830
    %832 = vmatmul.f32.gmra.mxu0 %v811
    %v833 = vpop.f32.mrf.mxu0
    %v834 = vadd.f32 0.0, %v833
    %835 = vdwg.mxu0
    %s836 = scalar_lea.vmem %s4, 288
    %v837 = vld [vmem:[%s836] sm:$0xff]
    %v838 = vld [vmem:[%s836 + $0x8] sm:$0xff]
    %v839 = vld [vmem:[%s836 + $0x10] sm:$0xff]
    %v840 = vld [vmem:[%s836 + $0x18] sm:$0xff]
    %v842 = vsel %vm269, %v831, 0
    %v845 = vsel %vm269, %v834, 0
    %847 = vmatpush.msra.mxu0 0.0
    %848 = vmatpush.msra.mxu0 0.0
    %849 = vmatpush.msra.mxu0 0.0
    %850 = vmatpush.msra.mxu0 0.0
    %851 = vmatpush.msra.mxu0 0.0
    %852 = vmatpush.msra.mxu0 0.0
    %853 = vmatpush.msra.mxu0 0.0
    %854 = vmatpush.msra.mxu0 0.0
    %855 = vmatpush.msra.mxu0 0.0
    %856 = vmatpush.msra.mxu0 0.0
    %857 = vmatpush.msra.mxu0 0.0
    %858 = vmatpush.msra.mxu0 0.0
    %859 = vmatpush.msra.mxu0 %v840
    %860 = vmatpush.msra.mxu0 %v839
    %861 = vmatpush.msra.mxu0 %v838
    %862 = vmatpush.msra.mxu0 %v837
    %863 = vmatmul.f32.gmra.mxu0 %v842
    %v864 = vpop.f32.mrf.mxu0
    %v865 = vadd.f32 0.0, %v864
    %866 = vmatmul.f32.gmra.mxu0 %v845
    %v867 = vpop.f32.mrf.mxu0
    %v868 = vadd.f32 0.0, %v867
    %869 = vdwg.mxu0
    %v870 = vadd.f32 %v802, %v865
    %v871 = vadd.f32 %v803, %v868
    %s872 = scalar_lea.vmem %s3, 160
    %v873 = vld [vmem:[%s872] sm:$0xff]
    %v874 = vld [vmem:[%s872 + $0x8] sm:$0x1]
    %v876 = vsel %vm198, %v873, 0
    %v879 = vsel %vm198, %v874, 0
    %881 = vmatpush.msra.mxu0 0.0
    %882 = vmatpush.msra.mxu0 0.0
    %883 = vmatpush.msra.mxu0 0.0
    %884 = vmatpush.msra.mxu0 0.0
    %885 = vmatpush.msra.mxu0 0.0
    %886 = vmatpush.msra.mxu0 0.0
    %887 = vmatpush.msra.mxu0 0.0
    %888 = vmatpush.msra.mxu0 0.0
    %889 = vmatpush.msra.mxu0 %v195
    %890 = vmatpush.msra.mxu0 %v194
    %891 = vmatpush.msra.mxu0 %v193
    %892 = vmatpush.msra.mxu0 %v192
    %893 = vmatpush.msra.mxu0 %v191
    %894 = vmatpush.msra.mxu0 %v190
    %895 = vmatpush.msra.mxu0 %v189
    %896 = vmatpush.msra.mxu0 %v188
    %897 = vmatmul.f32.gmra.mxu0 %v876
    %v898 = vpop.f32.mrf.mxu0
    %v899 = vadd.f32 0.0, %v898
    %900 = vmatmul.f32.gmra.mxu0 %v879
    %v901 = vpop.f32.mrf.mxu0
    %v902 = vadd.f32 0.0, %v901
    %903 = vdwg.mxu0
    %s904 = scalar_lea.vmem %s4, 320
    %v905 = vld [vmem:[%s904] sm:$0xff]
    %v906 = vld [vmem:[%s904 + $0x8] sm:$0xff]
    %v907 = vld [vmem:[%s904 + $0x10] sm:$0xff]
    %v908 = vld [vmem:[%s904 + $0x18] sm:$0xff]
    %v910 = vsel %vm269, %v899, 0
    %v913 = vsel %vm269, %v902, 0
    %915 = vmatpush.msra.mxu0 0.0
    %916 = vmatpush.msra.mxu0 0.0
    %917 = vmatpush.msra.mxu0 0.0
    %918 = vmatpush.msra.mxu0 0.0
    %919 = vmatpush.msra.mxu0 0.0
    %920 = vmatpush.msra.mxu0 0.0
    %921 = vmatpush.msra.mxu0 0.0
    %922 = vmatpush.msra.mxu0 0.0
    %923 = vmatpush.msra.mxu0 0.0
    %924 = vmatpush.msra.mxu0 0.0
    %925 = vmatpush.msra.mxu0 0.0
    %926 = vmatpush.msra.mxu0 0.0
    %927 = vmatpush.msra.mxu0 %v908
    %928 = vmatpush.msra.mxu0 %v907
    %929 = vmatpush.msra.mxu0 %v906
    %930 = vmatpush.msra.mxu0 %v905
    %931 = vmatmul.f32.gmra.mxu0 %v910
    %v932 = vpop.f32.mrf.mxu0
    %v933 = vadd.f32 0.0, %v932
    %934 = vmatmul.f32.gmra.mxu0 %v913
    %v935 = vpop.f32.mrf.mxu0
    %v936 = vadd.f32 0.0, %v935
    %937 = vdwg.mxu0
    %v938 = vadd.f32 %v870, %v933
    %v939 = vadd.f32 %v871, %v936
    %s940 = scalar_lea.vmem %s3, 176
    %v941 = vld [vmem:[%s940] sm:$0xff]
    %v942 = vld [vmem:[%s940 + $0x8] sm:$0x1]
    %v944 = vsel %vm198, %v941, 0
    %v947 = vsel %vm198, %v942, 0
    %949 = vmatpush.msra.mxu0 0.0
    %950 = vmatpush.msra.mxu0 0.0
    %951 = vmatpush.msra.mxu0 0.0
    %952 = vmatpush.msra.mxu0 0.0
    %953 = vmatpush.msra.mxu0 0.0
    %954 = vmatpush.msra.mxu0 0.0
    %955 = vmatpush.msra.mxu0 0.0
    %956 = vmatpush.msra.mxu0 0.0
    %957 = vmatpush.msra.mxu0 %v195
    %958 = vmatpush.msra.mxu0 %v194
    %959 = vmatpush.msra.mxu0 %v193
    %960 = vmatpush.msra.mxu0 %v192
    %961 = vmatpush.msra.mxu0 %v191
    %962 = vmatpush.msra.mxu0 %v190
    %963 = vmatpush.msra.mxu0 %v189
    %964 = vmatpush.msra.mxu0 %v188
    %965 = vmatmul.f32.gmra.mxu0 %v944
    %v966 = vpop.f32.mrf.mxu0
    %v967 = vadd.f32 0.0, %v966
    %968 = vmatmul.f32.gmra.mxu0 %v947
    %v969 = vpop.f32.mrf.mxu0
    %v970 = vadd.f32 0.0, %v969
    %971 = vdwg.mxu0
    %s972 = scalar_lea.vmem %s4, 352
    %v973 = vld [vmem:[%s972] sm:$0xff]
    %v974 = vld [vmem:[%s972 + $0x8] sm:$0xff]
    %v975 = vld [vmem:[%s972 + $0x10] sm:$0xff]
    %v976 = vld [vmem:[%s972 + $0x18] sm:$0xff]
    %v978 = vsel %vm269, %v967, 0
    %v981 = vsel %vm269, %v970, 0
    %983 = vmatpush.msra.mxu0 0.0
    %984 = vmatpush.msra.mxu0 0.0
    %985 = vmatpush.msra.mxu0 0.0
    %986 = vmatpush.msra.mxu0 0.0
    %987 = vmatpush.msra.mxu0 0.0
    %988 = vmatpush.msra.mxu0 0.0
    %989 = vmatpush.msra.mxu0 0.0
    %990 = vmatpush.msra.mxu0 0.0
    %991 = vmatpush.msra.mxu0 0.0
    %992 = vmatpush.msra.mxu0 0.0
    %993 = vmatpush.msra.mxu0 0.0
    %994 = vmatpush.msra.mxu0 0.0
    %995 = vmatpush.msra.mxu0 %v976
    %996 = vmatpush.msra.mxu0 %v975
    %997 = vmatpush.msra.mxu0 %v974
    %998 = vmatpush.msra.mxu0 %v973
    %999 = vmatmul.f32.gmra.mxu0 %v978
    %v1000 = vpop.f32.mrf.mxu0
    %v1001 = vadd.f32 0.0, %v1000
    %1002 = vmatmul.f32.gmra.mxu0 %v981
    %v1003 = vpop.f32.mrf.mxu0
    %v1004 = vadd.f32 0.0, %v1003
    %1005 = vdwg.mxu0
    %v1006 = vadd.f32 %v938, %v1001
    %v1007 = vadd.f32 %v939, %v1004
    %s1008 = scalar_lea.vmem %s3, 192
    %v1009 = vld [vmem:[%s1008] sm:$0xff]
    %v1010 = vld [vmem:[%s1008 + $0x8] sm:$0x1]
    %v1012 = vsel %vm198, %v1009, 0
    %v1015 = vsel %vm198, %v1010, 0
    %1017 = vmatpush.msra.mxu0 0.0
    %1018 = vmatpush.msra.mxu0 0.0
    %1019 = vmatpush.msra.mxu0 0.0
    %1020 = vmatpush.msra.mxu0 0.0
    %1021 = vmatpush.msra.mxu0 0.0
    %1022 = vmatpush.msra.mxu0 0.0
    %1023 = vmatpush.msra.mxu0 0.0
    %1024 = vmatpush.msra.mxu0 0.0
    %1025 = vmatpush.msra.mxu0 %v195
    %1026 = vmatpush.msra.mxu0 %v194
    %1027 = vmatpush.msra.mxu0 %v193
    %1028 = vmatpush.msra.mxu0 %v192
    %1029 = vmatpush.msra.mxu0 %v191
    %1030 = vmatpush.msra.mxu0 %v190
    %1031 = vmatpush.msra.mxu0 %v189
    %1032 = vmatpush.msra.mxu0 %v188
    %1033 = vmatmul.f32.gmra.mxu0 %v1012
    %v1034 = vpop.f32.mrf.mxu0
    %v1035 = vadd.f32 0.0, %v1034
    %1036 = vmatmul.f32.gmra.mxu0 %v1015
    %v1037 = vpop.f32.mrf.mxu0
    %v1038 = vadd.f32 0.0, %v1037
    %1039 = vdwg.mxu0
    %s1040 = scalar_lea.vmem %s4, 384
    %v1041 = vld [vmem:[%s1040] sm:$0xff]
    %v1042 = vld [vmem:[%s1040 + $0x8] sm:$0xff]
    %v1043 = vld [vmem:[%s1040 + $0x10] sm:$0xff]
    %v1044 = vld [vmem:[%s1040 + $0x18] sm:$0xff]
    %v1046 = vsel %vm269, %v1035, 0
    %v1049 = vsel %vm269, %v1038, 0
    %1051 = vmatpush.msra.mxu0 0.0
    %1052 = vmatpush.msra.mxu0 0.0
    %1053 = vmatpush.msra.mxu0 0.0
    %1054 = vmatpush.msra.mxu0 0.0
    %1055 = vmatpush.msra.mxu0 0.0
    %1056 = vmatpush.msra.mxu0 0.0
    %1057 = vmatpush.msra.mxu0 0.0
    %1058 = vmatpush.msra.mxu0 0.0
    %1059 = vmatpush.msra.mxu0 0.0
    %1060 = vmatpush.msra.mxu0 0.0
    %1061 = vmatpush.msra.mxu0 0.0
    %1062 = vmatpush.msra.mxu0 0.0
    %1063 = vmatpush.msra.mxu0 %v1044
    %1064 = vmatpush.msra.mxu0 %v1043
    %1065 = vmatpush.msra.mxu0 %v1042
    %1066 = vmatpush.msra.mxu0 %v1041
    %1067 = vmatmul.f32.gmra.mxu0 %v1046
    %v1068 = vpop.f32.mrf.mxu0
    %v1069 = vadd.f32 0.0, %v1068
    %1070 = vmatmul.f32.gmra.mxu0 %v1049
    %v1071 = vpop.f32.mrf.mxu0
    %v1072 = vadd.f32 0.0, %v1071
    %1073 = vdwg.mxu0
    %v1074 = vadd.f32 %v1006, %v1069
    %v1075 = vadd.f32 %v1007, %v1072
    %s1076 = scalar_lea.vmem %s3, 208
    %v1077 = vld [vmem:[%s1076] sm:$0xff]
    %v1078 = vld [vmem:[%s1076 + $0x8] sm:$0x1]
    %v1080 = vsel %vm198, %v1077, 0
    %v1083 = vsel %vm198, %v1078, 0
    %1085 = vmatpush.msra.mxu0 0.0
    %1086 = vmatpush.msra.mxu0 0.0
    %1087 = vmatpush.msra.mxu0 0.0
    %1088 = vmatpush.msra.mxu0 0.0
    %1089 = vmatpush.msra.mxu0 0.0
    %1090 = vmatpush.msra.mxu0 0.0
    %1091 = vmatpush.msra.mxu0 0.0
    %1092 = vmatpush.msra.mxu0 0.0
    %1093 = vmatpush.msra.mxu0 %v195
    %1094 = vmatpush.msra.mxu0 %v194
    %1095 = vmatpush.msra.mxu0 %v193
    %1096 = vmatpush.msra.mxu0 %v192
    %1097 = vmatpush.msra.mxu0 %v191
    %1098 = vmatpush.msra.mxu0 %v190
    %1099 = vmatpush.msra.mxu0 %v189
    %1100 = vmatpush.msra.mxu0 %v188
    %1101 = vmatmul.f32.gmra.mxu0 %v1080
    %v1102 = vpop.f32.mrf.mxu0
    %v1103 = vadd.f32 0.0, %v1102
    %1104 = vmatmul.f32.gmra.mxu0 %v1083
    %v1105 = vpop.f32.mrf.mxu0
    %v1106 = vadd.f32 0.0, %v1105
    %1107 = vdwg.mxu0
    %s1108 = scalar_lea.vmem %s4, 416
    %v1109 = vld [vmem:[%s1108] sm:$0xff]
    %v1110 = vld [vmem:[%s1108 + $0x8] sm:$0xff]
    %v1111 = vld [vmem:[%s1108 + $0x10] sm:$0xff]
    %v1112 = vld [vmem:[%s1108 + $0x18] sm:$0xff]
    %v1114 = vsel %vm269, %v1103, 0
    %v1117 = vsel %vm269, %v1106, 0
    %1119 = vmatpush.msra.mxu0 0.0
    %1120 = vmatpush.msra.mxu0 0.0
    %1121 = vmatpush.msra.mxu0 0.0
    %1122 = vmatpush.msra.mxu0 0.0
    %1123 = vmatpush.msra.mxu0 0.0
    %1124 = vmatpush.msra.mxu0 0.0
    %1125 = vmatpush.msra.mxu0 0.0
    %1126 = vmatpush.msra.mxu0 0.0
    %1127 = vmatpush.msra.mxu0 0.0
    %1128 = vmatpush.msra.mxu0 0.0
    %1129 = vmatpush.msra.mxu0 0.0
    %1130 = vmatpush.msra.mxu0 0.0
    %1131 = vmatpush.msra.mxu0 %v1112
    %1132 = vmatpush.msra.mxu0 %v1111
    %1133 = vmatpush.msra.mxu0 %v1110
    %1134 = vmatpush.msra.mxu0 %v1109
    %1135 = vmatmul.f32.gmra.mxu0 %v1114
    %v1136 = vpop.f32.mrf.mxu0
    %v1137 = vadd.f32 0.0, %v1136
    %1138 = vmatmul.f32.gmra.mxu0 %v1117
    %v1139 = vpop.f32.mrf.mxu0
    %v1140 = vadd.f32 0.0, %v1139
    %1141 = vdwg.mxu0
    %v1142 = vadd.f32 %v1074, %v1137
    %v1143 = vadd.f32 %v1075, %v1140
    %s1144 = scalar_lea.vmem %s3, 224
    %v1145 = vld [vmem:[%s1144] sm:$0xff]
    %v1146 = vld [vmem:[%s1144 + $0x8] sm:$0x1]
    %v1148 = vsel %vm198, %v1145, 0
    %v1151 = vsel %vm198, %v1146, 0
    %1153 = vmatpush.msra.mxu0 0.0
    %1154 = vmatpush.msra.mxu0 0.0
    %1155 = vmatpush.msra.mxu0 0.0
    %1156 = vmatpush.msra.mxu0 0.0
    %1157 = vmatpush.msra.mxu0 0.0
    %1158 = vmatpush.msra.mxu0 0.0
    %1159 = vmatpush.msra.mxu0 0.0
    %1160 = vmatpush.msra.mxu0 0.0
    %1161 = vmatpush.msra.mxu0 %v195
    %1162 = vmatpush.msra.mxu0 %v194
    %1163 = vmatpush.msra.mxu0 %v193
    %1164 = vmatpush.msra.mxu0 %v192
    %1165 = vmatpush.msra.mxu0 %v191
    %1166 = vmatpush.msra.mxu0 %v190
    %1167 = vmatpush.msra.mxu0 %v189
    %1168 = vmatpush.msra.mxu0 %v188
    %1169 = vmatmul.f32.gmra.mxu0 %v1148
    %v1170 = vpop.f32.mrf.mxu0
    %v1171 = vadd.f32 0.0, %v1170
    %1172 = vmatmul.f32.gmra.mxu0 %v1151
    %v1173 = vpop.f32.mrf.mxu0
    %v1174 = vadd.f32 0.0, %v1173
    %1175 = vdwg.mxu0
    %s1176 = scalar_lea.vmem %s4, 448
    %v1177 = vld [vmem:[%s1176] sm:$0xff]
    %v1178 = vld [vmem:[%s1176 + $0x8] sm:$0xff]
    %v1179 = vld [vmem:[%s1176 + $0x10] sm:$0xff]
    %v1180 = vld [vmem:[%s1176 + $0x18] sm:$0xff]
    %v1182 = vsel %vm269, %v1171, 0
    %v1185 = vsel %vm269, %v1174, 0
    %1187 = vmatpush.msra.mxu0 0.0
    %1188 = vmatpush.msra.mxu0 0.0
    %1189 = vmatpush.msra.mxu0 0.0
    %1190 = vmatpush.msra.mxu0 0.0
    %1191 = vmatpush.msra.mxu0 0.0
    %1192 = vmatpush.msra.mxu0 0.0
    %1193 = vmatpush.msra.mxu0 0.0
    %1194 = vmatpush.msra.mxu0 0.0
    %1195 = vmatpush.msra.mxu0 0.0
    %1196 = vmatpush.msra.mxu0 0.0
    %1197 = vmatpush.msra.mxu0 0.0
    %1198 = vmatpush.msra.mxu0 0.0
    %1199 = vmatpush.msra.mxu0 %v1180
    %1200 = vmatpush.msra.mxu0 %v1179
    %1201 = vmatpush.msra.mxu0 %v1178
    %1202 = vmatpush.msra.mxu0 %v1177
    %1203 = vmatmul.f32.gmra.mxu0 %v1182
    %v1204 = vpop.f32.mrf.mxu0
    %v1205 = vadd.f32 0.0, %v1204
    %1206 = vmatmul.f32.gmra.mxu0 %v1185
    %v1207 = vpop.f32.mrf.mxu0
    %v1208 = vadd.f32 0.0, %v1207
    %1209 = vdwg.mxu0
    %v1210 = vadd.f32 %v1142, %v1205
    %v1211 = vadd.f32 %v1143, %v1208
    %s1212 = scalar_lea.vmem %s3, 240
    %v1213 = vld [vmem:[%s1212] sm:$0xff]
    %v1214 = vld [vmem:[%s1212 + $0x8] sm:$0x1]
    %v1216 = vsel %vm198, %v1213, 0
    %v1219 = vsel %vm198, %v1214, 0
    %1221 = vmatpush.msra.mxu0 0.0
    %1222 = vmatpush.msra.mxu0 0.0
    %1223 = vmatpush.msra.mxu0 0.0
    %1224 = vmatpush.msra.mxu0 0.0
    %1225 = vmatpush.msra.mxu0 0.0
    %1226 = vmatpush.msra.mxu0 0.0
    %1227 = vmatpush.msra.mxu0 0.0
    %1228 = vmatpush.msra.mxu0 0.0
    %1229 = vmatpush.msra.mxu0 %v195
    %1230 = vmatpush.msra.mxu0 %v194
    %1231 = vmatpush.msra.mxu0 %v193
    %1232 = vmatpush.msra.mxu0 %v192
    %1233 = vmatpush.msra.mxu0 %v191
    %1234 = vmatpush.msra.mxu0 %v190
    %1235 = vmatpush.msra.mxu0 %v189
    %1236 = vmatpush.msra.mxu0 %v188
    %1237 = vmatmul.f32.gmra.mxu0 %v1216
    %v1238 = vpop.f32.mrf.mxu0
    %v1239 = vadd.f32 0.0, %v1238
    %1240 = vmatmul.f32.gmra.mxu0 %v1219
    %v1241 = vpop.f32.mrf.mxu0
    %v1242 = vadd.f32 0.0, %v1241
    %1243 = vdwg.mxu0
    %s1244 = scalar_lea.vmem %s4, 480
    %v1245 = vld [vmem:[%s1244] sm:$0xff]
    %v1246 = vld [vmem:[%s1244 + $0x8] sm:$0xff]
    %v1247 = vld [vmem:[%s1244 + $0x10] sm:$0xff]
    %v1248 = vld [vmem:[%s1244 + $0x18] sm:$0xff]
    %v1250 = vsel %vm269, %v1239, 0
    %v1253 = vsel %vm269, %v1242, 0
    %1255 = vmatpush.msra.mxu0 0.0
    %1256 = vmatpush.msra.mxu0 0.0
    %1257 = vmatpush.msra.mxu0 0.0
    %1258 = vmatpush.msra.mxu0 0.0
    %1259 = vmatpush.msra.mxu0 0.0
    %1260 = vmatpush.msra.mxu0 0.0
    %1261 = vmatpush.msra.mxu0 0.0
    %1262 = vmatpush.msra.mxu0 0.0
    %1263 = vmatpush.msra.mxu0 0.0
    %1264 = vmatpush.msra.mxu0 0.0
    %1265 = vmatpush.msra.mxu0 0.0
    %1266 = vmatpush.msra.mxu0 0.0
    %1267 = vmatpush.msra.mxu0 %v1248
    %1268 = vmatpush.msra.mxu0 %v1247
    %1269 = vmatpush.msra.mxu0 %v1246
    %1270 = vmatpush.msra.mxu0 %v1245
    %1271 = vmatmul.f32.gmra.mxu0 %v1250
    %v1272 = vpop.f32.mrf.mxu0
    %v1273 = vadd.f32 0.0, %v1272
    %1274 = vmatmul.f32.gmra.mxu0 %v1253
    %v1275 = vpop.f32.mrf.mxu0
    %v1276 = vadd.f32 0.0, %v1275
    %1277 = vdwg.mxu0
    %v1278 = vadd.f32 %v1210, %v1273
    %v1279 = vadd.f32 %v1211, %v1276
    %v1280 = vld [vmem:[%s5] sm:$0x1]
    %v1282 = vperm.slane %v1280, 0
    %v1284 = vadd.f32 %v1278, %v1282
    %v1285 = vadd.f32 %v1279, %v1282
    %v1286 = vmax.f32 %v1284, 0.0
    %v1287 = vmax.f32 %v1285, 0.0
    %1288 = vst.msk [vmem:[#allocation2] sm:$0xff] %vm198, %v1286
    %vm1289 = vcmask 516096
    %1290 = vst.msk [vmem:[#allocation2 + $0x8] sm:$0x1] %vm1289, %v1287
    %v1291 = vld [vmem:[#allocation2] sm:$0x1]
    %v1292 = vld [vmem:[%s6] sm:$0xff]
    %v1293 = vld [vmem:[%s6 + $0x8] sm:$0xff]
    %v1294 = vld [vmem:[%s6 + $0x10] sm:$0xff]
    %v1295 = vld [vmem:[%s6 + $0x18] sm:$0xff]
    %v1296 = vld [vmem:[%s6 + $0x20] sm:$0xff]
    %v1297 = vld [vmem:[%s6 + $0x28] sm:$0xff]
    %v1298 = vld [vmem:[%s6 + $0x30] sm:$0xff]
    %v1299 = vld [vmem:[%s6 + $0x38] sm:$0xff]
    %v1300 = vld [vmem:[#allocation2 + $0x1] sm:$0x1]
    %s1301 = scalar_lea.vmem %s6, 64
    %v1302 = vld [vmem:[%s1301] sm:$0xff]
    %v1303 = vld [vmem:[%s1301 + $0x8] sm:$0xff]
    %v1304 = vld [vmem:[%s1301 + $0x10] sm:$0xff]
    %v1305 = vld [vmem:[%s1301 + $0x18] sm:$0xff]
    %v1306 = vld [vmem:[%s1301 + $0x20] sm:$0xff]
    %v1307 = vld [vmem:[%s1301 + $0x28] sm:$0xff]
    %v1308 = vld [vmem:[%s1301 + $0x30] sm:$0xff]
    %v1309 = vld [vmem:[%s1301 + $0x38] sm:$0xff]
    %v1311 = vsel %vm198, %v1300, 0
    %1313 = vmatpush.msra.mxu0 0.0
    %1314 = vmatpush.msra.mxu0 0.0
    %1315 = vmatpush.msra.mxu0 0.0
    %1316 = vmatpush.msra.mxu0 0.0
    %1317 = vmatpush.msra.mxu0 0.0
    %1318 = vmatpush.msra.mxu0 0.0
    %1319 = vmatpush.msra.mxu0 0.0
    %1320 = vmatpush.msra.mxu0 0.0
    %1321 = vmatpush.msra.mxu0 %v1309
    %1322 = vmatpush.msra.mxu0 %v1308
    %1323 = vmatpush.msra.mxu0 %v1307
    %1324 = vmatpush.msra.mxu0 %v1306
    %1325 = vmatpush.msra.mxu0 %v1305
    %1326 = vmatpush.msra.mxu0 %v1304
    %1327 = vmatpush.msra.mxu0 %v1303
    %1328 = vmatpush.msra.mxu0 %v1302
    %1329 = vmatmul.f32.gmra.mxu0 %v1311
    %v1330 = vpop.f32.mrf.mxu0
    %v1331 = vadd.f32 0.0, %v1330
    %1332 = vdwg.mxu0
    %v1334 = vsel %vm198, %v1291, 0
    %1336 = vmatpush.msra.mxu0 0.0
    %1337 = vmatpush.msra.mxu0 0.0
    %1338 = vmatpush.msra.mxu0 0.0
    %1339 = vmatpush.msra.mxu0 0.0
    %1340 = vmatpush.msra.mxu0 0.0
    %1341 = vmatpush.msra.mxu0 0.0
    %1342 = vmatpush.msra.mxu0 0.0
    %1343 = vmatpush.msra.mxu0 0.0
    %1344 = vmatpush.msra.mxu0 %v1299
    %1345 = vmatpush.msra.mxu0 %v1298
    %1346 = vmatpush.msra.mxu0 %v1297
    %1347 = vmatpush.msra.mxu0 %v1296
    %1348 = vmatpush.msra.mxu0 %v1295
    %1349 = vmatpush.msra.mxu0 %v1294
    %1350 = vmatpush.msra.mxu0 %v1293
    %1351 = vmatpush.msra.mxu0 %v1292
    %1352 = vmatmul.f32.gmra.mxu0 %v1334
    %v1353 = vpop.f32.mrf.mxu0
    %v1354 = vadd.f32 %v1331, %v1353
    %1355 = vdwg.mxu0
    %v1356 = vld [vmem:[#allocation2 + $0x2] sm:$0x1]
    %s1357 = scalar_lea.vmem %s6, 128
    %v1358 = vld [vmem:[%s1357] sm:$0xff]
    %v1359 = vld [vmem:[%s1357 + $0x8] sm:$0xff]
    %v1360 = vld [vmem:[%s1357 + $0x10] sm:$0xff]
    %v1361 = vld [vmem:[%s1357 + $0x18] sm:$0xff]
    %v1362 = vld [vmem:[%s1357 + $0x20] sm:$0xff]
    %v1363 = vld [vmem:[%s1357 + $0x28] sm:$0xff]
    %v1364 = vld [vmem:[%s1357 + $0x30] sm:$0xff]
    %v1365 = vld [vmem:[%s1357 + $0x38] sm:$0xff]
    %v1367 = vsel %vm198, %v1356, 0
    %1369 = vmatpush.msra.mxu0 0.0
    %1370 = vmatpush.msra.mxu0 0.0
    %1371 = vmatpush.msra.mxu0 0.0
    %1372 = vmatpush.msra.mxu0 0.0
    %1373 = vmatpush.msra.mxu0 0.0
    %1374 = vmatpush.msra.mxu0 0.0
    %1375 = vmatpush.msra.mxu0 0.0
    %1376 = vmatpush.msra.mxu0 0.0
    %1377 = vmatpush.msra.mxu0 %v1365
    %1378 = vmatpush.msra.mxu0 %v1364
    %1379 = vmatpush.msra.mxu0 %v1363
    %1380 = vmatpush.msra.mxu0 %v1362
    %1381 = vmatpush.msra.mxu0 %v1361
    %1382 = vmatpush.msra.mxu0 %v1360
    %1383 = vmatpush.msra.mxu0 %v1359
    %1384 = vmatpush.msra.mxu0 %v1358
    %1385 = vmatmul.f32.gmra.mxu0 %v1367
    %v1386 = vpop.f32.mrf.mxu0
    %v1387 = vadd.f32 0.0, %v1386
    %1388 = vdwg.mxu0
    %v1389 = vadd.f32 %v1354, %v1387
    %v1390 = vld [vmem:[#allocation2 + $0x3] sm:$0x1]
    %s1391 = scalar_lea.vmem %s6, 192
    %v1392 = vld [vmem:[%s1391] sm:$0xff]
    %v1393 = vld [vmem:[%s1391 + $0x8] sm:$0xff]
    %v1394 = vld [vmem:[%s1391 + $0x10] sm:$0xff]
    %v1395 = vld [vmem:[%s1391 + $0x18] sm:$0xff]
    %v1396 = vld [vmem:[%s1391 + $0x20] sm:$0xff]
    %v1397 = vld [vmem:[%s1391 + $0x28] sm:$0xff]
    %v1398 = vld [vmem:[%s1391 + $0x30] sm:$0xff]
    %v1399 = vld [vmem:[%s1391 + $0x38] sm:$0xff]
    %v1401 = vsel %vm198, %v1390, 0
    %1403 = vmatpush.msra.mxu0 0.0
    %1404 = vmatpush.msra.mxu0 0.0
    %1405 = vmatpush.msra.mxu0 0.0
    %1406 = vmatpush.msra.mxu0 0.0
    %1407 = vmatpush.msra.mxu0 0.0
    %1408 = vmatpush.msra.mxu0 0.0
    %1409 = vmatpush.msra.mxu0 0.0
    %1410 = vmatpush.msra.mxu0 0.0
    %1411 = vmatpush.msra.mxu0 %v1399
    %1412 = vmatpush.msra.mxu0 %v1398
    %1413 = vmatpush.msra.mxu0 %v1397
    %1414 = vmatpush.msra.mxu0 %v1396
    %1415 = vmatpush.msra.mxu0 %v1395
    %1416 = vmatpush.msra.mxu0 %v1394
    %1417 = vmatpush.msra.mxu0 %v1393
    %1418 = vmatpush.msra.mxu0 %v1392
    %1419 = vmatmul.f32.gmra.mxu0 %v1401
    %v1420 = vpop.f32.mrf.mxu0
    %v1421 = vadd.f32 0.0, %v1420
    %1422 = vdwg.mxu0
    %v1423 = vadd.f32 %v1389, %v1421
    %v1424 = vld [vmem:[#allocation2 + $0x4] sm:$0x1]
    %s1425 = scalar_lea.vmem %s6, 256
    %v1426 = vld [vmem:[%s1425] sm:$0xff]
    %v1427 = vld [vmem:[%s1425 + $0x8] sm:$0xff]
    %v1428 = vld [vmem:[%s1425 + $0x10] sm:$0xff]
    %v1429 = vld [vmem:[%s1425 + $0x18] sm:$0xff]
    %v1430 = vld [vmem:[%s1425 + $0x20] sm:$0xff]
    %v1431 = vld [vmem:[%s1425 + $0x28] sm:$0xff]
    %v1432 = vld [vmem:[%s1425 + $0x30] sm:$0xff]
    %v1433 = vld [vmem:[%s1425 + $0x38] sm:$0xff]
    %v1435 = vsel %vm198, %v1424, 0
    %1437 = vmatpush.msra.mxu0 0.0
    %1438 = vmatpush.msra.mxu0 0.0
    %1439 = vmatpush.msra.mxu0 0.0
    %1440 = vmatpush.msra.mxu0 0.0
    %1441 = vmatpush.msra.mxu0 0.0
    %1442 = vmatpush.msra.mxu0 0.0
    %1443 = vmatpush.msra.mxu0 0.0
    %1444 = vmatpush.msra.mxu0 0.0
    %1445 = vmatpush.msra.mxu0 %v1433
    %1446 = vmatpush.msra.mxu0 %v1432
    %1447 = vmatpush.msra.mxu0 %v1431
    %1448 = vmatpush.msra.mxu0 %v1430
    %1449 = vmatpush.msra.mxu0 %v1429
    %1450 = vmatpush.msra.mxu0 %v1428
    %1451 = vmatpush.msra.mxu0 %v1427
    %1452 = vmatpush.msra.mxu0 %v1426
    %1453 = vmatmul.f32.gmra.mxu0 %v1435
    %v1454 = vpop.f32.mrf.mxu0
    %v1455 = vadd.f32 0.0, %v1454
    %1456 = vdwg.mxu0
    %v1457 = vadd.f32 %v1423, %v1455
    %v1458 = vld [vmem:[#allocation2 + $0x5] sm:$0x1]
    %s1459 = scalar_lea.vmem %s6, 320
    %v1460 = vld [vmem:[%s1459] sm:$0xff]
    %v1461 = vld [vmem:[%s1459 + $0x8] sm:$0xff]
    %v1462 = vld [vmem:[%s1459 + $0x10] sm:$0xff]
    %v1463 = vld [vmem:[%s1459 + $0x18] sm:$0xff]
    %v1464 = vld [vmem:[%s1459 + $0x20] sm:$0xff]
    %v1465 = vld [vmem:[%s1459 + $0x28] sm:$0xff]
    %v1466 = vld [vmem:[%s1459 + $0x30] sm:$0xff]
    %v1467 = vld [vmem:[%s1459 + $0x38] sm:$0xff]
    %v1469 = vsel %vm198, %v1458, 0
    %1471 = vmatpush.msra.mxu0 0.0
    %1472 = vmatpush.msra.mxu0 0.0
    %1473 = vmatpush.msra.mxu0 0.0
    %1474 = vmatpush.msra.mxu0 0.0
    %1475 = vmatpush.msra.mxu0 0.0
    %1476 = vmatpush.msra.mxu0 0.0
    %1477 = vmatpush.msra.mxu0 0.0
    %1478 = vmatpush.msra.mxu0 0.0
    %1479 = vmatpush.msra.mxu0 %v1467
    %1480 = vmatpush.msra.mxu0 %v1466
    %1481 = vmatpush.msra.mxu0 %v1465
    %1482 = vmatpush.msra.mxu0 %v1464
    %1483 = vmatpush.msra.mxu0 %v1463
    %1484 = vmatpush.msra.mxu0 %v1462
    %1485 = vmatpush.msra.mxu0 %v1461
    %1486 = vmatpush.msra.mxu0 %v1460
    %1487 = vmatmul.f32.gmra.mxu0 %v1469
    %v1488 = vpop.f32.mrf.mxu0
    %v1489 = vadd.f32 0.0, %v1488
    %1490 = vdwg.mxu0
    %v1491 = vadd.f32 %v1457, %v1489
    %v1492 = vld [vmem:[#allocation2 + $0x6] sm:$0x1]
    %s1493 = scalar_lea.vmem %s6, 384
    %v1494 = vld [vmem:[%s1493] sm:$0xff]
    %v1495 = vld [vmem:[%s1493 + $0x8] sm:$0xff]
    %v1496 = vld [vmem:[%s1493 + $0x10] sm:$0xff]
    %v1497 = vld [vmem:[%s1493 + $0x18] sm:$0xff]
    %v1498 = vld [vmem:[%s1493 + $0x20] sm:$0xff]
    %v1499 = vld [vmem:[%s1493 + $0x28] sm:$0xff]
    %v1500 = vld [vmem:[%s1493 + $0x30] sm:$0xff]
    %v1501 = vld [vmem:[%s1493 + $0x38] sm:$0xff]
    %v1503 = vsel %vm198, %v1492, 0
    %1505 = vmatpush.msra.mxu0 0.0
    %1506 = vmatpush.msra.mxu0 0.0
    %1507 = vmatpush.msra.mxu0 0.0
    %1508 = vmatpush.msra.mxu0 0.0
    %1509 = vmatpush.msra.mxu0 0.0
    %1510 = vmatpush.msra.mxu0 0.0
    %1511 = vmatpush.msra.mxu0 0.0
    %1512 = vmatpush.msra.mxu0 0.0
    %1513 = vmatpush.msra.mxu0 %v1501
    %1514 = vmatpush.msra.mxu0 %v1500
    %1515 = vmatpush.msra.mxu0 %v1499
    %1516 = vmatpush.msra.mxu0 %v1498
    %1517 = vmatpush.msra.mxu0 %v1497
    %1518 = vmatpush.msra.mxu0 %v1496
    %1519 = vmatpush.msra.mxu0 %v1495
    %1520 = vmatpush.msra.mxu0 %v1494
    %1521 = vmatmul.f32.gmra.mxu0 %v1503
    %v1522 = vpop.f32.mrf.mxu0
    %v1523 = vadd.f32 0.0, %v1522
    %1524 = vdwg.mxu0
    %v1525 = vadd.f32 %v1491, %v1523
    %v1526 = vld [vmem:[#allocation2 + $0x7] sm:$0x1]
    %s1527 = scalar_lea.vmem %s6, 448
    %v1528 = vld [vmem:[%s1527] sm:$0xff]
    %v1529 = vld [vmem:[%s1527 + $0x8] sm:$0xff]
    %v1530 = vld [vmem:[%s1527 + $0x10] sm:$0xff]
    %v1531 = vld [vmem:[%s1527 + $0x18] sm:$0xff]
    %v1532 = vld [vmem:[%s1527 + $0x20] sm:$0xff]
    %v1533 = vld [vmem:[%s1527 + $0x28] sm:$0xff]
    %v1534 = vld [vmem:[%s1527 + $0x30] sm:$0xff]
    %v1535 = vld [vmem:[%s1527 + $0x38] sm:$0xff]
    %v1537 = vsel %vm198, %v1526, 0
    %1539 = vmatpush.msra.mxu0 0.0
    %1540 = vmatpush.msra.mxu0 0.0
    %1541 = vmatpush.msra.mxu0 0.0
    %1542 = vmatpush.msra.mxu0 0.0
    %1543 = vmatpush.msra.mxu0 0.0
    %1544 = vmatpush.msra.mxu0 0.0
    %1545 = vmatpush.msra.mxu0 0.0
    %1546 = vmatpush.msra.mxu0 0.0
    %1547 = vmatpush.msra.mxu0 %v1535
    %1548 = vmatpush.msra.mxu0 %v1534
    %1549 = vmatpush.msra.mxu0 %v1533
    %1550 = vmatpush.msra.mxu0 %v1532
    %1551 = vmatpush.msra.mxu0 %v1531
    %1552 = vmatpush.msra.mxu0 %v1530
    %1553 = vmatpush.msra.mxu0 %v1529
    %1554 = vmatpush.msra.mxu0 %v1528
    %1555 = vmatmul.f32.gmra.mxu0 %v1537
    %v1556 = vpop.f32.mrf.mxu0
    %v1557 = vadd.f32 0.0, %v1556
    %1558 = vdwg.mxu0
    %v1559 = vadd.f32 %v1525, %v1557
    %v1560 = vld [vmem:[#allocation2 + $0x8] sm:$0x1]
    %s1561 = scalar_lea.vmem %s6, 512
    %v1562 = vld [vmem:[%s1561] sm:$0xff]
    %v1563 = vld [vmem:[%s1561 + $0x8] sm:$0xff]
    %v1564 = vld [vmem:[%s1561 + $0x10] sm:$0xff]
    %v1565 = vld [vmem:[%s1561 + $0x18] sm:$0xff]
    %v1566 = vld [vmem:[%s1561 + $0x20] sm:$0xff]
    %v1567 = vld [vmem:[%s1561 + $0x28] sm:$0xff]
    %v1568 = vld [vmem:[%s1561 + $0x30] sm:$0xff]
    %v1569 = vld [vmem:[%s1561 + $0x38] sm:$0xff]
    %v1571 = vsel %vm198, %v1560, 0
    %1573 = vmatpush.msra.mxu0 0.0
    %1574 = vmatpush.msra.mxu0 0.0
    %1575 = vmatpush.msra.mxu0 0.0
    %1576 = vmatpush.msra.mxu0 0.0
    %1577 = vmatpush.msra.mxu0 0.0
    %1578 = vmatpush.msra.mxu0 0.0
    %1579 = vmatpush.msra.mxu0 0.0
    %1580 = vmatpush.msra.mxu0 0.0
    %1581 = vmatpush.msra.mxu0 %v1569
    %1582 = vmatpush.msra.mxu0 %v1568
    %1583 = vmatpush.msra.mxu0 %v1567
    %1584 = vmatpush.msra.mxu0 %v1566
    %1585 = vmatpush.msra.mxu0 %v1565
    %1586 = vmatpush.msra.mxu0 %v1564
    %1587 = vmatpush.msra.mxu0 %v1563
    %1588 = vmatpush.msra.mxu0 %v1562
    %1589 = vmatmul.f32.gmra.mxu0 %v1571
    %v1590 = vpop.f32.mrf.mxu0
    %v1591 = vadd.f32 0.0, %v1590
    %1592 = vdwg.mxu0
    %v1593 = vadd.f32 %v1559, %v1591
    %v1594 = vld [vmem:[%s7] sm:$0x1]
    %v1595 = vadd.f32 %v1593, %v1594
    %v1596 = vmax.f32 %v1595, 0.0
    %v1597 = vld [vmem:[%s8] sm:$0xff]
    %v1598 = vld [vmem:[%s8 + $0x8] sm:$0xff]
    %v1599 = vld [vmem:[%s8 + $0x10] sm:$0xff]
    %v1600 = vld [vmem:[%s8 + $0x18] sm:$0xff]
    %v1601 = vld [vmem:[%s8 + $0x20] sm:$0xff]
    %v1602 = vld [vmem:[%s8 + $0x28] sm:$0xff]
    %v1603 = vld [vmem:[%s8 + $0x30] sm:$0xff]
    %v1604 = vld [vmem:[%s8 + $0x38] sm:$0xff]
    %v1605 = vld [vmem:[%s8 + $0x40] sm:$0xff]
    %v1606 = vld [vmem:[%s8 + $0x48] sm:$0xff]
    %v1607 = vld [vmem:[%s8 + $0x50] sm:$0xff]
    %v1608 = vld [vmem:[%s8 + $0x58] sm:$0xff]
    %v1609 = vld [vmem:[%s8 + $0x60] sm:$0xff]
    %v1610 = vld [vmem:[%s8 + $0x68] sm:$0xff]
    %v1611 = vld [vmem:[%s8 + $0x70] sm:$0xff]
    %v1612 = vld [vmem:[%s8 + $0x78] sm:$0xff]
    %v1613 = vld [vmem:[%s8 + $0x80] sm:$0xff]
    %v1614 = vld [vmem:[%s8 + $0x88] sm:$0xff]
    %v1615 = vld [vmem:[%s8 + $0x90] sm:$0xff]
    %v1616 = vld [vmem:[%s8 + $0x98] sm:$0xff]
    %v1617 = vld [vmem:[%s8 + $0xa0] sm:$0xff]
    %v1618 = vld [vmem:[%s8 + $0xa8] sm:$0xff]
    %v1619 = vld [vmem:[%s8 + $0xb0] sm:$0xff]
    %v1620 = vld [vmem:[%s8 + $0xb8] sm:$0xff]
    %v1621 = vld [vmem:[%s8 + $0xc0] sm:$0xff]
    %v1622 = vld [vmem:[%s8 + $0xc8] sm:$0xff]
    %v1623 = vld [vmem:[%s8 + $0xd0] sm:$0xff]
    %v1624 = vld [vmem:[%s8 + $0xd8] sm:$0xff]
    %v1625 = vld [vmem:[%s8 + $0xe0] sm:$0xff]
    %v1626 = vld [vmem:[%s8 + $0xe8] sm:$0xff]
    %v1627 = vld [vmem:[%s8 + $0xf0] sm:$0xff]
    %v1628 = vld [vmem:[%s8 + $0xf8] sm:$0xff]
    %v1629 = vld [vmem:[%s8 + $0x100] sm:$0xff]
    %v1630 = vld [vmem:[%s8 + $0x108] sm:$0xff]
    %v1631 = vld [vmem:[%s8 + $0x110] sm:$0xff]
    %v1632 = vld [vmem:[%s8 + $0x118] sm:$0xff]
    %v1633 = vld [vmem:[%s8 + $0x120] sm:$0xff]
    %v1634 = vld [vmem:[%s8 + $0x128] sm:$0xff]
    %v1635 = vld [vmem:[%s8 + $0x130] sm:$0xff]
    %v1636 = vld [vmem:[%s8 + $0x138] sm:$0xff]
    %v1637 = vld [vmem:[%s8 + $0x140] sm:$0xff]
    %v1638 = vld [vmem:[%s8 + $0x148] sm:$0xff]
    %v1639 = vld [vmem:[%s8 + $0x150] sm:$0xff]
    %v1640 = vld [vmem:[%s8 + $0x158] sm:$0xff]
    %v1641 = vld [vmem:[%s8 + $0x160] sm:$0xff]
    %v1642 = vld [vmem:[%s8 + $0x168] sm:$0xff]
    %v1643 = vld [vmem:[%s8 + $0x170] sm:$0xff]
    %v1644 = vld [vmem:[%s8 + $0x178] sm:$0xff]
    %v1645 = vld [vmem:[%s8 + $0x180] sm:$0xff]
    %v1646 = vld [vmem:[%s8 + $0x188] sm:$0xff]
    %v1647 = vld [vmem:[%s8 + $0x190] sm:$0xff]
    %v1648 = vld [vmem:[%s8 + $0x198] sm:$0xff]
    %v1649 = vld [vmem:[%s8 + $0x1a0] sm:$0xff]
    %v1650 = vld [vmem:[%s8 + $0x1a8] sm:$0xff]
    %v1651 = vld [vmem:[%s8 + $0x1b0] sm:$0xff]
    %v1652 = vld [vmem:[%s8 + $0x1b8] sm:$0xff]
    %v1653 = vld [vmem:[%s8 + $0x1c0] sm:$0xff]
    %v1654 = vld [vmem:[%s8 + $0x1c8] sm:$0xff]
    %v1655 = vld [vmem:[%s8 + $0x1d0] sm:$0xff]
    %v1656 = vld [vmem:[%s8 + $0x1d8] sm:$0xff]
    %v1657 = vld [vmem:[%s8 + $0x1e0] sm:$0xff]
    %v1658 = vld [vmem:[%s8 + $0x1e8] sm:$0xff]
    %v1659 = vld [vmem:[%s8 + $0x1f0] sm:$0xff]
    %v1660 = vld [vmem:[%s8 + $0x1f8] sm:$0xff]
    %v1661 = vld [vmem:[%s9] sm:$0xff]
    %v1663 = vperm.slane %v1661, 0
    %v1664 = vperm.slane %v1661, 1
    %v1665 = vperm.slane %v1661, 2
    %v1666 = vperm.slane %v1661, 3
    %v1667 = vperm.slane %v1661, 4
    %v1668 = vperm.slane %v1661, 5
    %v1669 = vperm.slane %v1661, 6
    %v1670 = vperm.slane %v1661, 7
    %v1680 = vsel %vm198, %v1596, 0
    %1682 = vmatpush.msra.mxu0 0.0
    %1683 = vmatpush.msra.mxu0 0.0
    %1684 = vmatpush.msra.mxu0 0.0
    %1685 = vmatpush.msra.mxu0 0.0
    %1686 = vmatpush.msra.mxu0 0.0
    %1687 = vmatpush.msra.mxu0 0.0
    %1688 = vmatpush.msra.mxu0 0.0
    %1689 = vmatpush.msra.mxu0 0.0
    %1690 = vmatpush.msra.mxu0 %v1653
    %1691 = vmatpush.msra.mxu0 %v1645
    %1692 = vmatpush.msra.mxu0 %v1637
    %1693 = vmatpush.msra.mxu0 %v1629
    %1694 = vmatpush.msra.mxu0 %v1621
    %1695 = vmatpush.msra.mxu0 %v1613
    %1696 = vmatpush.msra.mxu0 %v1605
    %1697 = vmatpush.msra.mxu0 %v1597
    %1698 = vmatmul.f32.gmra.mxu0 %v1680
    %v1699 = vpop.f32.mrf.mxu0
    %v1700 = vadd.f32 %v1663, %v1699
    %1701 = vdwg.mxu0
    %1702 = vmatpush.msra.mxu0 0.0
    %1703 = vmatpush.msra.mxu0 0.0
    %1704 = vmatpush.msra.mxu0 0.0
    %1705 = vmatpush.msra.mxu0 0.0
    %1706 = vmatpush.msra.mxu0 0.0
    %1707 = vmatpush.msra.mxu0 0.0
    %1708 = vmatpush.msra.mxu0 0.0
    %1709 = vmatpush.msra.mxu0 0.0
    %1710 = vmatpush.msra.mxu0 %v1654
    %1711 = vmatpush.msra.mxu0 %v1646
    %1712 = vmatpush.msra.mxu0 %v1638
    %1713 = vmatpush.msra.mxu0 %v1630
    %1714 = vmatpush.msra.mxu0 %v1622
    %1715 = vmatpush.msra.mxu0 %v1614
    %1716 = vmatpush.msra.mxu0 %v1606
    %1717 = vmatpush.msra.mxu0 %v1598
    %1718 = vmatmul.f32.gmra.mxu0 %v1680
    %v1719 = vpop.f32.mrf.mxu0
    %v1720 = vadd.f32 %v1664, %v1719
    %1721 = vdwg.mxu0
    %1722 = vmatpush.msra.mxu0 0.0
    %1723 = vmatpush.msra.mxu0 0.0
    %1724 = vmatpush.msra.mxu0 0.0
    %1725 = vmatpush.msra.mxu0 0.0
    %1726 = vmatpush.msra.mxu0 0.0
    %1727 = vmatpush.msra.mxu0 0.0
    %1728 = vmatpush.msra.mxu0 0.0
    %1729 = vmatpush.msra.mxu0 0.0
    %1730 = vmatpush.msra.mxu0 %v1655
    %1731 = vmatpush.msra.mxu0 %v1647
    %1732 = vmatpush.msra.mxu0 %v1639
    %1733 = vmatpush.msra.mxu0 %v1631
    %1734 = vmatpush.msra.mxu0 %v1623
    %1735 = vmatpush.msra.mxu0 %v1615
    %1736 = vmatpush.msra.mxu0 %v1607
    %1737 = vmatpush.msra.mxu0 %v1599
    %1738 = vmatmul.f32.gmra.mxu0 %v1680
    %v1739 = vpop.f32.mrf.mxu0
    %v1740 = vadd.f32 %v1665, %v1739
    %1741 = vdwg.mxu0
    %1742 = vmatpush.msra.mxu0 0.0
    %1743 = vmatpush.msra.mxu0 0.0
    %1744 = vmatpush.msra.mxu0 0.0
    %1745 = vmatpush.msra.mxu0 0.0
    %1746 = vmatpush.msra.mxu0 0.0
    %1747 = vmatpush.msra.mxu0 0.0
    %1748 = vmatpush.msra.mxu0 0.0
    %1749 = vmatpush.msra.mxu0 0.0
    %1750 = vmatpush.msra.mxu0 %v1656
    %1751 = vmatpush.msra.mxu0 %v1648
    %1752 = vmatpush.msra.mxu0 %v1640
    %1753 = vmatpush.msra.mxu0 %v1632
    %1754 = vmatpush.msra.mxu0 %v1624
    %1755 = vmatpush.msra.mxu0 %v1616
    %1756 = vmatpush.msra.mxu0 %v1608
    %1757 = vmatpush.msra.mxu0 %v1600
    %1758 = vmatmul.f32.gmra.mxu0 %v1680
    %v1759 = vpop.f32.mrf.mxu0
    %v1760 = vadd.f32 %v1666, %v1759
    %1761 = vdwg.mxu0
    %1762 = vmatpush.msra.mxu0 0.0
    %1763 = vmatpush.msra.mxu0 0.0
    %1764 = vmatpush.msra.mxu0 0.0
    %1765 = vmatpush.msra.mxu0 0.0
    %1766 = vmatpush.msra.mxu0 0.0
    %1767 = vmatpush.msra.mxu0 0.0
    %1768 = vmatpush.msra.mxu0 0.0
    %1769 = vmatpush.msra.mxu0 0.0
    %1770 = vmatpush.msra.mxu0 %v1657
    %1771 = vmatpush.msra.mxu0 %v1649
    %1772 = vmatpush.msra.mxu0 %v1641
    %1773 = vmatpush.msra.mxu0 %v1633
    %1774 = vmatpush.msra.mxu0 %v1625
    %1775 = vmatpush.msra.mxu0 %v1617
    %1776 = vmatpush.msra.mxu0 %v1609
    %1777 = vmatpush.msra.mxu0 %v1601
    %1778 = vmatmul.f32.gmra.mxu0 %v1680
    %v1779 = vpop.f32.mrf.mxu0
    %v1780 = vadd.f32 %v1667, %v1779
    %1781 = vdwg.mxu0
    %1782 = vmatpush.msra.mxu0 0.0
    %1783 = vmatpush.msra.mxu0 0.0
    %1784 = vmatpush.msra.mxu0 0.0
    %1785 = vmatpush.msra.mxu0 0.0
    %1786 = vmatpush.msra.mxu0 0.0
    %1787 = vmatpush.msra.mxu0 0.0
    %1788 = vmatpush.msra.mxu0 0.0
    %1789 = vmatpush.msra.mxu0 0.0
    %1790 = vmatpush.msra.mxu0 %v1658
    %1791 = vmatpush.msra.mxu0 %v1650
    %1792 = vmatpush.msra.mxu0 %v1642
    %1793 = vmatpush.msra.mxu0 %v1634
    %1794 = vmatpush.msra.mxu0 %v1626
    %1795 = vmatpush.msra.mxu0 %v1618
    %1796 = vmatpush.msra.mxu0 %v1610
    %1797 = vmatpush.msra.mxu0 %v1602
    %1798 = vmatmul.f32.gmra.mxu0 %v1680
    %v1799 = vpop.f32.mrf.mxu0
    %v1800 = vadd.f32 %v1668, %v1799
    %1801 = vdwg.mxu0
    %1802 = vmatpush.msra.mxu0 0.0
    %1803 = vmatpush.msra.mxu0 0.0
    %1804 = vmatpush.msra.mxu0 0.0
    %1805 = vmatpush.msra.mxu0 0.0
    %1806 = vmatpush.msra.mxu0 0.0
    %1807 = vmatpush.msra.mxu0 0.0
    %1808 = vmatpush.msra.mxu0 0.0
    %1809 = vmatpush.msra.mxu0 0.0
    %1810 = vmatpush.msra.mxu0 %v1659
    %1811 = vmatpush.msra.mxu0 %v1651
    %1812 = vmatpush.msra.mxu0 %v1643
    %1813 = vmatpush.msra.mxu0 %v1635
    %1814 = vmatpush.msra.mxu0 %v1627
    %1815 = vmatpush.msra.mxu0 %v1619
    %1816 = vmatpush.msra.mxu0 %v1611
    %1817 = vmatpush.msra.mxu0 %v1603
    %1818 = vmatmul.f32.gmra.mxu0 %v1680
    %v1819 = vpop.f32.mrf.mxu0
    %v1820 = vadd.f32 %v1669, %v1819
    %1821 = vdwg.mxu0
    %1822 = vmatpush.msra.mxu0 0.0
    %1823 = vmatpush.msra.mxu0 0.0
    %1824 = vmatpush.msra.mxu0 0.0
    %1825 = vmatpush.msra.mxu0 0.0
    %1826 = vmatpush.msra.mxu0 0.0
    %1827 = vmatpush.msra.mxu0 0.0
    %1828 = vmatpush.msra.mxu0 0.0
    %1829 = vmatpush.msra.mxu0 0.0
    %1830 = vmatpush.msra.mxu0 %v1660
    %1831 = vmatpush.msra.mxu0 %v1652
    %1832 = vmatpush.msra.mxu0 %v1644
    %1833 = vmatpush.msra.mxu0 %v1636
    %1834 = vmatpush.msra.mxu0 %v1628
    %1835 = vmatpush.msra.mxu0 %v1620
    %1836 = vmatpush.msra.mxu0 %v1612
    %1837 = vmatpush.msra.mxu0 %v1604
    %1838 = vmatmul.f32.gmra.mxu0 %v1680
    %v1839 = vpop.f32.mrf.mxu0
    %v1840 = vadd.f32 %v1670, %v1839
    %1841 = vdwg.mxu0
    %v1842 = vmax.f32 %v1700, 0.0
    %v1843 = vmax.f32 %v1720, 0.0
    %v1844 = vmax.f32 %v1740, 0.0
    %v1845 = vmax.f32 %v1760, 0.0
    %v1846 = vmax.f32 %v1780, 0.0
    %v1847 = vmax.f32 %v1800, 0.0
    %v1848 = vmax.f32 %v1820, 0.0
    %v1849 = vmax.f32 %v1840, 0.0
    %v1850 = vld [vmem:[%s10] sm:$0xff]
    %v1851 = vld [vmem:[%s10 + $0x8] sm:$0xff]
    %v1852 = vld [vmem:[%s10 + $0x10] sm:$0xff]
    %v1853 = vld [vmem:[%s10 + $0x18] sm:$0xff]
    %v1854 = vld [vmem:[%s10 + $0x20] sm:$0xff]
    %v1855 = vld [vmem:[%s10 + $0x28] sm:$0xff]
    %v1856 = vld [vmem:[%s10 + $0x30] sm:$0xff]
    %v1857 = vld [vmem:[%s10 + $0x38] sm:$0xff]
    %v1858 = vld [vmem:[%s10 + $0x40] sm:$0xff]
    %v1859 = vld [vmem:[%s10 + $0x48] sm:$0xff]
    %v1860 = vld [vmem:[%s10 + $0x50] sm:$0xff]
    %v1861 = vld [vmem:[%s10 + $0x58] sm:$0xff]
    %v1862 = vld [vmem:[%s10 + $0x60] sm:$0xff]
    %v1863 = vld [vmem:[%s10 + $0x68] sm:$0xff]
    %v1864 = vld [vmem:[%s10 + $0x70] sm:$0xff]
    %v1865 = vld [vmem:[%s10 + $0x78] sm:$0xff]
    %v1866 = vld [vmem:[%s10 + $0x80] sm:$0xff]
    %v1867 = vld [vmem:[%s10 + $0x88] sm:$0xff]
    %v1868 = vld [vmem:[%s10 + $0x90] sm:$0xff]
    %v1869 = vld [vmem:[%s10 + $0x98] sm:$0xff]
    %v1870 = vld [vmem:[%s10 + $0xa0] sm:$0xff]
    %v1871 = vld [vmem:[%s10 + $0xa8] sm:$0xff]
    %v1872 = vld [vmem:[%s10 + $0xb0] sm:$0xff]
    %v1873 = vld [vmem:[%s10 + $0xb8] sm:$0xff]
    %v1874 = vld [vmem:[%s10 + $0xc0] sm:$0xff]
    %v1875 = vld [vmem:[%s10 + $0xc8] sm:$0xff]
    %v1876 = vld [vmem:[%s10 + $0xd0] sm:$0xff]
    %v1877 = vld [vmem:[%s10 + $0xd8] sm:$0xff]
    %v1878 = vld [vmem:[%s10 + $0xe0] sm:$0xff]
    %v1879 = vld [vmem:[%s10 + $0xe8] sm:$0xff]
    %v1880 = vld [vmem:[%s10 + $0xf0] sm:$0xff]
    %v1881 = vld [vmem:[%s10 + $0xf8] sm:$0xff]
    %v1882 = vld [vmem:[%s10 + $0x100] sm:$0xff]
    %v1883 = vld [vmem:[%s10 + $0x108] sm:$0xff]
    %v1884 = vld [vmem:[%s10 + $0x110] sm:$0xff]
    %v1885 = vld [vmem:[%s10 + $0x118] sm:$0xff]
    %v1886 = vld [vmem:[%s10 + $0x120] sm:$0xff]
    %v1887 = vld [vmem:[%s10 + $0x128] sm:$0xff]
    %v1888 = vld [vmem:[%s10 + $0x130] sm:$0xff]
    %v1889 = vld [vmem:[%s10 + $0x138] sm:$0xff]
    %v1890 = vld [vmem:[%s10 + $0x140] sm:$0xff]
    %v1891 = vld [vmem:[%s10 + $0x148] sm:$0xff]
    %v1892 = vld [vmem:[%s10 + $0x150] sm:$0xff]
    %v1893 = vld [vmem:[%s10 + $0x158] sm:$0xff]
    %v1894 = vld [vmem:[%s10 + $0x160] sm:$0xff]
    %v1895 = vld [vmem:[%s10 + $0x168] sm:$0xff]
    %v1896 = vld [vmem:[%s10 + $0x170] sm:$0xff]
    %v1897 = vld [vmem:[%s10 + $0x178] sm:$0xff]
    %v1898 = vld [vmem:[%s10 + $0x180] sm:$0xff]
    %v1899 = vld [vmem:[%s10 + $0x188] sm:$0xff]
    %v1900 = vld [vmem:[%s10 + $0x190] sm:$0xff]
    %v1901 = vld [vmem:[%s10 + $0x198] sm:$0xff]
    %v1902 = vld [vmem:[%s10 + $0x1a0] sm:$0xff]
    %v1903 = vld [vmem:[%s10 + $0x1a8] sm:$0xff]
    %v1904 = vld [vmem:[%s10 + $0x1b0] sm:$0xff]
    %v1905 = vld [vmem:[%s10 + $0x1b8] sm:$0xff]
    %v1906 = vld [vmem:[%s10 + $0x1c0] sm:$0xff]
    %v1907 = vld [vmem:[%s10 + $0x1c8] sm:$0xff]
    %v1908 = vld [vmem:[%s10 + $0x1d0] sm:$0xff]
    %v1909 = vld [vmem:[%s10 + $0x1d8] sm:$0xff]
    %v1910 = vld [vmem:[%s10 + $0x1e0] sm:$0xff]
    %v1911 = vld [vmem:[%s10 + $0x1e8] sm:$0xff]
    %v1912 = vld [vmem:[%s10 + $0x1f0] sm:$0xff]
    %v1913 = vld [vmem:[%s10 + $0x1f8] sm:$0xff]
    %v1914 = vld [vmem:[%s11] sm:$0x1]
    %1915 = vmatpush.msra.mxu0 %v1865
    %1916 = vmatpush.msra.mxu0 %v1864
    %1917 = vmatpush.msra.mxu0 %v1863
    %1918 = vmatpush.msra.mxu0 %v1862
    %1919 = vmatpush.msra.mxu0 %v1861
    %1920 = vmatpush.msra.mxu0 %v1860
    %1921 = vmatpush.msra.mxu0 %v1859
    %1922 = vmatpush.msra.mxu0 %v1858
    %1923 = vmatpush.msra.mxu0 %v1857
    %1924 = vmatpush.msra.mxu0 %v1856
    %1925 = vmatpush.msra.mxu0 %v1855
    %1926 = vmatpush.msra.mxu0 %v1854
    %1927 = vmatpush.msra.mxu0 %v1853
    %1928 = vmatpush.msra.mxu0 %v1852
    %1929 = vmatpush.msra.mxu0 %v1851
    %1930 = vmatpush.msra.mxu0 %v1850
    %1931 = vmatmul.f32.gmra.mxu0 %v1842
    %v1932 = vpop.f32.mrf.mxu0
    %v1933 = vadd.f32 %v1914, %v1932
    %1934 = vdwg.mxu0
    %1935 = vmatpush.msra.mxu0 %v1881
    %1936 = vmatpush.msra.mxu0 %v1880
    %1937 = vmatpush.msra.mxu0 %v1879
    %1938 = vmatpush.msra.mxu0 %v1878
    %1939 = vmatpush.msra.mxu0 %v1877
    %1940 = vmatpush.msra.mxu0 %v1876
    %1941 = vmatpush.msra.mxu0 %v1875
    %1942 = vmatpush.msra.mxu0 %v1874
    %1943 = vmatpush.msra.mxu0 %v1873
    %1944 = vmatpush.msra.mxu0 %v1872
    %1945 = vmatpush.msra.mxu0 %v1871
    %1946 = vmatpush.msra.mxu0 %v1870
    %1947 = vmatpush.msra.mxu0 %v1869
    %1948 = vmatpush.msra.mxu0 %v1868
    %1949 = vmatpush.msra.mxu0 %v1867
    %1950 = vmatpush.msra.mxu0 %v1866
    %1951 = vmatmul.f32.gmra.mxu0 %v1843
    %v1952 = vpop.f32.mrf.mxu0
    %v1953 = vadd.f32 %v1933, %v1952
    %1954 = vdwg.mxu0
    %1955 = vmatpush.msra.mxu0 %v1897
    %1956 = vmatpush.msra.mxu0 %v1896
    %1957 = vmatpush.msra.mxu0 %v1895
    %1958 = vmatpush.msra.mxu0 %v1894
    %1959 = vmatpush.msra.mxu0 %v1893
    %1960 = vmatpush.msra.mxu0 %v1892
    %1961 = vmatpush.msra.mxu0 %v1891
    %1962 = vmatpush.msra.mxu0 %v1890
    %1963 = vmatpush.msra.mxu0 %v1889
    %1964 = vmatpush.msra.mxu0 %v1888
    %1965 = vmatpush.msra.mxu0 %v1887
    %1966 = vmatpush.msra.mxu0 %v1886
    %1967 = vmatpush.msra.mxu0 %v1885
    %1968 = vmatpush.msra.mxu0 %v1884
    %1969 = vmatpush.msra.mxu0 %v1883
    %1970 = vmatpush.msra.mxu0 %v1882
    %1971 = vmatmul.f32.gmra.mxu0 %v1844
    %v1972 = vpop.f32.mrf.mxu0
    %v1973 = vadd.f32 %v1953, %v1972
    %1974 = vdwg.mxu0
    %1975 = vmatpush.msra.mxu0 %v1913
    %1976 = vmatpush.msra.mxu0 %v1912
    %1977 = vmatpush.msra.mxu0 %v1911
    %1978 = vmatpush.msra.mxu0 %v1910
    %1979 = vmatpush.msra.mxu0 %v1909
    %1980 = vmatpush.msra.mxu0 %v1908
    %1981 = vmatpush.msra.mxu0 %v1907
    %1982 = vmatpush.msra.mxu0 %v1906
    %1983 = vmatpush.msra.mxu0 %v1905
    %1984 = vmatpush.msra.mxu0 %v1904
    %1985 = vmatpush.msra.mxu0 %v1903
    %1986 = vmatpush.msra.mxu0 %v1902
    %1987 = vmatpush.msra.mxu0 %v1901
    %1988 = vmatpush.msra.mxu0 %v1900
    %1989 = vmatpush.msra.mxu0 %v1899
    %1990 = vmatpush.msra.mxu0 %v1898
    %1991 = vmatmul.f32.gmra.mxu0 %v1845
    %v1992 = vpop.f32.mrf.mxu0
    %v1993 = vadd.f32 %v1973, %v1992
    %1994 = vdwg.mxu0
    %vm1995 = vcmask 409600
    %1996 = vst.msk [vmem:[#allocation3] sm:$0x1] %vm1995, %v1993
    %v1997 = vld [vmem:[%s12] sm:$0xff]
    %v1998 = vld [vmem:[%s12 + $0x8] sm:$0xff]
    %v1999 = vld [vmem:[%s12 + $0x10] sm:$0xff]
    %v2000 = vld [vmem:[%s12 + $0x18] sm:$0xff]
    %v2001 = vld [vmem:[%s12 + $0x20] sm:$0xff]
    %v2002 = vld [vmem:[%s12 + $0x28] sm:$0xff]
    %v2003 = vld [vmem:[%s12 + $0x30] sm:$0xff]
    %v2004 = vld [vmem:[%s12 + $0x38] sm:$0xff]
    %v2005 = vld [vmem:[%s12 + $0x40] sm:$0xff]
    %v2006 = vld [vmem:[%s12 + $0x48] sm:$0xff]
    %v2007 = vld [vmem:[%s12 + $0x50] sm:$0xff]
    %v2008 = vld [vmem:[%s12 + $0x58] sm:$0xff]
    %v2009 = vld [vmem:[%s12 + $0x60] sm:$0xff]
    %v2010 = vld [vmem:[%s12 + $0x68] sm:$0xff]
    %v2011 = vld [vmem:[%s12 + $0x70] sm:$0xff]
    %v2012 = vld [vmem:[%s12 + $0x78] sm:$0xff]
    %v2013 = vld [vmem:[%s12 + $0x80] sm:$0xff]
    %v2014 = vld [vmem:[%s12 + $0x88] sm:$0xff]
    %v2015 = vld [vmem:[%s12 + $0x90] sm:$0xff]
    %v2016 = vld [vmem:[%s12 + $0x98] sm:$0xff]
    %v2017 = vld [vmem:[%s12 + $0xa0] sm:$0xff]
    %v2018 = vld [vmem:[%s12 + $0xa8] sm:$0xff]
    %v2019 = vld [vmem:[%s12 + $0xb0] sm:$0xff]
    %v2020 = vld [vmem:[%s12 + $0xb8] sm:$0xff]
    %v2021 = vld [vmem:[%s12 + $0xc0] sm:$0xff]
    %v2022 = vld [vmem:[%s12 + $0xc8] sm:$0xff]
    %v2023 = vld [vmem:[%s12 + $0xd0] sm:$0xff]
    %v2024 = vld [vmem:[%s12 + $0xd8] sm:$0xff]
    %v2025 = vld [vmem:[%s12 + $0xe0] sm:$0xff]
    %v2026 = vld [vmem:[%s12 + $0xe8] sm:$0xff]
    %v2027 = vld [vmem:[%s12 + $0xf0] sm:$0xff]
    %v2028 = vld [vmem:[%s12 + $0xf8] sm:$0xff]
    %v2029 = vld [vmem:[%s12 + $0x100] sm:$0xff]
    %v2030 = vld [vmem:[%s12 + $0x108] sm:$0xff]
    %v2031 = vld [vmem:[%s12 + $0x110] sm:$0xff]
    %v2032 = vld [vmem:[%s12 + $0x118] sm:$0xff]
    %v2033 = vld [vmem:[%s12 + $0x120] sm:$0xff]
    %v2034 = vld [vmem:[%s12 + $0x128] sm:$0xff]
    %v2035 = vld [vmem:[%s12 + $0x130] sm:$0xff]
    %v2036 = vld [vmem:[%s12 + $0x138] sm:$0xff]
    %v2037 = vld [vmem:[%s12 + $0x140] sm:$0xff]
    %v2038 = vld [vmem:[%s12 + $0x148] sm:$0xff]
    %v2039 = vld [vmem:[%s12 + $0x150] sm:$0xff]
    %v2040 = vld [vmem:[%s12 + $0x158] sm:$0xff]
    %v2041 = vld [vmem:[%s12 + $0x160] sm:$0xff]
    %v2042 = vld [vmem:[%s12 + $0x168] sm:$0xff]
    %v2043 = vld [vmem:[%s12 + $0x170] sm:$0xff]
    %v2044 = vld [vmem:[%s12 + $0x178] sm:$0xff]
    %v2045 = vld [vmem:[%s12 + $0x180] sm:$0xff]
    %v2046 = vld [vmem:[%s12 + $0x188] sm:$0xff]
    %v2047 = vld [vmem:[%s12 + $0x190] sm:$0xff]
    %v2048 = vld [vmem:[%s12 + $0x198] sm:$0xff]
    %v2049 = vld [vmem:[%s12 + $0x1a0] sm:$0xff]
    %v2050 = vld [vmem:[%s12 + $0x1a8] sm:$0xff]
    %v2051 = vld [vmem:[%s12 + $0x1b0] sm:$0xff]
    %v2052 = vld [vmem:[%s12 + $0x1b8] sm:$0xff]
    %v2053 = vld [vmem:[%s12 + $0x1c0] sm:$0xff]
    %v2054 = vld [vmem:[%s12 + $0x1c8] sm:$0xff]
    %v2055 = vld [vmem:[%s12 + $0x1d0] sm:$0xff]
    %v2056 = vld [vmem:[%s12 + $0x1d8] sm:$0xff]
    %v2057 = vld [vmem:[%s12 + $0x1e0] sm:$0xff]
    %v2058 = vld [vmem:[%s12 + $0x1e8] sm:$0xff]
    %v2059 = vld [vmem:[%s12 + $0x1f0] sm:$0xff]
    %v2060 = vld [vmem:[%s12 + $0x1f8] sm:$0xff]
    %v2061 = vld [vmem:[%s13] sm:$0x1]
    %2062 = vmatpush.msra.mxu0 %v2012
    %2063 = vmatpush.msra.mxu0 %v2011
    %2064 = vmatpush.msra.mxu0 %v2010
    %2065 = vmatpush.msra.mxu0 %v2009
    %2066 = vmatpush.msra.mxu0 %v2008
    %2067 = vmatpush.msra.mxu0 %v2007
    %2068 = vmatpush.msra.mxu0 %v2006
    %2069 = vmatpush.msra.mxu0 %v2005
    %2070 = vmatpush.msra.mxu0 %v2004
    %2071 = vmatpush.msra.mxu0 %v2003
    %2072 = vmatpush.msra.mxu0 %v2002
    %2073 = vmatpush.msra.mxu0 %v2001
    %2074 = vmatpush.msra.mxu0 %v2000
    %2075 = vmatpush.msra.mxu0 %v1999
    %2076 = vmatpush.msra.mxu0 %v1998
    %2077 = vmatpush.msra.mxu0 %v1997
    %2078 = vmatmul.f32.gmra.mxu0 %v1846
    %v2079 = vpop.f32.mrf.mxu0
    %v2080 = vadd.f32 %v2061, %v2079
    %2081 = vdwg.mxu0
    %2082 = vmatpush.msra.mxu0 %v2028
    %2083 = vmatpush.msra.mxu0 %v2027
    %2084 = vmatpush.msra.mxu0 %v2026
    %2085 = vmatpush.msra.mxu0 %v2025
    %2086 = vmatpush.msra.mxu0 %v2024
    %2087 = vmatpush.msra.mxu0 %v2023
    %2088 = vmatpush.msra.mxu0 %v2022
    %2089 = vmatpush.msra.mxu0 %v2021
    %2090 = vmatpush.msra.mxu0 %v2020
    %2091 = vmatpush.msra.mxu0 %v2019
    %2092 = vmatpush.msra.mxu0 %v2018
    %2093 = vmatpush.msra.mxu0 %v2017
    %2094 = vmatpush.msra.mxu0 %v2016
    %2095 = vmatpush.msra.mxu0 %v2015
    %2096 = vmatpush.msra.mxu0 %v2014
    %2097 = vmatpush.msra.mxu0 %v2013
    %2098 = vmatmul.f32.gmra.mxu0 %v1847
    %v2099 = vpop.f32.mrf.mxu0
    %v2100 = vadd.f32 %v2080, %v2099
    %2101 = vdwg.mxu0
    %2102 = vmatpush.msra.mxu0 %v2044
    %2103 = vmatpush.msra.mxu0 %v2043
    %2104 = vmatpush.msra.mxu0 %v2042
    %2105 = vmatpush.msra.mxu0 %v2041
    %2106 = vmatpush.msra.mxu0 %v2040
    %2107 = vmatpush.msra.mxu0 %v2039
    %2108 = vmatpush.msra.mxu0 %v2038
    %2109 = vmatpush.msra.mxu0 %v2037
    %2110 = vmatpush.msra.mxu0 %v2036
    %2111 = vmatpush.msra.mxu0 %v2035
    %2112 = vmatpush.msra.mxu0 %v2034
    %2113 = vmatpush.msra.mxu0 %v2033
    %2114 = vmatpush.msra.mxu0 %v2032
    %2115 = vmatpush.msra.mxu0 %v2031
    %2116 = vmatpush.msra.mxu0 %v2030
    %2117 = vmatpush.msra.mxu0 %v2029
    %2118 = vmatmul.f32.gmra.mxu0 %v1848
    %v2119 = vpop.f32.mrf.mxu0
    %v2120 = vadd.f32 %v2100, %v2119
    %2121 = vdwg.mxu0
    %2122 = vmatpush.msra.mxu0 %v2060
    %2123 = vmatpush.msra.mxu0 %v2059
    %2124 = vmatpush.msra.mxu0 %v2058
    %2125 = vmatpush.msra.mxu0 %v2057
    %2126 = vmatpush.msra.mxu0 %v2056
    %2127 = vmatpush.msra.mxu0 %v2055
    %2128 = vmatpush.msra.mxu0 %v2054
    %2129 = vmatpush.msra.mxu0 %v2053
    %2130 = vmatpush.msra.mxu0 %v2052
    %2131 = vmatpush.msra.mxu0 %v2051
    %2132 = vmatpush.msra.mxu0 %v2050
    %2133 = vmatpush.msra.mxu0 %v2049
    %2134 = vmatpush.msra.mxu0 %v2048
    %2135 = vmatpush.msra.mxu0 %v2047
    %2136 = vmatpush.msra.mxu0 %v2046
    %2137 = vmatpush.msra.mxu0 %v2045
    %2138 = vmatmul.f32.gmra.mxu0 %v1849
    %v2139 = vpop.f32.mrf.mxu0
    %v2140 = vadd.f32 %v2120, %v2139
    %2141 = vdwg.mxu0
    %2142 = vst.msk [vmem:[#allocation4] sm:$0x1] %vm1995, %v2140
    %s2143 = scalar_lea.vmem %s10, 512
    %v2144 = vld [vmem:[%s2143] sm:$0xff]
    %v2145 = vld [vmem:[%s2143 + $0x8] sm:$0xff]
    %v2146 = vld [vmem:[%s2143 + $0x10] sm:$0xff]
    %v2147 = vld [vmem:[%s2143 + $0x18] sm:$0xff]
    %v2148 = vld [vmem:[%s2143 + $0x20] sm:$0xff]
    %v2149 = vld [vmem:[%s2143 + $0x28] sm:$0xff]
    %v2150 = vld [vmem:[%s2143 + $0x30] sm:$0xff]
    %v2151 = vld [vmem:[%s2143 + $0x38] sm:$0xff]
    %v2152 = vld [vmem:[%s2143 + $0x40] sm:$0xff]
    %v2153 = vld [vmem:[%s2143 + $0x48] sm:$0xff]
    %v2154 = vld [vmem:[%s2143 + $0x50] sm:$0xff]
    %v2155 = vld [vmem:[%s2143 + $0x58] sm:$0xff]
    %v2156 = vld [vmem:[%s2143 + $0x60] sm:$0xff]
    %v2157 = vld [vmem:[%s2143 + $0x68] sm:$0xff]
    %v2158 = vld [vmem:[%s2143 + $0x70] sm:$0xff]
    %v2159 = vld [vmem:[%s2143 + $0x78] sm:$0xff]
    %v2160 = vld [vmem:[%s2143 + $0x80] sm:$0xff]
    %v2161 = vld [vmem:[%s2143 + $0x88] sm:$0xff]
    %v2162 = vld [vmem:[%s2143 + $0x90] sm:$0xff]
    %v2163 = vld [vmem:[%s2143 + $0x98] sm:$0xff]
    %v2164 = vld [vmem:[%s2143 + $0xa0] sm:$0xff]
    %v2165 = vld [vmem:[%s2143 + $0xa8] sm:$0xff]
    %v2166 = vld [vmem:[%s2143 + $0xb0] sm:$0xff]
    %v2167 = vld [vmem:[%s2143 + $0xb8] sm:$0xff]
    %v2168 = vld [vmem:[%s2143 + $0xc0] sm:$0xff]
    %v2169 = vld [vmem:[%s2143 + $0xc8] sm:$0xff]
    %v2170 = vld [vmem:[%s2143 + $0xd0] sm:$0xff]
    %v2171 = vld [vmem:[%s2143 + $0xd8] sm:$0xff]
    %v2172 = vld [vmem:[%s2143 + $0xe0] sm:$0xff]
    %v2173 = vld [vmem:[%s2143 + $0xe8] sm:$0xff]
    %v2174 = vld [vmem:[%s2143 + $0xf0] sm:$0xff]
    %v2175 = vld [vmem:[%s2143 + $0xf8] sm:$0xff]
    %v2176 = vld [vmem:[%s2143 + $0x100] sm:$0xff]
    %v2177 = vld [vmem:[%s2143 + $0x108] sm:$0xff]
    %v2178 = vld [vmem:[%s2143 + $0x110] sm:$0xff]
    %v2179 = vld [vmem:[%s2143 + $0x118] sm:$0xff]
    %v2180 = vld [vmem:[%s2143 + $0x120] sm:$0xff]
    %v2181 = vld [vmem:[%s2143 + $0x128] sm:$0xff]
    %v2182 = vld [vmem:[%s2143 + $0x130] sm:$0xff]
    %v2183 = vld [vmem:[%s2143 + $0x138] sm:$0xff]
    %v2184 = vld [vmem:[%s2143 + $0x140] sm:$0xff]
    %v2185 = vld [vmem:[%s2143 + $0x148] sm:$0xff]
    %v2186 = vld [vmem:[%s2143 + $0x150] sm:$0xff]
    %v2187 = vld [vmem:[%s2143 + $0x158] sm:$0xff]
    %v2188 = vld [vmem:[%s2143 + $0x160] sm:$0xff]
    %v2189 = vld [vmem:[%s2143 + $0x168] sm:$0xff]
    %v2190 = vld [vmem:[%s2143 + $0x170] sm:$0xff]
    %v2191 = vld [vmem:[%s2143 + $0x178] sm:$0xff]
    %v2192 = vld [vmem:[%s2143 + $0x180] sm:$0xff]
    %v2193 = vld [vmem:[%s2143 + $0x188] sm:$0xff]
    %v2194 = vld [vmem:[%s2143 + $0x190] sm:$0xff]
    %v2195 = vld [vmem:[%s2143 + $0x198] sm:$0xff]
    %v2196 = vld [vmem:[%s2143 + $0x1a0] sm:$0xff]
    %v2197 = vld [vmem:[%s2143 + $0x1a8] sm:$0xff]
    %v2198 = vld [vmem:[%s2143 + $0x1b0] sm:$0xff]
    %v2199 = vld [vmem:[%s2143 + $0x1b8] sm:$0xff]
    %v2200 = vld [vmem:[%s2143 + $0x1c0] sm:$0xff]
    %v2201 = vld [vmem:[%s2143 + $0x1c8] sm:$0xff]
    %v2202 = vld [vmem:[%s2143 + $0x1d0] sm:$0xff]
    %v2203 = vld [vmem:[%s2143 + $0x1d8] sm:$0xff]
    %v2204 = vld [vmem:[%s2143 + $0x1e0] sm:$0xff]
    %v2205 = vld [vmem:[%s2143 + $0x1e8] sm:$0xff]
    %v2206 = vld [vmem:[%s2143 + $0x1f0] sm:$0xff]
    %v2207 = vld [vmem:[%s2143 + $0x1f8] sm:$0xff]
    %v2208 = vld [vmem:[%s11 + $0x1] sm:$0x1]
    %2209 = vmatpush.msra.mxu0 %v2159
    %2210 = vmatpush.msra.mxu0 %v2158
    %2211 = vmatpush.msra.mxu0 %v2157
    %2212 = vmatpush.msra.mxu0 %v2156
    %2213 = vmatpush.msra.mxu0 %v2155
    %2214 = vmatpush.msra.mxu0 %v2154
    %2215 = vmatpush.msra.mxu0 %v2153
    %2216 = vmatpush.msra.mxu0 %v2152
    %2217 = vmatpush.msra.mxu0 %v2151
    %2218 = vmatpush.msra.mxu0 %v2150
    %2219 = vmatpush.msra.mxu0 %v2149
    %2220 = vmatpush.msra.mxu0 %v2148
    %2221 = vmatpush.msra.mxu0 %v2147
    %2222 = vmatpush.msra.mxu0 %v2146
    %2223 = vmatpush.msra.mxu0 %v2145
    %2224 = vmatpush.msra.mxu0 %v2144
    %2225 = vmatmul.f32.gmra.mxu0 %v1842
    %v2226 = vpop.f32.mrf.mxu0
    %v2227 = vadd.f32 %v2208, %v2226
    %2228 = vdwg.mxu0
    %2229 = vmatpush.msra.mxu0 %v2175
    %2230 = vmatpush.msra.mxu0 %v2174
    %2231 = vmatpush.msra.mxu0 %v2173
    %2232 = vmatpush.msra.mxu0 %v2172
    %2233 = vmatpush.msra.mxu0 %v2171
    %2234 = vmatpush.msra.mxu0 %v2170
    %2235 = vmatpush.msra.mxu0 %v2169
    %2236 = vmatpush.msra.mxu0 %v2168
    %2237 = vmatpush.msra.mxu0 %v2167
    %2238 = vmatpush.msra.mxu0 %v2166
    %2239 = vmatpush.msra.mxu0 %v2165
    %2240 = vmatpush.msra.mxu0 %v2164
    %2241 = vmatpush.msra.mxu0 %v2163
    %2242 = vmatpush.msra.mxu0 %v2162
    %2243 = vmatpush.msra.mxu0 %v2161
    %2244 = vmatpush.msra.mxu0 %v2160
    %2245 = vmatmul.f32.gmra.mxu0 %v1843
    %v2246 = vpop.f32.mrf.mxu0
    %v2247 = vadd.f32 %v2227, %v2246
    %2248 = vdwg.mxu0
    %2249 = vmatpush.msra.mxu0 %v2191
    %2250 = vmatpush.msra.mxu0 %v2190
    %2251 = vmatpush.msra.mxu0 %v2189
    %2252 = vmatpush.msra.mxu0 %v2188
    %2253 = vmatpush.msra.mxu0 %v2187
    %2254 = vmatpush.msra.mxu0 %v2186
    %2255 = vmatpush.msra.mxu0 %v2185
    %2256 = vmatpush.msra.mxu0 %v2184
    %2257 = vmatpush.msra.mxu0 %v2183
    %2258 = vmatpush.msra.mxu0 %v2182
    %2259 = vmatpush.msra.mxu0 %v2181
    %2260 = vmatpush.msra.mxu0 %v2180
    %2261 = vmatpush.msra.mxu0 %v2179
    %2262 = vmatpush.msra.mxu0 %v2178
    %2263 = vmatpush.msra.mxu0 %v2177
    %2264 = vmatpush.msra.mxu0 %v2176
    %2265 = vmatmul.f32.gmra.mxu0 %v1844
    %v2266 = vpop.f32.mrf.mxu0
    %v2267 = vadd.f32 %v2247, %v2266
    %2268 = vdwg.mxu0
    %2269 = vmatpush.msra.mxu0 %v2207
    %2270 = vmatpush.msra.mxu0 %v2206
    %2271 = vmatpush.msra.mxu0 %v2205
    %2272 = vmatpush.msra.mxu0 %v2204
    %2273 = vmatpush.msra.mxu0 %v2203
    %2274 = vmatpush.msra.mxu0 %v2202
    %2275 = vmatpush.msra.mxu0 %v2201
    %2276 = vmatpush.msra.mxu0 %v2200
    %2277 = vmatpush.msra.mxu0 %v2199
    %2278 = vmatpush.msra.mxu0 %v2198
    %2279 = vmatpush.msra.mxu0 %v2197
    %2280 = vmatpush.msra.mxu0 %v2196
    %2281 = vmatpush.msra.mxu0 %v2195
    %2282 = vmatpush.msra.mxu0 %v2194
    %2283 = vmatpush.msra.mxu0 %v2193
    %2284 = vmatpush.msra.mxu0 %v2192
    %2285 = vmatmul.f32.gmra.mxu0 %v1845
    %v2286 = vpop.f32.mrf.mxu0
    %v2287 = vadd.f32 %v2267, %v2286
    %2288 = vdwg.mxu0
    %2289 = vst.msk [vmem:[#allocation3 + $0x1] sm:$0x1] %vm1995, %v2287
    %s2290 = scalar_lea.vmem %s12, 512
    %v2291 = vld [vmem:[%s2290] sm:$0xff]
    %v2292 = vld [vmem:[%s2290 + $0x8] sm:$0xff]
    %v2293 = vld [vmem:[%s2290 + $0x10] sm:$0xff]
    %v2294 = vld [vmem:[%s2290 + $0x18] sm:$0xff]
    %v2295 = vld [vmem:[%s2290 + $0x20] sm:$0xff]
    %v2296 = vld [vmem:[%s2290 + $0x28] sm:$0xff]
    %v2297 = vld [vmem:[%s2290 + $0x30] sm:$0xff]
    %v2298 = vld [vmem:[%s2290 + $0x38] sm:$0xff]
    %v2299 = vld [vmem:[%s2290 + $0x40] sm:$0xff]
    %v2300 = vld [vmem:[%s2290 + $0x48] sm:$0xff]
    %v2301 = vld [vmem:[%s2290 + $0x50] sm:$0xff]
    %v2302 = vld [vmem:[%s2290 + $0x58] sm:$0xff]
    %v2303 = vld [vmem:[%s2290 + $0x60] sm:$0xff]
    %v2304 = vld [vmem:[%s2290 + $0x68] sm:$0xff]
    %v2305 = vld [vmem:[%s2290 + $0x70] sm:$0xff]
    %v2306 = vld [vmem:[%s2290 + $0x78] sm:$0xff]
    %v2307 = vld [vmem:[%s2290 + $0x80] sm:$0xff]
    %v2308 = vld [vmem:[%s2290 + $0x88] sm:$0xff]
    %v2309 = vld [vmem:[%s2290 + $0x90] sm:$0xff]
    %v2310 = vld [vmem:[%s2290 + $0x98] sm:$0xff]
    %v2311 = vld [vmem:[%s2290 + $0xa0] sm:$0xff]
    %v2312 = vld [vmem:[%s2290 + $0xa8] sm:$0xff]
    %v2313 = vld [vmem:[%s2290 + $0xb0] sm:$0xff]
    %v2314 = vld [vmem:[%s2290 + $0xb8] sm:$0xff]
    %v2315 = vld [vmem:[%s2290 + $0xc0] sm:$0xff]
    %v2316 = vld [vmem:[%s2290 + $0xc8] sm:$0xff]
    %v2317 = vld [vmem:[%s2290 + $0xd0] sm:$0xff]
    %v2318 = vld [vmem:[%s2290 + $0xd8] sm:$0xff]
    %v2319 = vld [vmem:[%s2290 + $0xe0] sm:$0xff]
    %v2320 = vld [vmem:[%s2290 + $0xe8] sm:$0xff]
    %v2321 = vld [vmem:[%s2290 + $0xf0] sm:$0xff]
    %v2322 = vld [vmem:[%s2290 + $0xf8] sm:$0xff]
    %v2323 = vld [vmem:[%s2290 + $0x100] sm:$0xff]
    %v2324 = vld [vmem:[%s2290 + $0x108] sm:$0xff]
    %v2325 = vld [vmem:[%s2290 + $0x110] sm:$0xff]
    %v2326 = vld [vmem:[%s2290 + $0x118] sm:$0xff]
    %v2327 = vld [vmem:[%s2290 + $0x120] sm:$0xff]
    %v2328 = vld [vmem:[%s2290 + $0x128] sm:$0xff]
    %v2329 = vld [vmem:[%s2290 + $0x130] sm:$0xff]
    %v2330 = vld [vmem:[%s2290 + $0x138] sm:$0xff]
    %v2331 = vld [vmem:[%s2290 + $0x140] sm:$0xff]
    %v2332 = vld [vmem:[%s2290 + $0x148] sm:$0xff]
    %v2333 = vld [vmem:[%s2290 + $0x150] sm:$0xff]
    %v2334 = vld [vmem:[%s2290 + $0x158] sm:$0xff]
    %v2335 = vld [vmem:[%s2290 + $0x160] sm:$0xff]
    %v2336 = vld [vmem:[%s2290 + $0x168] sm:$0xff]
    %v2337 = vld [vmem:[%s2290 + $0x170] sm:$0xff]
    %v2338 = vld [vmem:[%s2290 + $0x178] sm:$0xff]
    %v2339 = vld [vmem:[%s2290 + $0x180] sm:$0xff]
    %v2340 = vld [vmem:[%s2290 + $0x188] sm:$0xff]
    %v2341 = vld [vmem:[%s2290 + $0x190] sm:$0xff]
    %v2342 = vld [vmem:[%s2290 + $0x198] sm:$0xff]
    %v2343 = vld [vmem:[%s2290 + $0x1a0] sm:$0xff]
    %v2344 = vld [vmem:[%s2290 + $0x1a8] sm:$0xff]
    %v2345 = vld [vmem:[%s2290 + $0x1b0] sm:$0xff]
    %v2346 = vld [vmem:[%s2290 + $0x1b8] sm:$0xff]
    %v2347 = vld [vmem:[%s2290 + $0x1c0] sm:$0xff]
    %v2348 = vld [vmem:[%s2290 + $0x1c8] sm:$0xff]
    %v2349 = vld [vmem:[%s2290 + $0x1d0] sm:$0xff]
    %v2350 = vld [vmem:[%s2290 + $0x1d8] sm:$0xff]
    %v2351 = vld [vmem:[%s2290 + $0x1e0] sm:$0xff]
    %v2352 = vld [vmem:[%s2290 + $0x1e8] sm:$0xff]
    %v2353 = vld [vmem:[%s2290 + $0x1f0] sm:$0xff]
    %v2354 = vld [vmem:[%s2290 + $0x1f8] sm:$0xff]
    %v2355 = vld [vmem:[%s13 + $0x1] sm:$0x1]
    %2356 = vmatpush.msra.mxu0 %v2306
    %2357 = vmatpush.msra.mxu0 %v2305
    %2358 = vmatpush.msra.mxu0 %v2304
    %2359 = vmatpush.msra.mxu0 %v2303
    %2360 = vmatpush.msra.mxu0 %v2302
    %2361 = vmatpush.msra.mxu0 %v2301
    %2362 = vmatpush.msra.mxu0 %v2300
    %2363 = vmatpush.msra.mxu0 %v2299
    %2364 = vmatpush.msra.mxu0 %v2298
    %2365 = vmatpush.msra.mxu0 %v2297
    %2366 = vmatpush.msra.mxu0 %v2296
    %2367 = vmatpush.msra.mxu0 %v2295
    %2368 = vmatpush.msra.mxu0 %v2294
    %2369 = vmatpush.msra.mxu0 %v2293
    %2370 = vmatpush.msra.mxu0 %v2292
    %2371 = vmatpush.msra.mxu0 %v2291
    %2372 = vmatmul.f32.gmra.mxu0 %v1846
    %v2373 = vpop.f32.mrf.mxu0
    %v2374 = vadd.f32 %v2355, %v2373
    %2375 = vdwg.mxu0
    %2376 = vmatpush.msra.mxu0 %v2322
    %2377 = vmatpush.msra.mxu0 %v2321
    %2378 = vmatpush.msra.mxu0 %v2320
    %2379 = vmatpush.msra.mxu0 %v2319
    %2380 = vmatpush.msra.mxu0 %v2318
    %2381 = vmatpush.msra.mxu0 %v2317
    %2382 = vmatpush.msra.mxu0 %v2316
    %2383 = vmatpush.msra.mxu0 %v2315
    %2384 = vmatpush.msra.mxu0 %v2314
    %2385 = vmatpush.msra.mxu0 %v2313
    %2386 = vmatpush.msra.mxu0 %v2312
    %2387 = vmatpush.msra.mxu0 %v2311
    %2388 = vmatpush.msra.mxu0 %v2310
    %2389 = vmatpush.msra.mxu0 %v2309
    %2390 = vmatpush.msra.mxu0 %v2308
    %2391 = vmatpush.msra.mxu0 %v2307
    %2392 = vmatmul.f32.gmra.mxu0 %v1847
    %v2393 = vpop.f32.mrf.mxu0
    %v2394 = vadd.f32 %v2374, %v2393
    %2395 = vdwg.mxu0
    %2396 = vmatpush.msra.mxu0 %v2338
    %2397 = vmatpush.msra.mxu0 %v2337
    %2398 = vmatpush.msra.mxu0 %v2336
    %2399 = vmatpush.msra.mxu0 %v2335
    %2400 = vmatpush.msra.mxu0 %v2334
    %2401 = vmatpush.msra.mxu0 %v2333
    %2402 = vmatpush.msra.mxu0 %v2332
    %2403 = vmatpush.msra.mxu0 %v2331
    %2404 = vmatpush.msra.mxu0 %v2330
    %2405 = vmatpush.msra.mxu0 %v2329
    %2406 = vmatpush.msra.mxu0 %v2328
    %2407 = vmatpush.msra.mxu0 %v2327
    %2408 = vmatpush.msra.mxu0 %v2326
    %2409 = vmatpush.msra.mxu0 %v2325
    %2410 = vmatpush.msra.mxu0 %v2324
    %2411 = vmatpush.msra.mxu0 %v2323
    %2412 = vmatmul.f32.gmra.mxu0 %v1848
    %v2413 = vpop.f32.mrf.mxu0
    %v2414 = vadd.f32 %v2394, %v2413
    %2415 = vdwg.mxu0
    %2416 = vmatpush.msra.mxu0 %v2354
    %2417 = vmatpush.msra.mxu0 %v2353
    %2418 = vmatpush.msra.mxu0 %v2352
    %2419 = vmatpush.msra.mxu0 %v2351
    %2420 = vmatpush.msra.mxu0 %v2350
    %2421 = vmatpush.msra.mxu0 %v2349
    %2422 = vmatpush.msra.mxu0 %v2348
    %2423 = vmatpush.msra.mxu0 %v2347
    %2424 = vmatpush.msra.mxu0 %v2346
    %2425 = vmatpush.msra.mxu0 %v2345
    %2426 = vmatpush.msra.mxu0 %v2344
    %2427 = vmatpush.msra.mxu0 %v2343
    %2428 = vmatpush.msra.mxu0 %v2342
    %2429 = vmatpush.msra.mxu0 %v2341
    %2430 = vmatpush.msra.mxu0 %v2340
    %2431 = vmatpush.msra.mxu0 %v2339
    %2432 = vmatmul.f32.gmra.mxu0 %v1849
    %v2433 = vpop.f32.mrf.mxu0
    %v2434 = vadd.f32 %v2414, %v2433
    %2435 = vdwg.mxu0
    %2436 = vst.msk [vmem:[#allocation4 + $0x1] sm:$0x1] %vm1995, %v2434
    %s2437 = scalar_lea.vmem %s10, 1024
    %v2438 = vld [vmem:[%s2437] sm:$0xff]
    %v2439 = vld [vmem:[%s2437 + $0x8] sm:$0xff]
    %v2440 = vld [vmem:[%s2437 + $0x10] sm:$0xff]
    %v2441 = vld [vmem:[%s2437 + $0x18] sm:$0xff]
    %v2442 = vld [vmem:[%s2437 + $0x20] sm:$0xff]
    %v2443 = vld [vmem:[%s2437 + $0x28] sm:$0xff]
    %v2444 = vld [vmem:[%s2437 + $0x30] sm:$0xff]
    %v2445 = vld [vmem:[%s2437 + $0x38] sm:$0xff]
    %v2446 = vld [vmem:[%s2437 + $0x40] sm:$0xff]
    %v2447 = vld [vmem:[%s2437 + $0x48] sm:$0xff]
    %v2448 = vld [vmem:[%s2437 + $0x50] sm:$0xff]
    %v2449 = vld [vmem:[%s2437 + $0x58] sm:$0xff]
    %v2450 = vld [vmem:[%s2437 + $0x60] sm:$0xff]
    %v2451 = vld [vmem:[%s2437 + $0x68] sm:$0xff]
    %v2452 = vld [vmem:[%s2437 + $0x70] sm:$0xff]
    %v2453 = vld [vmem:[%s2437 + $0x78] sm:$0xff]
    %v2454 = vld [vmem:[%s2437 + $0x80] sm:$0xff]
    %v2455 = vld [vmem:[%s2437 + $0x88] sm:$0xff]
    %v2456 = vld [vmem:[%s2437 + $0x90] sm:$0xff]
    %v2457 = vld [vmem:[%s2437 + $0x98] sm:$0xff]
    %v2458 = vld [vmem:[%s2437 + $0xa0] sm:$0xff]
    %v2459 = vld [vmem:[%s2437 + $0xa8] sm:$0xff]
    %v2460 = vld [vmem:[%s2437 + $0xb0] sm:$0xff]
    %v2461 = vld [vmem:[%s2437 + $0xb8] sm:$0xff]
    %v2462 = vld [vmem:[%s2437 + $0xc0] sm:$0xff]
    %v2463 = vld [vmem:[%s2437 + $0xc8] sm:$0xff]
    %v2464 = vld [vmem:[%s2437 + $0xd0] sm:$0xff]
    %v2465 = vld [vmem:[%s2437 + $0xd8] sm:$0xff]
    %v2466 = vld [vmem:[%s2437 + $0xe0] sm:$0xff]
    %v2467 = vld [vmem:[%s2437 + $0xe8] sm:$0xff]
    %v2468 = vld [vmem:[%s2437 + $0xf0] sm:$0xff]
    %v2469 = vld [vmem:[%s2437 + $0xf8] sm:$0xff]
    %v2470 = vld [vmem:[%s2437 + $0x100] sm:$0xff]
    %v2471 = vld [vmem:[%s2437 + $0x108] sm:$0xff]
    %v2472 = vld [vmem:[%s2437 + $0x110] sm:$0xff]
    %v2473 = vld [vmem:[%s2437 + $0x118] sm:$0xff]
    %v2474 = vld [vmem:[%s2437 + $0x120] sm:$0xff]
    %v2475 = vld [vmem:[%s2437 + $0x128] sm:$0xff]
    %v2476 = vld [vmem:[%s2437 + $0x130] sm:$0xff]
    %v2477 = vld [vmem:[%s2437 + $0x138] sm:$0xff]
    %v2478 = vld [vmem:[%s2437 + $0x140] sm:$0xff]
    %v2479 = vld [vmem:[%s2437 + $0x148] sm:$0xff]
    %v2480 = vld [vmem:[%s2437 + $0x150] sm:$0xff]
    %v2481 = vld [vmem:[%s2437 + $0x158] sm:$0xff]
    %v2482 = vld [vmem:[%s2437 + $0x160] sm:$0xff]
    %v2483 = vld [vmem:[%s2437 + $0x168] sm:$0xff]
    %v2484 = vld [vmem:[%s2437 + $0x170] sm:$0xff]
    %v2485 = vld [vmem:[%s2437 + $0x178] sm:$0xff]
    %v2486 = vld [vmem:[%s2437 + $0x180] sm:$0xff]
    %v2487 = vld [vmem:[%s2437 + $0x188] sm:$0xff]
    %v2488 = vld [vmem:[%s2437 + $0x190] sm:$0xff]
    %v2489 = vld [vmem:[%s2437 + $0x198] sm:$0xff]
    %v2490 = vld [vmem:[%s2437 + $0x1a0] sm:$0xff]
    %v2491 = vld [vmem:[%s2437 + $0x1a8] sm:$0xff]
    %v2492 = vld [vmem:[%s2437 + $0x1b0] sm:$0xff]
    %v2493 = vld [vmem:[%s2437 + $0x1b8] sm:$0xff]
    %v2494 = vld [vmem:[%s2437 + $0x1c0] sm:$0xff]
    %v2495 = vld [vmem:[%s2437 + $0x1c8] sm:$0xff]
    %v2496 = vld [vmem:[%s2437 + $0x1d0] sm:$0xff]
    %v2497 = vld [vmem:[%s2437 + $0x1d8] sm:$0xff]
    %v2498 = vld [vmem:[%s2437 + $0x1e0] sm:$0xff]
    %v2499 = vld [vmem:[%s2437 + $0x1e8] sm:$0xff]
    %v2500 = vld [vmem:[%s2437 + $0x1f0] sm:$0xff]
    %v2501 = vld [vmem:[%s2437 + $0x1f8] sm:$0xff]
    %v2502 = vld [vmem:[%s11 + $0x2] sm:$0x1]
    %2503 = vmatpush.msra.mxu0 %v2453
    %2504 = vmatpush.msra.mxu0 %v2452
    %2505 = vmatpush.msra.mxu0 %v2451
    %2506 = vmatpush.msra.mxu0 %v2450
    %2507 = vmatpush.msra.mxu0 %v2449
    %2508 = vmatpush.msra.mxu0 %v2448
    %2509 = vmatpush.msra.mxu0 %v2447
    %2510 = vmatpush.msra.mxu0 %v2446
    %2511 = vmatpush.msra.mxu0 %v2445
    %2512 = vmatpush.msra.mxu0 %v2444
    %2513 = vmatpush.msra.mxu0 %v2443
    %2514 = vmatpush.msra.mxu0 %v2442
    %2515 = vmatpush.msra.mxu0 %v2441
    %2516 = vmatpush.msra.mxu0 %v2440
    %2517 = vmatpush.msra.mxu0 %v2439
    %2518 = vmatpush.msra.mxu0 %v2438
    %2519 = vmatmul.f32.gmra.mxu0 %v1842
    %v2520 = vpop.f32.mrf.mxu0
    %v2521 = vadd.f32 %v2502, %v2520
    %2522 = vdwg.mxu0
    %2523 = vmatpush.msra.mxu0 %v2469
    %2524 = vmatpush.msra.mxu0 %v2468
    %2525 = vmatpush.msra.mxu0 %v2467
    %2526 = vmatpush.msra.mxu0 %v2466
    %2527 = vmatpush.msra.mxu0 %v2465
    %2528 = vmatpush.msra.mxu0 %v2464
    %2529 = vmatpush.msra.mxu0 %v2463
    %2530 = vmatpush.msra.mxu0 %v2462
    %2531 = vmatpush.msra.mxu0 %v2461
    %2532 = vmatpush.msra.mxu0 %v2460
    %2533 = vmatpush.msra.mxu0 %v2459
    %2534 = vmatpush.msra.mxu0 %v2458
    %2535 = vmatpush.msra.mxu0 %v2457
    %2536 = vmatpush.msra.mxu0 %v2456
    %2537 = vmatpush.msra.mxu0 %v2455
    %2538 = vmatpush.msra.mxu0 %v2454
    %2539 = vmatmul.f32.gmra.mxu0 %v1843
    %v2540 = vpop.f32.mrf.mxu0
    %v2541 = vadd.f32 %v2521, %v2540
    %2542 = vdwg.mxu0
    %2543 = vmatpush.msra.mxu0 %v2485
    %2544 = vmatpush.msra.mxu0 %v2484
    %2545 = vmatpush.msra.mxu0 %v2483
    %2546 = vmatpush.msra.mxu0 %v2482
    %2547 = vmatpush.msra.mxu0 %v2481
    %2548 = vmatpush.msra.mxu0 %v2480
    %2549 = vmatpush.msra.mxu0 %v2479
    %2550 = vmatpush.msra.mxu0 %v2478
    %2551 = vmatpush.msra.mxu0 %v2477
    %2552 = vmatpush.msra.mxu0 %v2476
    %2553 = vmatpush.msra.mxu0 %v2475
    %2554 = vmatpush.msra.mxu0 %v2474
    %2555 = vmatpush.msra.mxu0 %v2473
    %2556 = vmatpush.msra.mxu0 %v2472
    %2557 = vmatpush.msra.mxu0 %v2471
    %2558 = vmatpush.msra.mxu0 %v2470
    %2559 = vmatmul.f32.gmra.mxu0 %v1844
    %v2560 = vpop.f32.mrf.mxu0
    %v2561 = vadd.f32 %v2541, %v2560
    %2562 = vdwg.mxu0
    %2563 = vmatpush.msra.mxu0 %v2501
    %2564 = vmatpush.msra.mxu0 %v2500
    %2565 = vmatpush.msra.mxu0 %v2499
    %2566 = vmatpush.msra.mxu0 %v2498
    %2567 = vmatpush.msra.mxu0 %v2497
    %2568 = vmatpush.msra.mxu0 %v2496
    %2569 = vmatpush.msra.mxu0 %v2495
    %2570 = vmatpush.msra.mxu0 %v2494
    %2571 = vmatpush.msra.mxu0 %v2493
    %2572 = vmatpush.msra.mxu0 %v2492
    %2573 = vmatpush.msra.mxu0 %v2491
    %2574 = vmatpush.msra.mxu0 %v2490
    %2575 = vmatpush.msra.mxu0 %v2489
    %2576 = vmatpush.msra.mxu0 %v2488
    %2577 = vmatpush.msra.mxu0 %v2487
    %2578 = vmatpush.msra.mxu0 %v2486
    %2579 = vmatmul.f32.gmra.mxu0 %v1845
    %v2580 = vpop.f32.mrf.mxu0
    %v2581 = vadd.f32 %v2561, %v2580
    %2582 = vdwg.mxu0
    %2583 = vst.msk [vmem:[#allocation3 + $0x2] sm:$0x1] %vm1995, %v2581
    %s2584 = scalar_lea.vmem %s12, 1024
    %v2585 = vld [vmem:[%s2584] sm:$0xff]
    %v2586 = vld [vmem:[%s2584 + $0x8] sm:$0xff]
    %v2587 = vld [vmem:[%s2584 + $0x10] sm:$0xff]
    %v2588 = vld [vmem:[%s2584 + $0x18] sm:$0xff]
    %v2589 = vld [vmem:[%s2584 + $0x20] sm:$0xff]
    %v2590 = vld [vmem:[%s2584 + $0x28] sm:$0xff]
    %v2591 = vld [vmem:[%s2584 + $0x30] sm:$0xff]
    %v2592 = vld [vmem:[%s2584 + $0x38] sm:$0xff]
    %v2593 = vld [vmem:[%s2584 + $0x40] sm:$0xff]
    %v2594 = vld [vmem:[%s2584 + $0x48] sm:$0xff]
    %v2595 = vld [vmem:[%s2584 + $0x50] sm:$0xff]
    %v2596 = vld [vmem:[%s2584 + $0x58] sm:$0xff]
    %v2597 = vld [vmem:[%s2584 + $0x60] sm:$0xff]
    %v2598 = vld [vmem:[%s2584 + $0x68] sm:$0xff]
    %v2599 = vld [vmem:[%s2584 + $0x70] sm:$0xff]
    %v2600 = vld [vmem:[%s2584 + $0x78] sm:$0xff]
    %v2601 = vld [vmem:[%s2584 + $0x80] sm:$0xff]
    %v2602 = vld [vmem:[%s2584 + $0x88] sm:$0xff]
    %v2603 = vld [vmem:[%s2584 + $0x90] sm:$0xff]
    %v2604 = vld [vmem:[%s2584 + $0x98] sm:$0xff]
    %v2605 = vld [vmem:[%s2584 + $0xa0] sm:$0xff]
    %v2606 = vld [vmem:[%s2584 + $0xa8] sm:$0xff]
    %v2607 = vld [vmem:[%s2584 + $0xb0] sm:$0xff]
    %v2608 = vld [vmem:[%s2584 + $0xb8] sm:$0xff]
    %v2609 = vld [vmem:[%s2584 + $0xc0] sm:$0xff]
    %v2610 = vld [vmem:[%s2584 + $0xc8] sm:$0xff]
    %v2611 = vld [vmem:[%s2584 + $0xd0] sm:$0xff]
    %v2612 = vld [vmem:[%s2584 + $0xd8] sm:$0xff]
    %v2613 = vld [vmem:[%s2584 + $0xe0] sm:$0xff]
    %v2614 = vld [vmem:[%s2584 + $0xe8] sm:$0xff]
    %v2615 = vld [vmem:[%s2584 + $0xf0] sm:$0xff]
    %v2616 = vld [vmem:[%s2584 + $0xf8] sm:$0xff]
    %v2617 = vld [vmem:[%s2584 + $0x100] sm:$0xff]
    %v2618 = vld [vmem:[%s2584 + $0x108] sm:$0xff]
    %v2619 = vld [vmem:[%s2584 + $0x110] sm:$0xff]
    %v2620 = vld [vmem:[%s2584 + $0x118] sm:$0xff]
    %v2621 = vld [vmem:[%s2584 + $0x120] sm:$0xff]
    %v2622 = vld [vmem:[%s2584 + $0x128] sm:$0xff]
    %v2623 = vld [vmem:[%s2584 + $0x130] sm:$0xff]
    %v2624 = vld [vmem:[%s2584 + $0x138] sm:$0xff]
    %v2625 = vld [vmem:[%s2584 + $0x140] sm:$0xff]
    %v2626 = vld [vmem:[%s2584 + $0x148] sm:$0xff]
    %v2627 = vld [vmem:[%s2584 + $0x150] sm:$0xff]
    %v2628 = vld [vmem:[%s2584 + $0x158] sm:$0xff]
    %v2629 = vld [vmem:[%s2584 + $0x160] sm:$0xff]
    %v2630 = vld [vmem:[%s2584 + $0x168] sm:$0xff]
    %v2631 = vld [vmem:[%s2584 + $0x170] sm:$0xff]
    %v2632 = vld [vmem:[%s2584 + $0x178] sm:$0xff]
    %v2633 = vld [vmem:[%s2584 + $0x180] sm:$0xff]
    %v2634 = vld [vmem:[%s2584 + $0x188] sm:$0xff]
    %v2635 = vld [vmem:[%s2584 + $0x190] sm:$0xff]
    %v2636 = vld [vmem:[%s2584 + $0x198] sm:$0xff]
    %v2637 = vld [vmem:[%s2584 + $0x1a0] sm:$0xff]
    %v2638 = vld [vmem:[%s2584 + $0x1a8] sm:$0xff]
    %v2639 = vld [vmem:[%s2584 + $0x1b0] sm:$0xff]
    %v2640 = vld [vmem:[%s2584 + $0x1b8] sm:$0xff]
    %v2641 = vld [vmem:[%s2584 + $0x1c0] sm:$0xff]
    %v2642 = vld [vmem:[%s2584 + $0x1c8] sm:$0xff]
    %v2643 = vld [vmem:[%s2584 + $0x1d0] sm:$0xff]
    %v2644 = vld [vmem:[%s2584 + $0x1d8] sm:$0xff]
    %v2645 = vld [vmem:[%s2584 + $0x1e0] sm:$0xff]
    %v2646 = vld [vmem:[%s2584 + $0x1e8] sm:$0xff]
    %v2647 = vld [vmem:[%s2584 + $0x1f0] sm:$0xff]
    %v2648 = vld [vmem:[%s2584 + $0x1f8] sm:$0xff]
    %v2649 = vld [vmem:[%s13 + $0x2] sm:$0x1]
    %2650 = vmatpush.msra.mxu0 %v2600
    %2651 = vmatpush.msra.mxu0 %v2599
    %2652 = vmatpush.msra.mxu0 %v2598
    %2653 = vmatpush.msra.mxu0 %v2597
    %2654 = vmatpush.msra.mxu0 %v2596
    %2655 = vmatpush.msra.mxu0 %v2595
    %2656 = vmatpush.msra.mxu0 %v2594
    %2657 = vmatpush.msra.mxu0 %v2593
    %2658 = vmatpush.msra.mxu0 %v2592
    %2659 = vmatpush.msra.mxu0 %v2591
    %2660 = vmatpush.msra.mxu0 %v2590
    %2661 = vmatpush.msra.mxu0 %v2589
    %2662 = vmatpush.msra.mxu0 %v2588
    %2663 = vmatpush.msra.mxu0 %v2587
    %2664 = vmatpush.msra.mxu0 %v2586
    %2665 = vmatpush.msra.mxu0 %v2585
    %2666 = vmatmul.f32.gmra.mxu0 %v1846
    %v2667 = vpop.f32.mrf.mxu0
    %v2668 = vadd.f32 %v2649, %v2667
    %2669 = vdwg.mxu0
    %2670 = vmatpush.msra.mxu0 %v2616
    %2671 = vmatpush.msra.mxu0 %v2615
    %2672 = vmatpush.msra.mxu0 %v2614
    %2673 = vmatpush.msra.mxu0 %v2613
    %2674 = vmatpush.msra.mxu0 %v2612
    %2675 = vmatpush.msra.mxu0 %v2611
    %2676 = vmatpush.msra.mxu0 %v2610
    %2677 = vmatpush.msra.mxu0 %v2609
    %2678 = vmatpush.msra.mxu0 %v2608
    %2679 = vmatpush.msra.mxu0 %v2607
    %2680 = vmatpush.msra.mxu0 %v2606
    %2681 = vmatpush.msra.mxu0 %v2605
    %2682 = vmatpush.msra.mxu0 %v2604
    %2683 = vmatpush.msra.mxu0 %v2603
    %2684 = vmatpush.msra.mxu0 %v2602
    %2685 = vmatpush.msra.mxu0 %v2601
    %2686 = vmatmul.f32.gmra.mxu0 %v1847
    %v2687 = vpop.f32.mrf.mxu0
    %v2688 = vadd.f32 %v2668, %v2687
    %2689 = vdwg.mxu0
    %2690 = vmatpush.msra.mxu0 %v2632
    %2691 = vmatpush.msra.mxu0 %v2631
    %2692 = vmatpush.msra.mxu0 %v2630
    %2693 = vmatpush.msra.mxu0 %v2629
    %2694 = vmatpush.msra.mxu0 %v2628
    %2695 = vmatpush.msra.mxu0 %v2627
    %2696 = vmatpush.msra.mxu0 %v2626
    %2697 = vmatpush.msra.mxu0 %v2625
    %2698 = vmatpush.msra.mxu0 %v2624
    %2699 = vmatpush.msra.mxu0 %v2623
    %2700 = vmatpush.msra.mxu0 %v2622
    %2701 = vmatpush.msra.mxu0 %v2621
    %2702 = vmatpush.msra.mxu0 %v2620
    %2703 = vmatpush.msra.mxu0 %v2619
    %2704 = vmatpush.msra.mxu0 %v2618
    %2705 = vmatpush.msra.mxu0 %v2617
    %2706 = vmatmul.f32.gmra.mxu0 %v1848
    %v2707 = vpop.f32.mrf.mxu0
    %v2708 = vadd.f32 %v2688, %v2707
    %2709 = vdwg.mxu0
    %2710 = vmatpush.msra.mxu0 %v2648
    %2711 = vmatpush.msra.mxu0 %v2647
    %2712 = vmatpush.msra.mxu0 %v2646
    %2713 = vmatpush.msra.mxu0 %v2645
    %2714 = vmatpush.msra.mxu0 %v2644
    %2715 = vmatpush.msra.mxu0 %v2643
    %2716 = vmatpush.msra.mxu0 %v2642
    %2717 = vmatpush.msra.mxu0 %v2641
    %2718 = vmatpush.msra.mxu0 %v2640
    %2719 = vmatpush.msra.mxu0 %v2639
    %2720 = vmatpush.msra.mxu0 %v2638
    %2721 = vmatpush.msra.mxu0 %v2637
    %2722 = vmatpush.msra.mxu0 %v2636
    %2723 = vmatpush.msra.mxu0 %v2635
    %2724 = vmatpush.msra.mxu0 %v2634
    %2725 = vmatpush.msra.mxu0 %v2633
    %2726 = vmatmul.f32.gmra.mxu0 %v1849
    %v2727 = vpop.f32.mrf.mxu0
    %v2728 = vadd.f32 %v2708, %v2727
    %2729 = vdwg.mxu0
    %2730 = vst.msk [vmem:[#allocation4 + $0x2] sm:$0x1] %vm1995, %v2728
    %s2731 = scalar_lea.vmem %s10, 1536
    %v2732 = vld [vmem:[%s2731] sm:$0xff]
    %v2733 = vld [vmem:[%s2731 + $0x8] sm:$0xff]
    %v2734 = vld [vmem:[%s2731 + $0x10] sm:$0xff]
    %v2735 = vld [vmem:[%s2731 + $0x18] sm:$0xff]
    %v2736 = vld [vmem:[%s2731 + $0x20] sm:$0xff]
    %v2737 = vld [vmem:[%s2731 + $0x28] sm:$0xff]
    %v2738 = vld [vmem:[%s2731 + $0x30] sm:$0xff]
    %v2739 = vld [vmem:[%s2731 + $0x38] sm:$0xff]
    %v2740 = vld [vmem:[%s2731 + $0x40] sm:$0xff]
    %v2741 = vld [vmem:[%s2731 + $0x48] sm:$0xff]
    %v2742 = vld [vmem:[%s2731 + $0x50] sm:$0xff]
    %v2743 = vld [vmem:[%s2731 + $0x58] sm:$0xff]
    %v2744 = vld [vmem:[%s2731 + $0x60] sm:$0xff]
    %v2745 = vld [vmem:[%s2731 + $0x68] sm:$0xff]
    %v2746 = vld [vmem:[%s2731 + $0x70] sm:$0xff]
    %v2747 = vld [vmem:[%s2731 + $0x78] sm:$0xff]
    %v2748 = vld [vmem:[%s2731 + $0x80] sm:$0xff]
    %v2749 = vld [vmem:[%s2731 + $0x88] sm:$0xff]
    %v2750 = vld [vmem:[%s2731 + $0x90] sm:$0xff]
    %v2751 = vld [vmem:[%s2731 + $0x98] sm:$0xff]
    %v2752 = vld [vmem:[%s2731 + $0xa0] sm:$0xff]
    %v2753 = vld [vmem:[%s2731 + $0xa8] sm:$0xff]
    %v2754 = vld [vmem:[%s2731 + $0xb0] sm:$0xff]
    %v2755 = vld [vmem:[%s2731 + $0xb8] sm:$0xff]
    %v2756 = vld [vmem:[%s2731 + $0xc0] sm:$0xff]
    %v2757 = vld [vmem:[%s2731 + $0xc8] sm:$0xff]
    %v2758 = vld [vmem:[%s2731 + $0xd0] sm:$0xff]
    %v2759 = vld [vmem:[%s2731 + $0xd8] sm:$0xff]
    %v2760 = vld [vmem:[%s2731 + $0xe0] sm:$0xff]
    %v2761 = vld [vmem:[%s2731 + $0xe8] sm:$0xff]
    %v2762 = vld [vmem:[%s2731 + $0xf0] sm:$0xff]
    %v2763 = vld [vmem:[%s2731 + $0xf8] sm:$0xff]
    %v2764 = vld [vmem:[%s2731 + $0x100] sm:$0xff]
    %v2765 = vld [vmem:[%s2731 + $0x108] sm:$0xff]
    %v2766 = vld [vmem:[%s2731 + $0x110] sm:$0xff]
    %v2767 = vld [vmem:[%s2731 + $0x118] sm:$0xff]
    %v2768 = vld [vmem:[%s2731 + $0x120] sm:$0xff]
    %v2769 = vld [vmem:[%s2731 + $0x128] sm:$0xff]
    %v2770 = vld [vmem:[%s2731 + $0x130] sm:$0xff]
    %v2771 = vld [vmem:[%s2731 + $0x138] sm:$0xff]
    %v2772 = vld [vmem:[%s2731 + $0x140] sm:$0xff]
    %v2773 = vld [vmem:[%s2731 + $0x148] sm:$0xff]
    %v2774 = vld [vmem:[%s2731 + $0x150] sm:$0xff]
    %v2775 = vld [vmem:[%s2731 + $0x158] sm:$0xff]
    %v2776 = vld [vmem:[%s2731 + $0x160] sm:$0xff]
    %v2777 = vld [vmem:[%s2731 + $0x168] sm:$0xff]
    %v2778 = vld [vmem:[%s2731 + $0x170] sm:$0xff]
    %v2779 = vld [vmem:[%s2731 + $0x178] sm:$0xff]
    %v2780 = vld [vmem:[%s2731 + $0x180] sm:$0xff]
    %v2781 = vld [vmem:[%s2731 + $0x188] sm:$0xff]
    %v2782 = vld [vmem:[%s2731 + $0x190] sm:$0xff]
    %v2783 = vld [vmem:[%s2731 + $0x198] sm:$0xff]
    %v2784 = vld [vmem:[%s2731 + $0x1a0] sm:$0xff]
    %v2785 = vld [vmem:[%s2731 + $0x1a8] sm:$0xff]
    %v2786 = vld [vmem:[%s2731 + $0x1b0] sm:$0xff]
    %v2787 = vld [vmem:[%s2731 + $0x1b8] sm:$0xff]
    %v2788 = vld [vmem:[%s2731 + $0x1c0] sm:$0xff]
    %v2789 = vld [vmem:[%s2731 + $0x1c8] sm:$0xff]
    %v2790 = vld [vmem:[%s2731 + $0x1d0] sm:$0xff]
    %v2791 = vld [vmem:[%s2731 + $0x1d8] sm:$0xff]
    %v2792 = vld [vmem:[%s2731 + $0x1e0] sm:$0xff]
    %v2793 = vld [vmem:[%s2731 + $0x1e8] sm:$0xff]
    %v2794 = vld [vmem:[%s2731 + $0x1f0] sm:$0xff]
    %v2795 = vld [vmem:[%s2731 + $0x1f8] sm:$0xff]
    %v2796 = vld [vmem:[%s11 + $0x3] sm:$0x1]
    %2797 = vmatpush.msra.mxu0 %v2747
    %2798 = vmatpush.msra.mxu0 %v2746
    %2799 = vmatpush.msra.mxu0 %v2745
    %2800 = vmatpush.msra.mxu0 %v2744
    %2801 = vmatpush.msra.mxu0 %v2743
    %2802 = vmatpush.msra.mxu0 %v2742
    %2803 = vmatpush.msra.mxu0 %v2741
    %2804 = vmatpush.msra.mxu0 %v2740
    %2805 = vmatpush.msra.mxu0 %v2739
    %2806 = vmatpush.msra.mxu0 %v2738
    %2807 = vmatpush.msra.mxu0 %v2737
    %2808 = vmatpush.msra.mxu0 %v2736
    %2809 = vmatpush.msra.mxu0 %v2735
    %2810 = vmatpush.msra.mxu0 %v2734
    %2811 = vmatpush.msra.mxu0 %v2733
    %2812 = vmatpush.msra.mxu0 %v2732
    %2813 = vmatmul.f32.gmra.mxu0 %v1842
    %v2814 = vpop.f32.mrf.mxu0
    %v2815 = vadd.f32 %v2796, %v2814
    %2816 = vdwg.mxu0
    %2817 = vmatpush.msra.mxu0 %v2763
    %2818 = vmatpush.msra.mxu0 %v2762
    %2819 = vmatpush.msra.mxu0 %v2761
    %2820 = vmatpush.msra.mxu0 %v2760
    %2821 = vmatpush.msra.mxu0 %v2759
    %2822 = vmatpush.msra.mxu0 %v2758
    %2823 = vmatpush.msra.mxu0 %v2757
    %2824 = vmatpush.msra.mxu0 %v2756
    %2825 = vmatpush.msra.mxu0 %v2755
    %2826 = vmatpush.msra.mxu0 %v2754
    %2827 = vmatpush.msra.mxu0 %v2753
    %2828 = vmatpush.msra.mxu0 %v2752
    %2829 = vmatpush.msra.mxu0 %v2751
    %2830 = vmatpush.msra.mxu0 %v2750
    %2831 = vmatpush.msra.mxu0 %v2749
    %2832 = vmatpush.msra.mxu0 %v2748
    %2833 = vmatmul.f32.gmra.mxu0 %v1843
    %v2834 = vpop.f32.mrf.mxu0
    %v2835 = vadd.f32 %v2815, %v2834
    %2836 = vdwg.mxu0
    %2837 = vmatpush.msra.mxu0 %v2779
    %2838 = vmatpush.msra.mxu0 %v2778
    %2839 = vmatpush.msra.mxu0 %v2777
    %2840 = vmatpush.msra.mxu0 %v2776
    %2841 = vmatpush.msra.mxu0 %v2775
    %2842 = vmatpush.msra.mxu0 %v2774
    %2843 = vmatpush.msra.mxu0 %v2773
    %2844 = vmatpush.msra.mxu0 %v2772
    %2845 = vmatpush.msra.mxu0 %v2771
    %2846 = vmatpush.msra.mxu0 %v2770
    %2847 = vmatpush.msra.mxu0 %v2769
    %2848 = vmatpush.msra.mxu0 %v2768
    %2849 = vmatpush.msra.mxu0 %v2767
    %2850 = vmatpush.msra.mxu0 %v2766
    %2851 = vmatpush.msra.mxu0 %v2765
    %2852 = vmatpush.msra.mxu0 %v2764
    %2853 = vmatmul.f32.gmra.mxu0 %v1844
    %v2854 = vpop.f32.mrf.mxu0
    %v2855 = vadd.f32 %v2835, %v2854
    %2856 = vdwg.mxu0
    %2857 = vmatpush.msra.mxu0 %v2795
    %2858 = vmatpush.msra.mxu0 %v2794
    %2859 = vmatpush.msra.mxu0 %v2793
    %2860 = vmatpush.msra.mxu0 %v2792
    %2861 = vmatpush.msra.mxu0 %v2791
    %2862 = vmatpush.msra.mxu0 %v2790
    %2863 = vmatpush.msra.mxu0 %v2789
    %2864 = vmatpush.msra.mxu0 %v2788
    %2865 = vmatpush.msra.mxu0 %v2787
    %2866 = vmatpush.msra.mxu0 %v2786
    %2867 = vmatpush.msra.mxu0 %v2785
    %2868 = vmatpush.msra.mxu0 %v2784
    %2869 = vmatpush.msra.mxu0 %v2783
    %2870 = vmatpush.msra.mxu0 %v2782
    %2871 = vmatpush.msra.mxu0 %v2781
    %2872 = vmatpush.msra.mxu0 %v2780
    %2873 = vmatmul.f32.gmra.mxu0 %v1845
    %v2874 = vpop.f32.mrf.mxu0
    %v2875 = vadd.f32 %v2855, %v2874
    %2876 = vdwg.mxu0
    %2877 = vst.msk [vmem:[#allocation3 + $0x3] sm:$0x1] %vm1995, %v2875
    %s2878 = scalar_lea.vmem %s12, 1536
    %v2879 = vld [vmem:[%s2878] sm:$0xff]
    %v2880 = vld [vmem:[%s2878 + $0x8] sm:$0xff]
    %v2881 = vld [vmem:[%s2878 + $0x10] sm:$0xff]
    %v2882 = vld [vmem:[%s2878 + $0x18] sm:$0xff]
    %v2883 = vld [vmem:[%s2878 + $0x20] sm:$0xff]
    %v2884 = vld [vmem:[%s2878 + $0x28] sm:$0xff]
    %v2885 = vld [vmem:[%s2878 + $0x30] sm:$0xff]
    %v2886 = vld [vmem:[%s2878 + $0x38] sm:$0xff]
    %v2887 = vld [vmem:[%s2878 + $0x40] sm:$0xff]
    %v2888 = vld [vmem:[%s2878 + $0x48] sm:$0xff]
    %v2889 = vld [vmem:[%s2878 + $0x50] sm:$0xff]
    %v2890 = vld [vmem:[%s2878 + $0x58] sm:$0xff]
    %v2891 = vld [vmem:[%s2878 + $0x60] sm:$0xff]
    %v2892 = vld [vmem:[%s2878 + $0x68] sm:$0xff]
    %v2893 = vld [vmem:[%s2878 + $0x70] sm:$0xff]
    %v2894 = vld [vmem:[%s2878 + $0x78] sm:$0xff]
    %v2895 = vld [vmem:[%s2878 + $0x80] sm:$0xff]
    %v2896 = vld [vmem:[%s2878 + $0x88] sm:$0xff]
    %v2897 = vld [vmem:[%s2878 + $0x90] sm:$0xff]
    %v2898 = vld [vmem:[%s2878 + $0x98] sm:$0xff]
    %v2899 = vld [vmem:[%s2878 + $0xa0] sm:$0xff]
    %v2900 = vld [vmem:[%s2878 + $0xa8] sm:$0xff]
    %v2901 = vld [vmem:[%s2878 + $0xb0] sm:$0xff]
    %v2902 = vld [vmem:[%s2878 + $0xb8] sm:$0xff]
    %v2903 = vld [vmem:[%s2878 + $0xc0] sm:$0xff]
    %v2904 = vld [vmem:[%s2878 + $0xc8] sm:$0xff]
    %v2905 = vld [vmem:[%s2878 + $0xd0] sm:$0xff]
    %v2906 = vld [vmem:[%s2878 + $0xd8] sm:$0xff]
    %v2907 = vld [vmem:[%s2878 + $0xe0] sm:$0xff]
    %v2908 = vld [vmem:[%s2878 + $0xe8] sm:$0xff]
    %v2909 = vld [vmem:[%s2878 + $0xf0] sm:$0xff]
    %v2910 = vld [vmem:[%s2878 + $0xf8] sm:$0xff]
    %v2911 = vld [vmem:[%s2878 + $0x100] sm:$0xff]
    %v2912 = vld [vmem:[%s2878 + $0x108] sm:$0xff]
    %v2913 = vld [vmem:[%s2878 + $0x110] sm:$0xff]
    %v2914 = vld [vmem:[%s2878 + $0x118] sm:$0xff]
    %v2915 = vld [vmem:[%s2878 + $0x120] sm:$0xff]
    %v2916 = vld [vmem:[%s2878 + $0x128] sm:$0xff]
    %v2917 = vld [vmem:[%s2878 + $0x130] sm:$0xff]
    %v2918 = vld [vmem:[%s2878 + $0x138] sm:$0xff]
    %v2919 = vld [vmem:[%s2878 + $0x140] sm:$0xff]
    %v2920 = vld [vmem:[%s2878 + $0x148] sm:$0xff]
    %v2921 = vld [vmem:[%s2878 + $0x150] sm:$0xff]
    %v2922 = vld [vmem:[%s2878 + $0x158] sm:$0xff]
    %v2923 = vld [vmem:[%s2878 + $0x160] sm:$0xff]
    %v2924 = vld [vmem:[%s2878 + $0x168] sm:$0xff]
    %v2925 = vld [vmem:[%s2878 + $0x170] sm:$0xff]
    %v2926 = vld [vmem:[%s2878 + $0x178] sm:$0xff]
    %v2927 = vld [vmem:[%s2878 + $0x180] sm:$0xff]
    %v2928 = vld [vmem:[%s2878 + $0x188] sm:$0xff]
    %v2929 = vld [vmem:[%s2878 + $0x190] sm:$0xff]
    %v2930 = vld [vmem:[%s2878 + $0x198] sm:$0xff]
    %v2931 = vld [vmem:[%s2878 + $0x1a0] sm:$0xff]
    %v2932 = vld [vmem:[%s2878 + $0x1a8] sm:$0xff]
    %v2933 = vld [vmem:[%s2878 + $0x1b0] sm:$0xff]
    %v2934 = vld [vmem:[%s2878 + $0x1b8] sm:$0xff]
    %v2935 = vld [vmem:[%s2878 + $0x1c0] sm:$0xff]
    %v2936 = vld [vmem:[%s2878 + $0x1c8] sm:$0xff]
    %v2937 = vld [vmem:[%s2878 + $0x1d0] sm:$0xff]
    %v2938 = vld [vmem:[%s2878 + $0x1d8] sm:$0xff]
    %v2939 = vld [vmem:[%s2878 + $0x1e0] sm:$0xff]
    %v2940 = vld [vmem:[%s2878 + $0x1e8] sm:$0xff]
    %v2941 = vld [vmem:[%s2878 + $0x1f0] sm:$0xff]
    %v2942 = vld [vmem:[%s2878 + $0x1f8] sm:$0xff]
    %v2943 = vld [vmem:[%s13 + $0x3] sm:$0x1]
    %2944 = vmatpush.msra.mxu0 %v2894
    %2945 = vmatpush.msra.mxu0 %v2893
    %2946 = vmatpush.msra.mxu0 %v2892
    %2947 = vmatpush.msra.mxu0 %v2891
    %2948 = vmatpush.msra.mxu0 %v2890
    %2949 = vmatpush.msra.mxu0 %v2889
    %2950 = vmatpush.msra.mxu0 %v2888
    %2951 = vmatpush.msra.mxu0 %v2887
    %2952 = vmatpush.msra.mxu0 %v2886
    %2953 = vmatpush.msra.mxu0 %v2885
    %2954 = vmatpush.msra.mxu0 %v2884
    %2955 = vmatpush.msra.mxu0 %v2883
    %2956 = vmatpush.msra.mxu0 %v2882
    %2957 = vmatpush.msra.mxu0 %v2881
    %2958 = vmatpush.msra.mxu0 %v2880
    %2959 = vmatpush.msra.mxu0 %v2879
    %2960 = vmatmul.f32.gmra.mxu0 %v1846
    %v2961 = vpop.f32.mrf.mxu0
    %v2962 = vadd.f32 %v2943, %v2961
    %2963 = vdwg.mxu0
    %2964 = vmatpush.msra.mxu0 %v2910
    %2965 = vmatpush.msra.mxu0 %v2909
    %2966 = vmatpush.msra.mxu0 %v2908
    %2967 = vmatpush.msra.mxu0 %v2907
    %2968 = vmatpush.msra.mxu0 %v2906
    %2969 = vmatpush.msra.mxu0 %v2905
    %2970 = vmatpush.msra.mxu0 %v2904
    %2971 = vmatpush.msra.mxu0 %v2903
    %2972 = vmatpush.msra.mxu0 %v2902
    %2973 = vmatpush.msra.mxu0 %v2901
    %2974 = vmatpush.msra.mxu0 %v2900
    %2975 = vmatpush.msra.mxu0 %v2899
    %2976 = vmatpush.msra.mxu0 %v2898
    %2977 = vmatpush.msra.mxu0 %v2897
    %2978 = vmatpush.msra.mxu0 %v2896
    %2979 = vmatpush.msra.mxu0 %v2895
    %2980 = vmatmul.f32.gmra.mxu0 %v1847
    %v2981 = vpop.f32.mrf.mxu0
    %v2982 = vadd.f32 %v2962, %v2981
    %2983 = vdwg.mxu0
    %2984 = vmatpush.msra.mxu0 %v2926
    %2985 = vmatpush.msra.mxu0 %v2925
    %2986 = vmatpush.msra.mxu0 %v2924
    %2987 = vmatpush.msra.mxu0 %v2923
    %2988 = vmatpush.msra.mxu0 %v2922
    %2989 = vmatpush.msra.mxu0 %v2921
    %2990 = vmatpush.msra.mxu0 %v2920
    %2991 = vmatpush.msra.mxu0 %v2919
    %2992 = vmatpush.msra.mxu0 %v2918
    %2993 = vmatpush.msra.mxu0 %v2917
    %2994 = vmatpush.msra.mxu0 %v2916
    %2995 = vmatpush.msra.mxu0 %v2915
    %2996 = vmatpush.msra.mxu0 %v2914
    %2997 = vmatpush.msra.mxu0 %v2913
    %2998 = vmatpush.msra.mxu0 %v2912
    %2999 = vmatpush.msra.mxu0 %v2911
    %3000 = vmatmul.f32.gmra.mxu0 %v1848
    %v3001 = vpop.f32.mrf.mxu0
    %v3002 = vadd.f32 %v2982, %v3001
    %3003 = vdwg.mxu0
    %3004 = vmatpush.msra.mxu0 %v2942
    %3005 = vmatpush.msra.mxu0 %v2941
    %3006 = vmatpush.msra.mxu0 %v2940
    %3007 = vmatpush.msra.mxu0 %v2939
    %3008 = vmatpush.msra.mxu0 %v2938
    %3009 = vmatpush.msra.mxu0 %v2937
    %3010 = vmatpush.msra.mxu0 %v2936
    %3011 = vmatpush.msra.mxu0 %v2935
    %3012 = vmatpush.msra.mxu0 %v2934
    %3013 = vmatpush.msra.mxu0 %v2933
    %3014 = vmatpush.msra.mxu0 %v2932
    %3015 = vmatpush.msra.mxu0 %v2931
    %3016 = vmatpush.msra.mxu0 %v2930
    %3017 = vmatpush.msra.mxu0 %v2929
    %3018 = vmatpush.msra.mxu0 %v2928
    %3019 = vmatpush.msra.mxu0 %v2927
    %3020 = vmatmul.f32.gmra.mxu0 %v1849
    %v3021 = vpop.f32.mrf.mxu0
    %v3022 = vadd.f32 %v3002, %v3021
    %3023 = vdwg.mxu0
    %3024 = vst.msk [vmem:[#allocation4 + $0x3] sm:$0x1] %vm1995, %v3022
    %s3025 = scalar_lea.vmem %s10, 2048
    %v3026 = vld [vmem:[%s3025] sm:$0xff]
    %v3027 = vld [vmem:[%s3025 + $0x8] sm:$0xff]
    %v3028 = vld [vmem:[%s3025 + $0x10] sm:$0xff]
    %v3029 = vld [vmem:[%s3025 + $0x18] sm:$0xff]
    %v3030 = vld [vmem:[%s3025 + $0x20] sm:$0xff]
    %v3031 = vld [vmem:[%s3025 + $0x28] sm:$0xff]
    %v3032 = vld [vmem:[%s3025 + $0x30] sm:$0xff]
    %v3033 = vld [vmem:[%s3025 + $0x38] sm:$0xff]
    %v3034 = vld [vmem:[%s3025 + $0x40] sm:$0xff]
    %v3035 = vld [vmem:[%s3025 + $0x48] sm:$0xff]
    %v3036 = vld [vmem:[%s3025 + $0x50] sm:$0xff]
    %v3037 = vld [vmem:[%s3025 + $0x58] sm:$0xff]
    %v3038 = vld [vmem:[%s3025 + $0x60] sm:$0xff]
    %v3039 = vld [vmem:[%s3025 + $0x68] sm:$0xff]
    %v3040 = vld [vmem:[%s3025 + $0x70] sm:$0xff]
    %v3041 = vld [vmem:[%s3025 + $0x78] sm:$0xff]
    %v3042 = vld [vmem:[%s3025 + $0x80] sm:$0xff]
    %v3043 = vld [vmem:[%s3025 + $0x88] sm:$0xff]
    %v3044 = vld [vmem:[%s3025 + $0x90] sm:$0xff]
    %v3045 = vld [vmem:[%s3025 + $0x98] sm:$0xff]
    %v3046 = vld [vmem:[%s3025 + $0xa0] sm:$0xff]
    %v3047 = vld [vmem:[%s3025 + $0xa8] sm:$0xff]
    %v3048 = vld [vmem:[%s3025 + $0xb0] sm:$0xff]
    %v3049 = vld [vmem:[%s3025 + $0xb8] sm:$0xff]
    %v3050 = vld [vmem:[%s3025 + $0xc0] sm:$0xff]
    %v3051 = vld [vmem:[%s3025 + $0xc8] sm:$0xff]
    %v3052 = vld [vmem:[%s3025 + $0xd0] sm:$0xff]
    %v3053 = vld [vmem:[%s3025 + $0xd8] sm:$0xff]
    %v3054 = vld [vmem:[%s3025 + $0xe0] sm:$0xff]
    %v3055 = vld [vmem:[%s3025 + $0xe8] sm:$0xff]
    %v3056 = vld [vmem:[%s3025 + $0xf0] sm:$0xff]
    %v3057 = vld [vmem:[%s3025 + $0xf8] sm:$0xff]
    %v3058 = vld [vmem:[%s3025 + $0x100] sm:$0xff]
    %v3059 = vld [vmem:[%s3025 + $0x108] sm:$0xff]
    %v3060 = vld [vmem:[%s3025 + $0x110] sm:$0xff]
    %v3061 = vld [vmem:[%s3025 + $0x118] sm:$0xff]
    %v3062 = vld [vmem:[%s3025 + $0x120] sm:$0xff]
    %v3063 = vld [vmem:[%s3025 + $0x128] sm:$0xff]
    %v3064 = vld [vmem:[%s3025 + $0x130] sm:$0xff]
    %v3065 = vld [vmem:[%s3025 + $0x138] sm:$0xff]
    %v3066 = vld [vmem:[%s3025 + $0x140] sm:$0xff]
    %v3067 = vld [vmem:[%s3025 + $0x148] sm:$0xff]
    %v3068 = vld [vmem:[%s3025 + $0x150] sm:$0xff]
    %v3069 = vld [vmem:[%s3025 + $0x158] sm:$0xff]
    %v3070 = vld [vmem:[%s3025 + $0x160] sm:$0xff]
    %v3071 = vld [vmem:[%s3025 + $0x168] sm:$0xff]
    %v3072 = vld [vmem:[%s3025 + $0x170] sm:$0xff]
    %v3073 = vld [vmem:[%s3025 + $0x178] sm:$0xff]
    %v3074 = vld [vmem:[%s3025 + $0x180] sm:$0xff]
    %v3075 = vld [vmem:[%s3025 + $0x188] sm:$0xff]
    %v3076 = vld [vmem:[%s3025 + $0x190] sm:$0xff]
    %v3077 = vld [vmem:[%s3025 + $0x198] sm:$0xff]
    %v3078 = vld [vmem:[%s3025 + $0x1a0] sm:$0xff]
    %v3079 = vld [vmem:[%s3025 + $0x1a8] sm:$0xff]
    %v3080 = vld [vmem:[%s3025 + $0x1b0] sm:$0xff]
    %v3081 = vld [vmem:[%s3025 + $0x1b8] sm:$0xff]
    %v3082 = vld [vmem:[%s3025 + $0x1c0] sm:$0xff]
    %v3083 = vld [vmem:[%s3025 + $0x1c8] sm:$0xff]
    %v3084 = vld [vmem:[%s3025 + $0x1d0] sm:$0xff]
    %v3085 = vld [vmem:[%s3025 + $0x1d8] sm:$0xff]
    %v3086 = vld [vmem:[%s3025 + $0x1e0] sm:$0xff]
    %v3087 = vld [vmem:[%s3025 + $0x1e8] sm:$0xff]
    %v3088 = vld [vmem:[%s3025 + $0x1f0] sm:$0xff]
    %v3089 = vld [vmem:[%s3025 + $0x1f8] sm:$0xff]
    %v3090 = vld [vmem:[%s11 + $0x4] sm:$0x1]
    %3091 = vmatpush.msra.mxu0 %v3041
    %3092 = vmatpush.msra.mxu0 %v3040
    %3093 = vmatpush.msra.mxu0 %v3039
    %3094 = vmatpush.msra.mxu0 %v3038
    %3095 = vmatpush.msra.mxu0 %v3037
    %3096 = vmatpush.msra.mxu0 %v3036
    %3097 = vmatpush.msra.mxu0 %v3035
    %3098 = vmatpush.msra.mxu0 %v3034
    %3099 = vmatpush.msra.mxu0 %v3033
    %3100 = vmatpush.msra.mxu0 %v3032
    %3101 = vmatpush.msra.mxu0 %v3031
    %3102 = vmatpush.msra.mxu0 %v3030
    %3103 = vmatpush.msra.mxu0 %v3029
    %3104 = vmatpush.msra.mxu0 %v3028
    %3105 = vmatpush.msra.mxu0 %v3027
    %3106 = vmatpush.msra.mxu0 %v3026
    %3107 = vmatmul.f32.gmra.mxu0 %v1842
    %v3108 = vpop.f32.mrf.mxu0
    %v3109 = vadd.f32 %v3090, %v3108
    %3110 = vdwg.mxu0
    %3111 = vmatpush.msra.mxu0 %v3057
    %3112 = vmatpush.msra.mxu0 %v3056
    %3113 = vmatpush.msra.mxu0 %v3055
    %3114 = vmatpush.msra.mxu0 %v3054
    %3115 = vmatpush.msra.mxu0 %v3053
    %3116 = vmatpush.msra.mxu0 %v3052
    %3117 = vmatpush.msra.mxu0 %v3051
    %3118 = vmatpush.msra.mxu0 %v3050
    %3119 = vmatpush.msra.mxu0 %v3049
    %3120 = vmatpush.msra.mxu0 %v3048
    %3121 = vmatpush.msra.mxu0 %v3047
    %3122 = vmatpush.msra.mxu0 %v3046
    %3123 = vmatpush.msra.mxu0 %v3045
    %3124 = vmatpush.msra.mxu0 %v3044
    %3125 = vmatpush.msra.mxu0 %v3043
    %3126 = vmatpush.msra.mxu0 %v3042
    %3127 = vmatmul.f32.gmra.mxu0 %v1843
    %v3128 = vpop.f32.mrf.mxu0
    %v3129 = vadd.f32 %v3109, %v3128
    %3130 = vdwg.mxu0
    %3131 = vmatpush.msra.mxu0 %v3073
    %3132 = vmatpush.msra.mxu0 %v3072
    %3133 = vmatpush.msra.mxu0 %v3071
    %3134 = vmatpush.msra.mxu0 %v3070
    %3135 = vmatpush.msra.mxu0 %v3069
    %3136 = vmatpush.msra.mxu0 %v3068
    %3137 = vmatpush.msra.mxu0 %v3067
    %3138 = vmatpush.msra.mxu0 %v3066
    %3139 = vmatpush.msra.mxu0 %v3065
    %3140 = vmatpush.msra.mxu0 %v3064
    %3141 = vmatpush.msra.mxu0 %v3063
    %3142 = vmatpush.msra.mxu0 %v3062
    %3143 = vmatpush.msra.mxu0 %v3061
    %3144 = vmatpush.msra.mxu0 %v3060
    %3145 = vmatpush.msra.mxu0 %v3059
    %3146 = vmatpush.msra.mxu0 %v3058
    %3147 = vmatmul.f32.gmra.mxu0 %v1844
    %v3148 = vpop.f32.mrf.mxu0
    %v3149 = vadd.f32 %v3129, %v3148
    %3150 = vdwg.mxu0
    %3151 = vmatpush.msra.mxu0 %v3089
    %3152 = vmatpush.msra.mxu0 %v3088
    %3153 = vmatpush.msra.mxu0 %v3087
    %3154 = vmatpush.msra.mxu0 %v3086
    %3155 = vmatpush.msra.mxu0 %v3085
    %3156 = vmatpush.msra.mxu0 %v3084
    %3157 = vmatpush.msra.mxu0 %v3083
    %3158 = vmatpush.msra.mxu0 %v3082
    %3159 = vmatpush.msra.mxu0 %v3081
    %3160 = vmatpush.msra.mxu0 %v3080
    %3161 = vmatpush.msra.mxu0 %v3079
    %3162 = vmatpush.msra.mxu0 %v3078
    %3163 = vmatpush.msra.mxu0 %v3077
    %3164 = vmatpush.msra.mxu0 %v3076
    %3165 = vmatpush.msra.mxu0 %v3075
    %3166 = vmatpush.msra.mxu0 %v3074
    %3167 = vmatmul.f32.gmra.mxu0 %v1845
    %v3168 = vpop.f32.mrf.mxu0
    %v3169 = vadd.f32 %v3149, %v3168
    %3170 = vdwg.mxu0
    %3171 = vst.msk [vmem:[#allocation3 + $0x4] sm:$0x1] %vm1995, %v3169
    %s3172 = scalar_lea.vmem %s12, 2048
    %v3173 = vld [vmem:[%s3172] sm:$0xff]
    %v3174 = vld [vmem:[%s3172 + $0x8] sm:$0xff]
    %v3175 = vld [vmem:[%s3172 + $0x10] sm:$0xff]
    %v3176 = vld [vmem:[%s3172 + $0x18] sm:$0xff]
    %v3177 = vld [vmem:[%s3172 + $0x20] sm:$0xff]
    %v3178 = vld [vmem:[%s3172 + $0x28] sm:$0xff]
    %v3179 = vld [vmem:[%s3172 + $0x30] sm:$0xff]
    %v3180 = vld [vmem:[%s3172 + $0x38] sm:$0xff]
    %v3181 = vld [vmem:[%s3172 + $0x40] sm:$0xff]
    %v3182 = vld [vmem:[%s3172 + $0x48] sm:$0xff]
    %v3183 = vld [vmem:[%s3172 + $0x50] sm:$0xff]
    %v3184 = vld [vmem:[%s3172 + $0x58] sm:$0xff]
    %v3185 = vld [vmem:[%s3172 + $0x60] sm:$0xff]
    %v3186 = vld [vmem:[%s3172 + $0x68] sm:$0xff]
    %v3187 = vld [vmem:[%s3172 + $0x70] sm:$0xff]
    %v3188 = vld [vmem:[%s3172 + $0x78] sm:$0xff]
    %v3189 = vld [vmem:[%s3172 + $0x80] sm:$0xff]
    %v3190 = vld [vmem:[%s3172 + $0x88] sm:$0xff]
    %v3191 = vld [vmem:[%s3172 + $0x90] sm:$0xff]
    %v3192 = vld [vmem:[%s3172 + $0x98] sm:$0xff]
    %v3193 = vld [vmem:[%s3172 + $0xa0] sm:$0xff]
    %v3194 = vld [vmem:[%s3172 + $0xa8] sm:$0xff]
    %v3195 = vld [vmem:[%s3172 + $0xb0] sm:$0xff]
    %v3196 = vld [vmem:[%s3172 + $0xb8] sm:$0xff]
    %v3197 = vld [vmem:[%s3172 + $0xc0] sm:$0xff]
    %v3198 = vld [vmem:[%s3172 + $0xc8] sm:$0xff]
    %v3199 = vld [vmem:[%s3172 + $0xd0] sm:$0xff]
    %v3200 = vld [vmem:[%s3172 + $0xd8] sm:$0xff]
    %v3201 = vld [vmem:[%s3172 + $0xe0] sm:$0xff]
    %v3202 = vld [vmem:[%s3172 + $0xe8] sm:$0xff]
    %v3203 = vld [vmem:[%s3172 + $0xf0] sm:$0xff]
    %v3204 = vld [vmem:[%s3172 + $0xf8] sm:$0xff]
    %v3205 = vld [vmem:[%s3172 + $0x100] sm:$0xff]
    %v3206 = vld [vmem:[%s3172 + $0x108] sm:$0xff]
    %v3207 = vld [vmem:[%s3172 + $0x110] sm:$0xff]
    %v3208 = vld [vmem:[%s3172 + $0x118] sm:$0xff]
    %v3209 = vld [vmem:[%s3172 + $0x120] sm:$0xff]
    %v3210 = vld [vmem:[%s3172 + $0x128] sm:$0xff]
    %v3211 = vld [vmem:[%s3172 + $0x130] sm:$0xff]
    %v3212 = vld [vmem:[%s3172 + $0x138] sm:$0xff]
    %v3213 = vld [vmem:[%s3172 + $0x140] sm:$0xff]
    %v3214 = vld [vmem:[%s3172 + $0x148] sm:$0xff]
    %v3215 = vld [vmem:[%s3172 + $0x150] sm:$0xff]
    %v3216 = vld [vmem:[%s3172 + $0x158] sm:$0xff]
    %v3217 = vld [vmem:[%s3172 + $0x160] sm:$0xff]
    %v3218 = vld [vmem:[%s3172 + $0x168] sm:$0xff]
    %v3219 = vld [vmem:[%s3172 + $0x170] sm:$0xff]
    %v3220 = vld [vmem:[%s3172 + $0x178] sm:$0xff]
    %v3221 = vld [vmem:[%s3172 + $0x180] sm:$0xff]
    %v3222 = vld [vmem:[%s3172 + $0x188] sm:$0xff]
    %v3223 = vld [vmem:[%s3172 + $0x190] sm:$0xff]
    %v3224 = vld [vmem:[%s3172 + $0x198] sm:$0xff]
    %v3225 = vld [vmem:[%s3172 + $0x1a0] sm:$0xff]
    %v3226 = vld [vmem:[%s3172 + $0x1a8] sm:$0xff]
    %v3227 = vld [vmem:[%s3172 + $0x1b0] sm:$0xff]
    %v3228 = vld [vmem:[%s3172 + $0x1b8] sm:$0xff]
    %v3229 = vld [vmem:[%s3172 + $0x1c0] sm:$0xff]
    %v3230 = vld [vmem:[%s3172 + $0x1c8] sm:$0xff]
    %v3231 = vld [vmem:[%s3172 + $0x1d0] sm:$0xff]
    %v3232 = vld [vmem:[%s3172 + $0x1d8] sm:$0xff]
    %v3233 = vld [vmem:[%s3172 + $0x1e0] sm:$0xff]
    %v3234 = vld [vmem:[%s3172 + $0x1e8] sm:$0xff]
    %v3235 = vld [vmem:[%s3172 + $0x1f0] sm:$0xff]
    %v3236 = vld [vmem:[%s3172 + $0x1f8] sm:$0xff]
    %v3237 = vld [vmem:[%s13 + $0x4] sm:$0x1]
    %3238 = vmatpush.msra.mxu0 %v3188
    %3239 = vmatpush.msra.mxu0 %v3187
    %3240 = vmatpush.msra.mxu0 %v3186
    %3241 = vmatpush.msra.mxu0 %v3185
    %3242 = vmatpush.msra.mxu0 %v3184
    %3243 = vmatpush.msra.mxu0 %v3183
    %3244 = vmatpush.msra.mxu0 %v3182
    %3245 = vmatpush.msra.mxu0 %v3181
    %3246 = vmatpush.msra.mxu0 %v3180
    %3247 = vmatpush.msra.mxu0 %v3179
    %3248 = vmatpush.msra.mxu0 %v3178
    %3249 = vmatpush.msra.mxu0 %v3177
    %3250 = vmatpush.msra.mxu0 %v3176
    %3251 = vmatpush.msra.mxu0 %v3175
    %3252 = vmatpush.msra.mxu0 %v3174
    %3253 = vmatpush.msra.mxu0 %v3173
    %3254 = vmatmul.f32.gmra.mxu0 %v1846
    %v3255 = vpop.f32.mrf.mxu0
    %v3256 = vadd.f32 %v3237, %v3255
    %3257 = vdwg.mxu0
    %3258 = vmatpush.msra.mxu0 %v3204
    %3259 = vmatpush.msra.mxu0 %v3203
    %3260 = vmatpush.msra.mxu0 %v3202
    %3261 = vmatpush.msra.mxu0 %v3201
    %3262 = vmatpush.msra.mxu0 %v3200
    %3263 = vmatpush.msra.mxu0 %v3199
    %3264 = vmatpush.msra.mxu0 %v3198
    %3265 = vmatpush.msra.mxu0 %v3197
    %3266 = vmatpush.msra.mxu0 %v3196
    %3267 = vmatpush.msra.mxu0 %v3195
    %3268 = vmatpush.msra.mxu0 %v3194
    %3269 = vmatpush.msra.mxu0 %v3193
    %3270 = vmatpush.msra.mxu0 %v3192
    %3271 = vmatpush.msra.mxu0 %v3191
    %3272 = vmatpush.msra.mxu0 %v3190
    %3273 = vmatpush.msra.mxu0 %v3189
    %3274 = vmatmul.f32.gmra.mxu0 %v1847
    %v3275 = vpop.f32.mrf.mxu0
    %v3276 = vadd.f32 %v3256, %v3275
    %3277 = vdwg.mxu0
    %3278 = vmatpush.msra.mxu0 %v3220
    %3279 = vmatpush.msra.mxu0 %v3219
    %3280 = vmatpush.msra.mxu0 %v3218
    %3281 = vmatpush.msra.mxu0 %v3217
    %3282 = vmatpush.msra.mxu0 %v3216
    %3283 = vmatpush.msra.mxu0 %v3215
    %3284 = vmatpush.msra.mxu0 %v3214
    %3285 = vmatpush.msra.mxu0 %v3213
    %3286 = vmatpush.msra.mxu0 %v3212
    %3287 = vmatpush.msra.mxu0 %v3211
    %3288 = vmatpush.msra.mxu0 %v3210
    %3289 = vmatpush.msra.mxu0 %v3209
    %3290 = vmatpush.msra.mxu0 %v3208
    %3291 = vmatpush.msra.mxu0 %v3207
    %3292 = vmatpush.msra.mxu0 %v3206
    %3293 = vmatpush.msra.mxu0 %v3205
    %3294 = vmatmul.f32.gmra.mxu0 %v1848
    %v3295 = vpop.f32.mrf.mxu0
    %v3296 = vadd.f32 %v3276, %v3295
    %3297 = vdwg.mxu0
    %3298 = vmatpush.msra.mxu0 %v3236
    %3299 = vmatpush.msra.mxu0 %v3235
    %3300 = vmatpush.msra.mxu0 %v3234
    %3301 = vmatpush.msra.mxu0 %v3233
    %3302 = vmatpush.msra.mxu0 %v3232
    %3303 = vmatpush.msra.mxu0 %v3231
    %3304 = vmatpush.msra.mxu0 %v3230
    %3305 = vmatpush.msra.mxu0 %v3229
    %3306 = vmatpush.msra.mxu0 %v3228
    %3307 = vmatpush.msra.mxu0 %v3227
    %3308 = vmatpush.msra.mxu0 %v3226
    %3309 = vmatpush.msra.mxu0 %v3225
    %3310 = vmatpush.msra.mxu0 %v3224
    %3311 = vmatpush.msra.mxu0 %v3223
    %3312 = vmatpush.msra.mxu0 %v3222
    %3313 = vmatpush.msra.mxu0 %v3221
    %3314 = vmatmul.f32.gmra.mxu0 %v1849
    %v3315 = vpop.f32.mrf.mxu0
    %v3316 = vadd.f32 %v3296, %v3315
    %3317 = vdwg.mxu0
    %3318 = vst.msk [vmem:[#allocation4 + $0x4] sm:$0x1] %vm1995, %v3316
    %s3319 = scalar_lea.vmem %s10, 2560
    %v3320 = vld [vmem:[%s3319] sm:$0xff]
    %v3321 = vld [vmem:[%s3319 + $0x8] sm:$0xff]
    %v3322 = vld [vmem:[%s3319 + $0x10] sm:$0xff]
    %v3323 = vld [vmem:[%s3319 + $0x18] sm:$0xff]
    %v3324 = vld [vmem:[%s3319 + $0x20] sm:$0xff]
    %v3325 = vld [vmem:[%s3319 + $0x28] sm:$0xff]
    %v3326 = vld [vmem:[%s3319 + $0x30] sm:$0xff]
    %v3327 = vld [vmem:[%s3319 + $0x38] sm:$0xff]
    %v3328 = vld [vmem:[%s3319 + $0x40] sm:$0xff]
    %v3329 = vld [vmem:[%s3319 + $0x48] sm:$0xff]
    %v3330 = vld [vmem:[%s3319 + $0x50] sm:$0xff]
    %v3331 = vld [vmem:[%s3319 + $0x58] sm:$0xff]
    %v3332 = vld [vmem:[%s3319 + $0x60] sm:$0xff]
    %v3333 = vld [vmem:[%s3319 + $0x68] sm:$0xff]
    %v3334 = vld [vmem:[%s3319 + $0x70] sm:$0xff]
    %v3335 = vld [vmem:[%s3319 + $0x78] sm:$0xff]
    %v3336 = vld [vmem:[%s3319 + $0x80] sm:$0xff]
    %v3337 = vld [vmem:[%s3319 + $0x88] sm:$0xff]
    %v3338 = vld [vmem:[%s3319 + $0x90] sm:$0xff]
    %v3339 = vld [vmem:[%s3319 + $0x98] sm:$0xff]
    %v3340 = vld [vmem:[%s3319 + $0xa0] sm:$0xff]
    %v3341 = vld [vmem:[%s3319 + $0xa8] sm:$0xff]
    %v3342 = vld [vmem:[%s3319 + $0xb0] sm:$0xff]
    %v3343 = vld [vmem:[%s3319 + $0xb8] sm:$0xff]
    %v3344 = vld [vmem:[%s3319 + $0xc0] sm:$0xff]
    %v3345 = vld [vmem:[%s3319 + $0xc8] sm:$0xff]
    %v3346 = vld [vmem:[%s3319 + $0xd0] sm:$0xff]
    %v3347 = vld [vmem:[%s3319 + $0xd8] sm:$0xff]
    %v3348 = vld [vmem:[%s3319 + $0xe0] sm:$0xff]
    %v3349 = vld [vmem:[%s3319 + $0xe8] sm:$0xff]
    %v3350 = vld [vmem:[%s3319 + $0xf0] sm:$0xff]
    %v3351 = vld [vmem:[%s3319 + $0xf8] sm:$0xff]
    %v3352 = vld [vmem:[%s3319 + $0x100] sm:$0xff]
    %v3353 = vld [vmem:[%s3319 + $0x108] sm:$0xff]
    %v3354 = vld [vmem:[%s3319 + $0x110] sm:$0xff]
    %v3355 = vld [vmem:[%s3319 + $0x118] sm:$0xff]
    %v3356 = vld [vmem:[%s3319 + $0x120] sm:$0xff]
    %v3357 = vld [vmem:[%s3319 + $0x128] sm:$0xff]
    %v3358 = vld [vmem:[%s3319 + $0x130] sm:$0xff]
    %v3359 = vld [vmem:[%s3319 + $0x138] sm:$0xff]
    %v3360 = vld [vmem:[%s3319 + $0x140] sm:$0xff]
    %v3361 = vld [vmem:[%s3319 + $0x148] sm:$0xff]
    %v3362 = vld [vmem:[%s3319 + $0x150] sm:$0xff]
    %v3363 = vld [vmem:[%s3319 + $0x158] sm:$0xff]
    %v3364 = vld [vmem:[%s3319 + $0x160] sm:$0xff]
    %v3365 = vld [vmem:[%s3319 + $0x168] sm:$0xff]
    %v3366 = vld [vmem:[%s3319 + $0x170] sm:$0xff]
    %v3367 = vld [vmem:[%s3319 + $0x178] sm:$0xff]
    %v3368 = vld [vmem:[%s3319 + $0x180] sm:$0xff]
    %v3369 = vld [vmem:[%s3319 + $0x188] sm:$0xff]
    %v3370 = vld [vmem:[%s3319 + $0x190] sm:$0xff]
    %v3371 = vld [vmem:[%s3319 + $0x198] sm:$0xff]
    %v3372 = vld [vmem:[%s3319 + $0x1a0] sm:$0xff]
    %v3373 = vld [vmem:[%s3319 + $0x1a8] sm:$0xff]
    %v3374 = vld [vmem:[%s3319 + $0x1b0] sm:$0xff]
    %v3375 = vld [vmem:[%s3319 + $0x1b8] sm:$0xff]
    %v3376 = vld [vmem:[%s3319 + $0x1c0] sm:$0xff]
    %v3377 = vld [vmem:[%s3319 + $0x1c8] sm:$0xff]
    %v3378 = vld [vmem:[%s3319 + $0x1d0] sm:$0xff]
    %v3379 = vld [vmem:[%s3319 + $0x1d8] sm:$0xff]
    %v3380 = vld [vmem:[%s3319 + $0x1e0] sm:$0xff]
    %v3381 = vld [vmem:[%s3319 + $0x1e8] sm:$0xff]
    %v3382 = vld [vmem:[%s3319 + $0x1f0] sm:$0xff]
    %v3383 = vld [vmem:[%s3319 + $0x1f8] sm:$0xff]
    %v3384 = vld [vmem:[%s11 + $0x5] sm:$0x1]
    %3385 = vmatpush.msra.mxu0 %v3335
    %3386 = vmatpush.msra.mxu0 %v3334
    %3387 = vmatpush.msra.mxu0 %v3333
    %3388 = vmatpush.msra.mxu0 %v3332
    %3389 = vmatpush.msra.mxu0 %v3331
    %3390 = vmatpush.msra.mxu0 %v3330
    %3391 = vmatpush.msra.mxu0 %v3329
    %3392 = vmatpush.msra.mxu0 %v3328
    %3393 = vmatpush.msra.mxu0 %v3327
    %3394 = vmatpush.msra.mxu0 %v3326
    %3395 = vmatpush.msra.mxu0 %v3325
    %3396 = vmatpush.msra.mxu0 %v3324
    %3397 = vmatpush.msra.mxu0 %v3323
    %3398 = vmatpush.msra.mxu0 %v3322
    %3399 = vmatpush.msra.mxu0 %v3321
    %3400 = vmatpush.msra.mxu0 %v3320
    %3401 = vmatmul.f32.gmra.mxu0 %v1842
    %v3402 = vpop.f32.mrf.mxu0
    %v3403 = vadd.f32 %v3384, %v3402
    %3404 = vdwg.mxu0
    %3405 = vmatpush.msra.mxu0 %v3351
    %3406 = vmatpush.msra.mxu0 %v3350
    %3407 = vmatpush.msra.mxu0 %v3349
    %3408 = vmatpush.msra.mxu0 %v3348
    %3409 = vmatpush.msra.mxu0 %v3347
    %3410 = vmatpush.msra.mxu0 %v3346
    %3411 = vmatpush.msra.mxu0 %v3345
    %3412 = vmatpush.msra.mxu0 %v3344
    %3413 = vmatpush.msra.mxu0 %v3343
    %3414 = vmatpush.msra.mxu0 %v3342
    %3415 = vmatpush.msra.mxu0 %v3341
    %3416 = vmatpush.msra.mxu0 %v3340
    %3417 = vmatpush.msra.mxu0 %v3339
    %3418 = vmatpush.msra.mxu0 %v3338
    %3419 = vmatpush.msra.mxu0 %v3337
    %3420 = vmatpush.msra.mxu0 %v3336
    %3421 = vmatmul.f32.gmra.mxu0 %v1843
    %v3422 = vpop.f32.mrf.mxu0
    %v3423 = vadd.f32 %v3403, %v3422
    %3424 = vdwg.mxu0
    %3425 = vmatpush.msra.mxu0 %v3367
    %3426 = vmatpush.msra.mxu0 %v3366
    %3427 = vmatpush.msra.mxu0 %v3365
    %3428 = vmatpush.msra.mxu0 %v3364
    %3429 = vmatpush.msra.mxu0 %v3363
    %3430 = vmatpush.msra.mxu0 %v3362
    %3431 = vmatpush.msra.mxu0 %v3361
    %3432 = vmatpush.msra.mxu0 %v3360
    %3433 = vmatpush.msra.mxu0 %v3359
    %3434 = vmatpush.msra.mxu0 %v3358
    %3435 = vmatpush.msra.mxu0 %v3357
    %3436 = vmatpush.msra.mxu0 %v3356
    %3437 = vmatpush.msra.mxu0 %v3355
    %3438 = vmatpush.msra.mxu0 %v3354
    %3439 = vmatpush.msra.mxu0 %v3353
    %3440 = vmatpush.msra.mxu0 %v3352
    %3441 = vmatmul.f32.gmra.mxu0 %v1844
    %v3442 = vpop.f32.mrf.mxu0
    %v3443 = vadd.f32 %v3423, %v3442
    %3444 = vdwg.mxu0
    %3445 = vmatpush.msra.mxu0 %v3383
    %3446 = vmatpush.msra.mxu0 %v3382
    %3447 = vmatpush.msra.mxu0 %v3381
    %3448 = vmatpush.msra.mxu0 %v3380
    %3449 = vmatpush.msra.mxu0 %v3379
    %3450 = vmatpush.msra.mxu0 %v3378
    %3451 = vmatpush.msra.mxu0 %v3377
    %3452 = vmatpush.msra.mxu0 %v3376
    %3453 = vmatpush.msra.mxu0 %v3375
    %3454 = vmatpush.msra.mxu0 %v3374
    %3455 = vmatpush.msra.mxu0 %v3373
    %3456 = vmatpush.msra.mxu0 %v3372
    %3457 = vmatpush.msra.mxu0 %v3371
    %3458 = vmatpush.msra.mxu0 %v3370
    %3459 = vmatpush.msra.mxu0 %v3369
    %3460 = vmatpush.msra.mxu0 %v3368
    %3461 = vmatmul.f32.gmra.mxu0 %v1845
    %v3462 = vpop.f32.mrf.mxu0
    %v3463 = vadd.f32 %v3443, %v3462
    %3464 = vdwg.mxu0
    %3465 = vst.msk [vmem:[#allocation3 + $0x5] sm:$0x1] %vm1995, %v3463
    %s3466 = scalar_lea.vmem %s12, 2560
    %v3467 = vld [vmem:[%s3466] sm:$0xff]
    %v3468 = vld [vmem:[%s3466 + $0x8] sm:$0xff]
    %v3469 = vld [vmem:[%s3466 + $0x10] sm:$0xff]
    %v3470 = vld [vmem:[%s3466 + $0x18] sm:$0xff]
    %v3471 = vld [vmem:[%s3466 + $0x20] sm:$0xff]
    %v3472 = vld [vmem:[%s3466 + $0x28] sm:$0xff]
    %v3473 = vld [vmem:[%s3466 + $0x30] sm:$0xff]
    %v3474 = vld [vmem:[%s3466 + $0x38] sm:$0xff]
    %v3475 = vld [vmem:[%s3466 + $0x40] sm:$0xff]
    %v3476 = vld [vmem:[%s3466 + $0x48] sm:$0xff]
    %v3477 = vld [vmem:[%s3466 + $0x50] sm:$0xff]
    %v3478 = vld [vmem:[%s3466 + $0x58] sm:$0xff]
    %v3479 = vld [vmem:[%s3466 + $0x60] sm:$0xff]
    %v3480 = vld [vmem:[%s3466 + $0x68] sm:$0xff]
    %v3481 = vld [vmem:[%s3466 + $0x70] sm:$0xff]
    %v3482 = vld [vmem:[%s3466 + $0x78] sm:$0xff]
    %v3483 = vld [vmem:[%s3466 + $0x80] sm:$0xff]
    %v3484 = vld [vmem:[%s3466 + $0x88] sm:$0xff]
    %v3485 = vld [vmem:[%s3466 + $0x90] sm:$0xff]
    %v3486 = vld [vmem:[%s3466 + $0x98] sm:$0xff]
    %v3487 = vld [vmem:[%s3466 + $0xa0] sm:$0xff]
    %v3488 = vld [vmem:[%s3466 + $0xa8] sm:$0xff]
    %v3489 = vld [vmem:[%s3466 + $0xb0] sm:$0xff]
    %v3490 = vld [vmem:[%s3466 + $0xb8] sm:$0xff]
    %v3491 = vld [vmem:[%s3466 + $0xc0] sm:$0xff]
    %v3492 = vld [vmem:[%s3466 + $0xc8] sm:$0xff]
    %v3493 = vld [vmem:[%s3466 + $0xd0] sm:$0xff]
    %v3494 = vld [vmem:[%s3466 + $0xd8] sm:$0xff]
    %v3495 = vld [vmem:[%s3466 + $0xe0] sm:$0xff]
    %v3496 = vld [vmem:[%s3466 + $0xe8] sm:$0xff]
    %v3497 = vld [vmem:[%s3466 + $0xf0] sm:$0xff]
    %v3498 = vld [vmem:[%s3466 + $0xf8] sm:$0xff]
    %v3499 = vld [vmem:[%s3466 + $0x100] sm:$0xff]
    %v3500 = vld [vmem:[%s3466 + $0x108] sm:$0xff]
    %v3501 = vld [vmem:[%s3466 + $0x110] sm:$0xff]
    %v3502 = vld [vmem:[%s3466 + $0x118] sm:$0xff]
    %v3503 = vld [vmem:[%s3466 + $0x120] sm:$0xff]
    %v3504 = vld [vmem:[%s3466 + $0x128] sm:$0xff]
    %v3505 = vld [vmem:[%s3466 + $0x130] sm:$0xff]
    %v3506 = vld [vmem:[%s3466 + $0x138] sm:$0xff]
    %v3507 = vld [vmem:[%s3466 + $0x140] sm:$0xff]
    %v3508 = vld [vmem:[%s3466 + $0x148] sm:$0xff]
    %v3509 = vld [vmem:[%s3466 + $0x150] sm:$0xff]
    %v3510 = vld [vmem:[%s3466 + $0x158] sm:$0xff]
    %v3511 = vld [vmem:[%s3466 + $0x160] sm:$0xff]
    %v3512 = vld [vmem:[%s3466 + $0x168] sm:$0xff]
    %v3513 = vld [vmem:[%s3466 + $0x170] sm:$0xff]
    %v3514 = vld [vmem:[%s3466 + $0x178] sm:$0xff]
    %v3515 = vld [vmem:[%s3466 + $0x180] sm:$0xff]
    %v3516 = vld [vmem:[%s3466 + $0x188] sm:$0xff]
    %v3517 = vld [vmem:[%s3466 + $0x190] sm:$0xff]
    %v3518 = vld [vmem:[%s3466 + $0x198] sm:$0xff]
    %v3519 = vld [vmem:[%s3466 + $0x1a0] sm:$0xff]
    %v3520 = vld [vmem:[%s3466 + $0x1a8] sm:$0xff]
    %v3521 = vld [vmem:[%s3466 + $0x1b0] sm:$0xff]
    %v3522 = vld [vmem:[%s3466 + $0x1b8] sm:$0xff]
    %v3523 = vld [vmem:[%s3466 + $0x1c0] sm:$0xff]
    %v3524 = vld [vmem:[%s3466 + $0x1c8] sm:$0xff]
    %v3525 = vld [vmem:[%s3466 + $0x1d0] sm:$0xff]
    %v3526 = vld [vmem:[%s3466 + $0x1d8] sm:$0xff]
    %v3527 = vld [vmem:[%s3466 + $0x1e0] sm:$0xff]
    %v3528 = vld [vmem:[%s3466 + $0x1e8] sm:$0xff]
    %v3529 = vld [vmem:[%s3466 + $0x1f0] sm:$0xff]
    %v3530 = vld [vmem:[%s3466 + $0x1f8] sm:$0xff]
    %v3531 = vld [vmem:[%s13 + $0x5] sm:$0x1]
    %3532 = vmatpush.msra.mxu0 %v3482
    %3533 = vmatpush.msra.mxu0 %v3481
    %3534 = vmatpush.msra.mxu0 %v3480
    %3535 = vmatpush.msra.mxu0 %v3479
    %3536 = vmatpush.msra.mxu0 %v3478
    %3537 = vmatpush.msra.mxu0 %v3477
    %3538 = vmatpush.msra.mxu0 %v3476
    %3539 = vmatpush.msra.mxu0 %v3475
    %3540 = vmatpush.msra.mxu0 %v3474
    %3541 = vmatpush.msra.mxu0 %v3473
    %3542 = vmatpush.msra.mxu0 %v3472
    %3543 = vmatpush.msra.mxu0 %v3471
    %3544 = vmatpush.msra.mxu0 %v3470
    %3545 = vmatpush.msra.mxu0 %v3469
    %3546 = vmatpush.msra.mxu0 %v3468
    %3547 = vmatpush.msra.mxu0 %v3467
    %3548 = vmatmul.f32.gmra.mxu0 %v1846
    %v3549 = vpop.f32.mrf.mxu0
    %v3550 = vadd.f32 %v3531, %v3549
    %3551 = vdwg.mxu0
    %3552 = vmatpush.msra.mxu0 %v3498
    %3553 = vmatpush.msra.mxu0 %v3497
    %3554 = vmatpush.msra.mxu0 %v3496
    %3555 = vmatpush.msra.mxu0 %v3495
    %3556 = vmatpush.msra.mxu0 %v3494
    %3557 = vmatpush.msra.mxu0 %v3493
    %3558 = vmatpush.msra.mxu0 %v3492
    %3559 = vmatpush.msra.mxu0 %v3491
    %3560 = vmatpush.msra.mxu0 %v3490
    %3561 = vmatpush.msra.mxu0 %v3489
    %3562 = vmatpush.msra.mxu0 %v3488
    %3563 = vmatpush.msra.mxu0 %v3487
    %3564 = vmatpush.msra.mxu0 %v3486
    %3565 = vmatpush.msra.mxu0 %v3485
    %3566 = vmatpush.msra.mxu0 %v3484
    %3567 = vmatpush.msra.mxu0 %v3483
    %3568 = vmatmul.f32.gmra.mxu0 %v1847
    %v3569 = vpop.f32.mrf.mxu0
    %v3570 = vadd.f32 %v3550, %v3569
    %3571 = vdwg.mxu0
    %3572 = vmatpush.msra.mxu0 %v3514
    %3573 = vmatpush.msra.mxu0 %v3513
    %3574 = vmatpush.msra.mxu0 %v3512
    %3575 = vmatpush.msra.mxu0 %v3511
    %3576 = vmatpush.msra.mxu0 %v3510
    %3577 = vmatpush.msra.mxu0 %v3509
    %3578 = vmatpush.msra.mxu0 %v3508
    %3579 = vmatpush.msra.mxu0 %v3507
    %3580 = vmatpush.msra.mxu0 %v3506
    %3581 = vmatpush.msra.mxu0 %v3505
    %3582 = vmatpush.msra.mxu0 %v3504
    %3583 = vmatpush.msra.mxu0 %v3503
    %3584 = vmatpush.msra.mxu0 %v3502
    %3585 = vmatpush.msra.mxu0 %v3501
    %3586 = vmatpush.msra.mxu0 %v3500
    %3587 = vmatpush.msra.mxu0 %v3499
    %3588 = vmatmul.f32.gmra.mxu0 %v1848
    %v3589 = vpop.f32.mrf.mxu0
    %v3590 = vadd.f32 %v3570, %v3589
    %3591 = vdwg.mxu0
    %3592 = vmatpush.msra.mxu0 %v3530
    %3593 = vmatpush.msra.mxu0 %v3529
    %3594 = vmatpush.msra.mxu0 %v3528
    %3595 = vmatpush.msra.mxu0 %v3527
    %3596 = vmatpush.msra.mxu0 %v3526
    %3597 = vmatpush.msra.mxu0 %v3525
    %3598 = vmatpush.msra.mxu0 %v3524
    %3599 = vmatpush.msra.mxu0 %v3523
    %3600 = vmatpush.msra.mxu0 %v3522
    %3601 = vmatpush.msra.mxu0 %v3521
    %3602 = vmatpush.msra.mxu0 %v3520
    %3603 = vmatpush.msra.mxu0 %v3519
    %3604 = vmatpush.msra.mxu0 %v3518
    %3605 = vmatpush.msra.mxu0 %v3517
    %3606 = vmatpush.msra.mxu0 %v3516
    %3607 = vmatpush.msra.mxu0 %v3515
    %3608 = vmatmul.f32.gmra.mxu0 %v1849
    %v3609 = vpop.f32.mrf.mxu0
    %v3610 = vadd.f32 %v3590, %v3609
    %3611 = vdwg.mxu0
    %3612 = vst.msk [vmem:[#allocation4 + $0x5] sm:$0x1] %vm1995, %v3610
    %v3613 = vld [vmem:[#allocation3] sm:$0x3f]
    %v3614 = vld [vmem:[#allocation4] sm:$0x3f]
    %vm3615 = vcmask 414720
    %v3616 = vsel %vm3615, %v3613, 0.0
    %v3617 = vrot.slane %v3616, 4
    %v3618 = vadd.f32 %v3616, %v3617
    %v3619 = vrot.slane %v3618, 2
    %v3620 = vadd.f32 %v3618, %v3619
    %v3621 = vrot.slane %v3620, 1
    %v3622 = vadd.f32 %v3620, %v3621
    %v3623 = vrcp.pop 6.0
    %v3624 = vmul.f32 6.0, %v3623
    %v3625 = vsub.f32 1.0, %v3624
    %v3626 = vmul.f32 %v3623, %v3625
    %v3627 = vadd.f32 %v3623, %v3626
    %vm3628 = vweird.f32 %v3623
    %v3629 = vsel %vm3628, %v3623, %v3627
    %v3630 = vmul.f32 %v3622, %v3629
    %v3631 = vsub.f32 %v3613, %v3630
    %v3632 = vld [vmem:[#allocation4] sm:$0x1]
    %v3633 = vperm.slane %v3632, 0
    %v3634 = vadd.f32 %v3633, %v3631
    %3635 = vst.msk [vmem:[#allocation5] sm:$0x3f] %vm3615, %v3634
    %v3636 = vld [vmem:[#allocation4 + $0x1] sm:$0x1]
    %v3637 = vperm.slane %v3636, 0
    %v3638 = vadd.f32 %v3637, %v3631
    %s3639 = scalar_lea.vmem [#allocation5], 8
    %3640 = vst.msk [vmem:[%s3639] sm:$0x3f] %vm3615, %v3638
    %v3641 = vld [vmem:[#allocation4 + $0x2] sm:$0x1]
    %v3642 = vperm.slane %v3641, 0
    %v3643 = vadd.f32 %v3642, %v3631
    %s3644 = scalar_lea.vmem [#allocation5], 16
    %3645 = vst.msk [vmem:[%s3644] sm:$0x3f] %vm3615, %v3643
    %v3646 = vld [vmem:[#allocation4 + $0x3] sm:$0x1]
    %v3647 = vperm.slane %v3646, 0
    %v3648 = vadd.f32 %v3647, %v3631
    %s3649 = scalar_lea.vmem [#allocation5], 24
    %3650 = vst.msk [vmem:[%s3649] sm:$0x3f] %vm3615, %v3648
    %v3651 = vld [vmem:[#allocation4 + $0x4] sm:$0x1]
    %v3652 = vperm.slane %v3651, 0
    %v3653 = vadd.f32 %v3652, %v3631
    %s3654 = scalar_lea.vmem [#allocation5], 32
    %3655 = vst.msk [vmem:[%s3654] sm:$0x3f] %vm3615, %v3653
    %v3656 = vld [vmem:[#allocation4 + $0x5] sm:$0x1]
    %v3657 = vperm.slane %v3656, 0
    %v3658 = vadd.f32 %v3657, %v3631
    %s3659 = scalar_lea.vmem [#allocation5], 40
    %3660 = vst.msk [vmem:[%s3659] sm:$0x3f] %vm3615, %v3658
    %v3661 = vsel %vm3615, %v3614, -inf
    %3662 = vmax.xlane.f32.xlu0 %v3661
    %v3663 = vpop.xlane.xlu0 %3662
    %v3664 = vsub.f32 %v3614, %v3663
    %v3665 = vmul.f32 %v3664, 1.442695
    %v3666 = vpow.pop %v3665
    %v3667 = vsel %vm3615, %v3631, -inf
    %3668 = vmax.xlane.f32.xlu0 %v3667
    %v3669 = vpop.xlane.xlu0 %3668
    %v3670 = vsub.f32 %v3631, %v3669
    %v3671 = vmul.f32 %v3670, 1.442695
    %v3672 = vpow.pop %v3671
    %vm3673 = vcmask 416768
    %v3675 = vsel %vm3673, %v3666, 0
    %v3678 = vsel %vm3673, %v3672, 0
    %3680 = vmatpush.xpose.msra.mxu0 0.0
    %3681 = vmatpush.xpose.msra.mxu0 0.0
    %3682 = vmatpush.xpose.msra.mxu0 0.0
    %3683 = vmatpush.xpose.msra.mxu0 0.0
    %3684 = vmatpush.xpose.msra.mxu0 0.0
    %3685 = vmatpush.xpose.msra.mxu0 0.0
    %3686 = vmatpush.xpose.msra.mxu0 0.0
    %3687 = vmatpush.xpose.msra.mxu0 0.0
    %3688 = vmatpush.xpose.msra.mxu0 0.0
    %3689 = vmatpush.xpose.msra.mxu0 0.0
    %3690 = vmatpush.xpose.msra.mxu0 0.0
    %3691 = vmatpush.xpose.msra.mxu0 0.0
    %3692 = vmatpush.xpose.msra.mxu0 0.0
    %3693 = vmatpush.xpose.msra.mxu0 0.0
    %3694 = vmatpush.xpose.msra.mxu0 0.0
    %3695 = vmatpush.xpose.msra.mxu0 %v3678
    %3696 = vmatmul.f32.gmra.mxu0 %v3675
    %v3697 = vpop.f32.mrf.mxu0
    %v3698 = vadd.f32 0.0, %v3697
    %3699 = vdwg.mxu0
    %v3700 = vld [vmem:[%s14] sm:$0x1]
    %v3702 = vperm.slane %v3700, 0
    %v3704 = vmul.f32 %v3666, %v3702
    %v3706 = vsel %vm3673, %v3704, 0
    %3708 = vmatpush.xpose.msra.mxu0 0.0
    %3709 = vmatpush.xpose.msra.mxu0 0.0
    %3710 = vmatpush.xpose.msra.mxu0 0.0
    %3711 = vmatpush.xpose.msra.mxu0 0.0
    %3712 = vmatpush.xpose.msra.mxu0 0.0
    %3713 = vmatpush.xpose.msra.mxu0 0.0
    %3714 = vmatpush.xpose.msra.mxu0 0.0
    %3715 = vmatpush.xpose.msra.mxu0 0.0
    %3716 = vmatpush.xpose.msra.mxu0 0.0
    %3717 = vmatpush.xpose.msra.mxu0 0.0
    %3718 = vmatpush.xpose.msra.mxu0 0.0
    %3719 = vmatpush.xpose.msra.mxu0 0.0
    %3720 = vmatpush.xpose.msra.mxu0 0.0
    %3721 = vmatpush.xpose.msra.mxu0 0.0
    %3722 = vmatpush.xpose.msra.mxu0 0.0
    %3723 = vmatpush.xpose.msra.mxu0 %v3678
    %3724 = vmatmul.f32.gmra.mxu0 %v3706
    %v3725 = vpop.f32.mrf.mxu0
    %v3726 = vadd.f32 0.0, %v3725
    %3727 = vdwg.mxu0
    %v3728 = vrcp.pop %v3698
    %v3729 = vmul.f32 %v3726, %v3728
    %vm3730 = vcmask 46080
    %3731 = vst.msk [vmem:[#allocation7] sm:$0x3f] %vm3730, %v3729
    // Predicated region
    $region62: #{rainbow_forward.1} parent=1 // pred_check
      _
    $region63: #{rainbow_forward.1} parent=1 // pred_check_branch
      %3733 = sbr.rel (0) target = $region65
    $region64: #{rainbow_forward.1} parent=1 // pred_region
      %3735 = vsyncadd [#allocation6], 0
      %s3736 = sshll.u32 [#allocation5], 4
      %s3737 = int_to_ptr.vmem [resolvable:$true] %s3736
      %s3738 = sshll.u32 %s15, 4
      %s3739 = int_to_ptr.hbm [resolvable:$true] %s3738
      %3744 = dma.vmem_to_hbm [thread:$0]  %s3737, 768, %s3739, [#allocation6], 128, 128, 8
    $region65: #{rainbow_forward.1} parent=1 // pred_fallthru
      _
    // Predicated region
    $region66: #{rainbow_forward.1} parent=1 // pred_check
      _
    $region67: #{rainbow_forward.1} parent=1 // pred_check_branch
      %3746 = sbr.rel (0) target = $region69
    $region68: #{rainbow_forward.1} parent=1 // pred_region
      %3748 = vsyncadd [#allocation8], 0
      %s3750 = sshll.u32 [#allocation7], 4
      %s3751 = int_to_ptr.vmem [resolvable:$true] %s3750
      %s3752 = sshll.u32 %s16, 4
      %s3753 = int_to_ptr.hbm [resolvable:$true] %s3752
      %3755 = dma.vmem_to_hbm [thread:$0]  %s3751, 128, %s3753, [#allocation8]
    $region69: #{rainbow_forward.1} parent=1 // pred_fallthru
      _
    // Predicated region
    $region70: #{rainbow_forward.1} parent=1 // pred_check
      _
    $region71: #{rainbow_forward.1} parent=1 // pred_check_branch
      %3757 = sbr.rel (0) target = $region73
    $region72: #{rainbow_forward.1} parent=1 // pred_region
      %3759 = dma.done [#allocation6], 768
    $region73: #{rainbow_forward.1} parent=1 // pred_fallthru
      _
    // Predicated region
    $region74: #{rainbow_forward.1} parent=1 // pred_check
      _
    $region75: #{rainbow_forward.1} parent=1 // pred_check_branch
      %3761 = sbr.rel (0) target = $region77
    $region76: #{rainbow_forward.1} parent=1 // pred_region
      %3763 = dma.done [#allocation8], 128
    $region77: #{rainbow_forward.1} parent=1 // pred_fallthru
      _
    %3764 = vsyncpa [#allocation6], 1
    %3765 = vsyncpa [#allocation8], 1

</llo_original>
